<compile_context>
chip_gen: v6e
topology: v6e:2x2x1
jax: 0.10.0
libtpu: 0.0.40
codegen_flags: <defaults>
</compile_context>

<pallas_src>
import jax
import jax.numpy as jnp
from jax.experimental import pallas as pl
from jax.experimental.pallas import tpu as pltpu


# ----------------------------------------------------------------------------
# Fused VAE kernel: all weights + activations stay in VMEM / vregs.
# ----------------------------------------------------------------------------
def _vae_fused_kernel(
    x_ref, eps_ref,
    w_enc1, b_enc1, w_enc2, b_enc2, w_enc3, b_enc3,
    w_musig, b_musig, w_dec, b_dec,
    w_rec1, b_rec1, w_rec2, b_rec2, w_rec3, b_rec3,
    xrec_ref, mu_ref, sigma_ref,
):
    def dense(h, w_ref, b_ref, act):
        # bf16 x bf16 MXU matmul with f32 accumulation.
        y = jnp.dot(h.astype(w_ref.dtype), w_ref[...],
                    preferred_element_type=jnp.float32)
        y = y + b_ref[...].astype(jnp.float32)   # (1, N) broadcasts over rows
        if act == "relu":
            y = jnp.maximum(y, 0.0)
        elif act == "sigmoid":
            y = jax.nn.sigmoid(y)
        return y

    # ---- encode ----
    h = x_ref[...].astype(jnp.float32)
    h = dense(h, w_enc1, b_enc1, "relu")
    h = dense(h, w_enc2, b_enc2, "relu")
    h = dense(h, w_enc3, b_enc3, "relu")

    # mu and sigma heads fused into one lane-dense (h3, 2*latent) matmul.
    ms = dense(h, w_musig, b_musig, "none")
    latent = mu_ref.shape[-1]
    mu = ms[:, :latent]
    sigma = ms[:, latent:]
    mu_ref[...] = mu
    sigma_ref[...] = sigma

    # ---- reparameterize: z = mu + eps * sigma (in-register, no extra kernel) ----
    z = mu + eps_ref[...] * sigma

    # ---- decode ----
    d = dense(z, w_dec, b_dec, "relu")
    d = dense(d, w_rec1, b_rec1, "relu")
    d = dense(d, w_rec2, b_rec2, "relu")
    xrec_ref[...] = dense(d, w_rec3, b_rec3, "sigmoid")


def _full_spec(shape):
    """Whole-array block (single grid step)."""
    return pl.BlockSpec(shape, lambda i: (0,) * len(shape))


# ----------------------------------------------------------------------------
# Parameter construction (PyTorch-Linear-style uniform init), bf16 weights.
# ----------------------------------------------------------------------------
def _init_linear(key, in_f, out_f, w_dtype=jnp.bfloat16):
    kw, kb = jax.random.split(key)
    bound = 1.0 / float(in_f) ** 0.5
    # stored transposed: (in_f, out_f) so the kernel computes x @ W + b
    w_t = jax.random.uniform(kw, (in_f, out_f), jnp.float32, -bound, bound)
    b = jax.random.uniform(kb, (1, out_f), jnp.float32, -bound, bound)
    return w_t.astype(w_dtype), b


def make_params(key, input_dim, h1, h2, h3, latent):
    keys = jax.random.split(key, 9)
    p = {}
    p["enc1"] = _init_linear(keys[0], input_dim, h1)
    p["enc2"] = _init_linear(keys[1], h1, h2)
    p["enc3"] = _init_linear(keys[2], h2, h3)
    # mu / sigma heads share their input -> concatenate into one matmul.
    w_mu, b_mu = _init_linear(keys[3], h3, latent)
    w_sg, b_sg = _init_linear(keys[4], h3, latent)
    p["musig"] = (jnp.concatenate([w_mu, w_sg], axis=1),
                  jnp.concatenate([b_mu, b_sg], axis=1))
    p["dec"] = _init_linear(keys[5], latent, h3)
    p["rec1"] = _init_linear(keys[6], h3, h2)
    p["rec2"] = _init_linear(keys[7], h2, h1)
    p["rec3"] = _init_linear(keys[8], h1, input_dim)
    return p


_LAYER_ORDER = ["enc1", "enc2", "enc3", "musig", "dec", "rec1", "rec2", "rec3"]


# ----------------------------------------------------------------------------
# Forward pass (mirrors Variational2DAutoEncoder.forward)
# ----------------------------------------------------------------------------
def vae_forward(params, x, eps_key):
    B, D = x.shape
    # pad batch to a sublane multiple of 8 for clean (8,128) tiling
    Bp = max(8, ((B + 7) // 8) * 8)
    xp = jnp.pad(x, ((0, Bp - B), (0, 0)))

    latent = params["musig"][0].shape[1] // 2
    # epsilon ~ N(0,1).  Kept in the host wrapper (single tiny (Bp,latent)
    # input DMA) to preserve exact jax.random semantics.
    eps = jax.random.normal(eps_key, (Bp, latent), jnp.float32)

    wb = []
    for name in _LAYER_ORDER:
        w, b = params[name]
        wb += [w, b]
    inputs = [xp, eps] + wb

    in_specs = [_full_spec(a.shape) for a in inputs]
    out_shape = (
        jax.ShapeDtypeStruct((Bp, D), jnp.float32),       # x_reconstructed
        jax.ShapeDtypeStruct((Bp, latent), jnp.float32),  # mu
        jax.ShapeDtypeStruct((Bp, latent), jnp.float32),  # sigma
    )
    out_specs = (
        _full_spec((Bp, D)),
        _full_spec((Bp, latent)),
        _full_spec((Bp, latent)),
    )

    # Advisory cost estimate for XLA scheduling.
    flops = 2 * Bp * sum(params[n][0].shape[0] * params[n][0].shape[1]
                         for n in _LAYER_ORDER)
    bytes_accessed = (sum(a.size * a.dtype.itemsize for a in inputs)
                      + Bp * (D + 2 * latent) * 4)
    cost = pl.CostEstimate(flops=flops, transcendentals=Bp * D,
                           bytes_accessed=bytes_accessed)

    x_rec, mu, sigma = pl.pallas_call(
        _vae_fused_kernel,
        out_shape=out_shape,
        grid=(1,),
        in_specs=in_specs,
        out_specs=out_specs,
        compiler_params=pltpu.CompilerParams(
            dimension_semantics=("arbitrary",),
            vmem_limit_bytes=32 * 1024 * 1024,  # explicit; fits v5e/v6e/v7x
        ),
        cost_estimate=cost,
    )(*inputs)

    # un-pad back to the original batch
    return x_rec[:B], mu[:B], sigma[:B]


# ----------------------------------------------------------------------------
if __name__ == "__main__":
    # Small shapes consistent with the module (scaled-down hidden dims,
    # kept as multiples of 128 for lane-dense tiling).
    BATCH = 2
    INPUT_DIM = 256
    H1, H2, H3, LATENT = 512, 384, 256, 128

    root = jax.random.PRNGKey(0)
    k_params, k_x, k_eps = jax.random.split(root, 3)

    params = make_params(k_params, INPUT_DIM, H1, H2, H3, LATENT)
    x = jax.random.uniform(k_x, (BATCH, INPUT_DIM), jnp.float32)

    fwd = jax.jit(vae_forward)
    x_rec, mu, sigma = fwd(params, x, k_eps)
    jax.block_until_ready((x_rec, mu, sigma))

    assert x_rec.shape == (BATCH, INPUT_DIM)
    assert mu.shape == (BATCH, LATENT)
    assert sigma.shape == (BATCH, LATENT)
    assert bool(jnp.all(jnp.isfinite(x_rec)))
    assert bool(jnp.all((x_rec >= 0.0) & (x_rec <= 1.0)))  # sigmoid output range
    print("KERNEL_OK")
</pallas_src>

<mosaic_0001>
module attributes {stable_mosaic.version = 11 : i64} {
  func.func @_vae_fused_kernel(%arg0: i32, %arg1: memref<8x256xf32, #tpu.memory_space<vmem>>, %arg2: memref<8x128xf32, #tpu.memory_space<vmem>>, %arg3: memref<256x512xbf16, #tpu.memory_space<vmem>>, %arg4: memref<1x512xf32, #tpu.memory_space<vmem>>, %arg5: memref<512x384xbf16, #tpu.memory_space<vmem>>, %arg6: memref<1x384xf32, #tpu.memory_space<vmem>>, %arg7: memref<384x256xbf16, #tpu.memory_space<vmem>>, %arg8: memref<1x256xf32, #tpu.memory_space<vmem>>, %arg9: memref<256x256xbf16, #tpu.memory_space<vmem>>, %arg10: memref<1x256xf32, #tpu.memory_space<vmem>>, %arg11: memref<128x256xbf16, #tpu.memory_space<vmem>>, %arg12: memref<1x256xf32, #tpu.memory_space<vmem>>, %arg13: memref<256x384xbf16, #tpu.memory_space<vmem>>, %arg14: memref<1x384xf32, #tpu.memory_space<vmem>>, %arg15: memref<384x512xbf16, #tpu.memory_space<vmem>>, %arg16: memref<1x512xf32, #tpu.memory_space<vmem>>, %arg17: memref<512x256xbf16, #tpu.memory_space<vmem>>, %arg18: memref<1x256xf32, #tpu.memory_space<vmem>>, %arg19: memref<8x256xf32, #tpu.memory_space<vmem>>, %arg20: memref<8x128xf32, #tpu.memory_space<vmem>>, %arg21: memref<8x128xf32, #tpu.memory_space<vmem>>) attributes {dimension_semantics = [#tpu.dimension_semantics<arbitrary>], iteration_bounds = array<i64: 1>, scalar_prefetch = 0 : i64, scratch_operands = 0 : i64, tpu.core_type = #tpu.core_type<tc>, window_params = [{pipeline_mode = #tpu.pipeline_mode<synchronous>, transform_indices = @transform_0, window_bounds = array<i64: 8, 256>}, {pipeline_mode = #tpu.pipeline_mode<synchronous>, transform_indices = @transform_1, window_bounds = array<i64: 8, 128>}, {pipeline_mode = #tpu.pipeline_mode<synchronous>, transform_indices = @transform_2, window_bounds = array<i64: 256, 512>}, {pipeline_mode = #tpu.pipeline_mode<synchronous>, transform_indices = @transform_3, window_bounds = array<i64: 1, 512>}, {pipeline_mode = #tpu.pipeline_mode<synchronous>, transform_indices = @transform_4, window_bounds = array<i64: 512, 384>}, {pipeline_mode = #tpu.pipeline_mode<synchronous>, transform_indices = @transform_5, window_bounds = array<i64: 1, 384>}, {pipeline_mode = #tpu.pipeline_mode<synchronous>, transform_indices = @transform_6, window_bounds = array<i64: 384, 256>}, {pipeline_mode = #tpu.pipeline_mode<synchronous>, transform_indices = @transform_7, window_bounds = array<i64: 1, 256>}, {pipeline_mode = #tpu.pipeline_mode<synchronous>, transform_indices = @transform_8, window_bounds = array<i64: 256, 256>}, {pipeline_mode = #tpu.pipeline_mode<synchronous>, transform_indices = @transform_9, window_bounds = array<i64: 1, 256>}, {pipeline_mode = #tpu.pipeline_mode<synchronous>, transform_indices = @transform_10, window_bounds = array<i64: 128, 256>}, {pipeline_mode = #tpu.pipeline_mode<synchronous>, transform_indices = @transform_11, window_bounds = array<i64: 1, 256>}, {pipeline_mode = #tpu.pipeline_mode<synchronous>, transform_indices = @transform_12, window_bounds = array<i64: 256, 384>}, {pipeline_mode = #tpu.pipeline_mode<synchronous>, transform_indices = @transform_13, window_bounds = array<i64: 1, 384>}, {pipeline_mode = #tpu.pipeline_mode<synchronous>, transform_indices = @transform_14, window_bounds = array<i64: 384, 512>}, {pipeline_mode = #tpu.pipeline_mode<synchronous>, transform_indices = @transform_15, window_bounds = array<i64: 1, 512>}, {pipeline_mode = #tpu.pipeline_mode<synchronous>, transform_indices = @transform_16, window_bounds = array<i64: 512, 256>}, {pipeline_mode = #tpu.pipeline_mode<synchronous>, transform_indices = @transform_17, window_bounds = array<i64: 1, 256>}, {pipeline_mode = #tpu.pipeline_mode<synchronous>, transform_indices = @transform_18, window_bounds = array<i64: 8, 256>}, {pipeline_mode = #tpu.pipeline_mode<synchronous>, transform_indices = @transform_19, window_bounds = array<i64: 8, 128>}, {pipeline_mode = #tpu.pipeline_mode<synchronous>, transform_indices = @transform_20, window_bounds = array<i64: 8, 128>}]} {
    %c0 = arith.constant 0 : index
    %c0_0 = arith.constant 0 : index
    %0 = vector.load %arg1[%c0, %c0_0] : memref<8x256xf32, #tpu.memory_space<vmem>>, vector<8x256xf32>
    %1 = arith.truncf %0 : vector<8x256xf32> to vector<8x256xbf16>
    %c0_1 = arith.constant 0 : index
    %c0_2 = arith.constant 0 : index
    %2 = vector.load %arg3[%c0_1, %c0_2] : memref<256x512xbf16, #tpu.memory_space<vmem>>, vector<256x512xbf16>
    %cst = arith.constant dense<0.000000e+00> : vector<8x512xf32>
    %3 = tpu.matmul %1, %2, %cst {dimension_numbers = #tpu.dot_dimension_numbers<[1], [0], [0], [1], [0, 0, 1, 1], [], []>} : vector<8x256xbf16>, vector<256x512xbf16>, vector<8x512xf32> -> vector<8x512xf32>
    %c0_3 = arith.constant 0 : index
    %c0_4 = arith.constant 0 : index
    %4 = vector.load %arg4[%c0_3, %c0_4] : memref<1x512xf32, #tpu.memory_space<vmem>>, vector<1x512xf32>
    %5 = vector.broadcast %4 : vector<1x512xf32> to vector<8x512xf32>
    %6 = arith.addf %3, %5 : vector<8x512xf32>
    %cst_5 = arith.constant 0.000000e+00 : f32
    %7 = vector.broadcast %cst_5 : f32 to vector<8x512xf32>
    %8 = arith.maximumf %6, %7 : vector<8x512xf32>
    %9 = arith.truncf %8 : vector<8x512xf32> to vector<8x512xbf16>
    %c0_6 = arith.constant 0 : index
    %c0_7 = arith.constant 0 : index
    %10 = vector.load %arg5[%c0_6, %c0_7] : memref<512x384xbf16, #tpu.memory_space<vmem>>, vector<512x384xbf16>
    %cst_8 = arith.constant dense<0.000000e+00> : vector<8x384xf32>
    %11 = tpu.matmul %9, %10, %cst_8 {dimension_numbers = #tpu.dot_dimension_numbers<[1], [0], [0], [1], [0, 0, 1, 1], [], []>} : vector<8x512xbf16>, vector<512x384xbf16>, vector<8x384xf32> -> vector<8x384xf32>
    %c0_9 = arith.constant 0 : index
    %c0_10 = arith.constant 0 : index
    %12 = vector.load %arg6[%c0_9, %c0_10] : memref<1x384xf32, #tpu.memory_space<vmem>>, vector<1x384xf32>
    %13 = vector.broadcast %12 : vector<1x384xf32> to vector<8x384xf32>
    %14 = arith.addf %11, %13 : vector<8x384xf32>
    %cst_11 = arith.constant 0.000000e+00 : f32
    %15 = vector.broadcast %cst_11 : f32 to vector<8x384xf32>
    %16 = arith.maximumf %14, %15 : vector<8x384xf32>
    %17 = arith.truncf %16 : vector<8x384xf32> to vector<8x384xbf16>
    %c0_12 = arith.constant 0 : index
    %c0_13 = arith.constant 0 : index
    %18 = vector.load %arg7[%c0_12, %c0_13] : memref<384x256xbf16, #tpu.memory_space<vmem>>, vector<384x256xbf16>
    %cst_14 = arith.constant dense<0.000000e+00> : vector<8x256xf32>
    %19 = tpu.matmul %17, %18, %cst_14 {dimension_numbers = #tpu.dot_dimension_numbers<[1], [0], [0], [1], [0, 0, 1, 1], [], []>} : vector<8x384xbf16>, vector<384x256xbf16>, vector<8x256xf32> -> vector<8x256xf32>
    %c0_15 = arith.constant 0 : index
    %c0_16 = arith.constant 0 : index
    %20 = vector.load %arg8[%c0_15, %c0_16] : memref<1x256xf32, #tpu.memory_space<vmem>>, vector<1x256xf32>
    %21 = vector.broadcast %20 : vector<1x256xf32> to vector<8x256xf32>
    %22 = arith.addf %19, %21 : vector<8x256xf32>
    %cst_17 = arith.constant 0.000000e+00 : f32
    %23 = vector.broadcast %cst_17 : f32 to vector<8x256xf32>
    %24 = arith.maximumf %22, %23 : vector<8x256xf32>
    %25 = arith.truncf %24 : vector<8x256xf32> to vector<8x256xbf16>
    %c0_18 = arith.constant 0 : index
    %c0_19 = arith.constant 0 : index
    %26 = vector.load %arg9[%c0_18, %c0_19] : memref<256x256xbf16, #tpu.memory_space<vmem>>, vector<256x256xbf16>
    %cst_20 = arith.constant dense<0.000000e+00> : vector<8x256xf32>
    %27 = tpu.matmul %25, %26, %cst_20 {dimension_numbers = #tpu.dot_dimension_numbers<[1], [0], [0], [1], [0, 0, 1, 1], [], []>} : vector<8x256xbf16>, vector<256x256xbf16>, vector<8x256xf32> -> vector<8x256xf32>
    %c0_21 = arith.constant 0 : index
    %c0_22 = arith.constant 0 : index
    %28 = vector.load %arg10[%c0_21, %c0_22] : memref<1x256xf32, #tpu.memory_space<vmem>>, vector<1x256xf32>
    %29 = vector.broadcast %28 : vector<1x256xf32> to vector<8x256xf32>
    %30 = arith.addf %27, %29 : vector<8x256xf32>
    %31 = vector.extract_strided_slice %30 {offsets = [0, 0], sizes = [8, 128], strides = [1, 1]} : vector<8x256xf32> to vector<8x128xf32>
    %32 = vector.extract_strided_slice %30 {offsets = [0, 128], sizes = [8, 128], strides = [1, 1]} : vector<8x256xf32> to vector<8x128xf32>
    %c0_23 = arith.constant 0 : index
    %c0_24 = arith.constant 0 : index
    %33 = vector.load %arg20[%c0_23, %c0_24] : memref<8x128xf32, #tpu.memory_space<vmem>>, vector<8x128xf32>
    tpu.vector_store %arg20[%c0_23, %c0_24], %31 {strides = array<i32>} : memref<8x128xf32, #tpu.memory_space<vmem>>, vector<8x128xf32>,
    %c0_25 = arith.constant 0 : index
    %c0_26 = arith.constant 0 : index
    %34 = vector.load %arg21[%c0_25, %c0_26] : memref<8x128xf32, #tpu.memory_space<vmem>>, vector<8x128xf32>
    tpu.vector_store %arg21[%c0_25, %c0_26], %32 {strides = array<i32>} : memref<8x128xf32, #tpu.memory_space<vmem>>, vector<8x128xf32>,
    %c0_27 = arith.constant 0 : index
    %c0_28 = arith.constant 0 : index
    %35 = vector.load %arg2[%c0_27, %c0_28] : memref<8x128xf32, #tpu.memory_space<vmem>>, vector<8x128xf32>
    %36 = arith.mulf %35, %32 : vector<8x128xf32>
    %37 = arith.addf %31, %36 : vector<8x128xf32>
    %38 = arith.truncf %37 : vector<8x128xf32> to vector<8x128xbf16>
    %c0_29 = arith.constant 0 : index
    %c0_30 = arith.constant 0 : index
    %39 = vector.load %arg11[%c0_29, %c0_30] : memref<128x256xbf16, #tpu.memory_space<vmem>>, vector<128x256xbf16>
    %cst_31 = arith.constant dense<0.000000e+00> : vector<8x256xf32>
    %40 = tpu.matmul %38, %39, %cst_31 {dimension_numbers = #tpu.dot_dimension_numbers<[1], [0], [0], [1], [0, 0, 1, 1], [], []>} : vector<8x128xbf16>, vector<128x256xbf16>, vector<8x256xf32> -> vector<8x256xf32>
    %c0_32 = arith.constant 0 : index
    %c0_33 = arith.constant 0 : index
    %41 = vector.load %arg12[%c0_32, %c0_33] : memref<1x256xf32, #tpu.memory_space<vmem>>, vector<1x256xf32>
    %42 = vector.broadcast %41 : vector<1x256xf32> to vector<8x256xf32>
    %43 = arith.addf %40, %42 : vector<8x256xf32>
    %cst_34 = arith.constant 0.000000e+00 : f32
    %44 = vector.broadcast %cst_34 : f32 to vector<8x256xf32>
    %45 = arith.maximumf %43, %44 : vector<8x256xf32>
    %46 = arith.truncf %45 : vector<8x256xf32> to vector<8x256xbf16>
    %c0_35 = arith.constant 0 : index
    %c0_36 = arith.constant 0 : index
    %47 = vector.load %arg13[%c0_35, %c0_36] : memref<256x384xbf16, #tpu.memory_space<vmem>>, vector<256x384xbf16>
    %cst_37 = arith.constant dense<0.000000e+00> : vector<8x384xf32>
    %48 = tpu.matmul %46, %47, %cst_37 {dimension_numbers = #tpu.dot_dimension_numbers<[1], [0], [0], [1], [0, 0, 1, 1], [], []>} : vector<8x256xbf16>, vector<256x384xbf16>, vector<8x384xf32> -> vector<8x384xf32>
    %c0_38 = arith.constant 0 : index
    %c0_39 = arith.constant 0 : index
    %49 = vector.load %arg14[%c0_38, %c0_39] : memref<1x384xf32, #tpu.memory_space<vmem>>, vector<1x384xf32>
    %50 = vector.broadcast %49 : vector<1x384xf32> to vector<8x384xf32>
    %51 = arith.addf %48, %50 : vector<8x384xf32>
    %cst_40 = arith.constant 0.000000e+00 : f32
    %52 = vector.broadcast %cst_40 : f32 to vector<8x384xf32>
    %53 = arith.maximumf %51, %52 : vector<8x384xf32>
    %54 = arith.truncf %53 : vector<8x384xf32> to vector<8x384xbf16>
    %c0_41 = arith.constant 0 : index
    %c0_42 = arith.constant 0 : index
    %55 = vector.load %arg15[%c0_41, %c0_42] : memref<384x512xbf16, #tpu.memory_space<vmem>>, vector<384x512xbf16>
    %cst_43 = arith.constant dense<0.000000e+00> : vector<8x512xf32>
    %56 = tpu.matmul %54, %55, %cst_43 {dimension_numbers = #tpu.dot_dimension_numbers<[1], [0], [0], [1], [0, 0, 1, 1], [], []>} : vector<8x384xbf16>, vector<384x512xbf16>, vector<8x512xf32> -> vector<8x512xf32>
    %c0_44 = arith.constant 0 : index
    %c0_45 = arith.constant 0 : index
    %57 = vector.load %arg16[%c0_44, %c0_45] : memref<1x512xf32, #tpu.memory_space<vmem>>, vector<1x512xf32>
    %58 = vector.broadcast %57 : vector<1x512xf32> to vector<8x512xf32>
    %59 = arith.addf %56, %58 : vector<8x512xf32>
    %cst_46 = arith.constant 0.000000e+00 : f32
    %60 = vector.broadcast %cst_46 : f32 to vector<8x512xf32>
    %61 = arith.maximumf %59, %60 : vector<8x512xf32>
    %62 = arith.truncf %61 : vector<8x512xf32> to vector<8x512xbf16>
    %c0_47 = arith.constant 0 : index
    %c0_48 = arith.constant 0 : index
    %63 = vector.load %arg17[%c0_47, %c0_48] : memref<512x256xbf16, #tpu.memory_space<vmem>>, vector<512x256xbf16>
    %cst_49 = arith.constant dense<0.000000e+00> : vector<8x256xf32>
    %64 = tpu.matmul %62, %63, %cst_49 {dimension_numbers = #tpu.dot_dimension_numbers<[1], [0], [0], [1], [0, 0, 1, 1], [], []>} : vector<8x512xbf16>, vector<512x256xbf16>, vector<8x256xf32> -> vector<8x256xf32>
    %c0_50 = arith.constant 0 : index
    %c0_51 = arith.constant 0 : index
    %65 = vector.load %arg18[%c0_50, %c0_51] : memref<1x256xf32, #tpu.memory_space<vmem>>, vector<1x256xf32>
    %66 = vector.broadcast %65 : vector<1x256xf32> to vector<8x256xf32>
    %67 = arith.addf %64, %66 : vector<8x256xf32>
    %68 = arith.negf %67 : vector<8x256xf32>
    %69 = math.exp %68 : vector<8x256xf32>
    %cst_52 = arith.constant 1.000000e+00 : f32
    %70 = vector.broadcast %cst_52 : f32 to vector<8x256xf32>
    %71 = arith.addf %70, %69 : vector<8x256xf32>
    %72 = arith.divf %70, %71 : vector<8x256xf32>
    %c0_53 = arith.constant 0 : index
    %c0_54 = arith.constant 0 : index
    %73 = vector.load %arg19[%c0_53, %c0_54] : memref<8x256xf32, #tpu.memory_space<vmem>>, vector<8x256xf32>
    tpu.vector_store %arg19[%c0_53, %c0_54], %72 {strides = array<i32>} : memref<8x256xf32, #tpu.memory_space<vmem>>, vector<8x256xf32>,
    return
  }
  func.func @transform_0(%arg0: i32) -> (i32, i32) {
    %c0_i32 = arith.constant 0 : i32
    %c0_i32_0 = arith.constant 0 : i32
    %c0_i32_1 = arith.constant 0 : i32
    return %c0_i32, %c0_i32_0 : i32, i32
  }
  func.func @transform_1(%arg0: i32) -> (i32, i32) {
    %c0_i32 = arith.constant 0 : i32
    %c0_i32_0 = arith.constant 0 : i32
    %c0_i32_1 = arith.constant 0 : i32
    return %c0_i32, %c0_i32_0 : i32, i32
  }
  func.func @transform_2(%arg0: i32) -> (i32, i32) {
    %c0_i32 = arith.constant 0 : i32
    %c0_i32_0 = arith.constant 0 : i32
    %c0_i32_1 = arith.constant 0 : i32
    return %c0_i32, %c0_i32_0 : i32, i32
  }
  func.func @transform_3(%arg0: i32) -> (i32, i32) {
    %c0_i32 = arith.constant 0 : i32
    %c0_i32_0 = arith.constant 0 : i32
    %c0_i32_1 = arith.constant 0 : i32
    return %c0_i32, %c0_i32_0 : i32, i32
  }
  func.func @transform_4(%arg0: i32) -> (i32, i32) {
    %c0_i32 = arith.constant 0 : i32
    %c0_i32_0 = arith.constant 0 : i32
    %c0_i32_1 = arith.constant 0 : i32
    return %c0_i32, %c0_i32_0 : i32, i32
  }
  func.func @transform_5(%arg0: i32) -> (i32, i32) {
    %c0_i32 = arith.constant 0 : i32
    %c0_i32_0 = arith.constant 0 : i32
    %c0_i32_1 = arith.constant 0 : i32
    return %c0_i32, %c0_i32_0 : i32, i32
  }
  func.func @transform_6(%arg0: i32) -> (i32, i32) {
    %c0_i32 = arith.constant 0 : i32
    %c0_i32_0 = arith.constant 0 : i32
    %c0_i32_1 = arith.constant 0 : i32
    return %c0_i32, %c0_i32_0 : i32, i32
  }
  func.func @transform_7(%arg0: i32) -> (i32, i32) {
    %c0_i32 = arith.constant 0 : i32
    %c0_i32_0 = arith.constant 0 : i32
    %c0_i32_1 = arith.constant 0 : i32
    return %c0_i32, %c0_i32_0 : i32, i32
  }
  func.func @transform_8(%arg0: i32) -> (i32, i32) {
    %c0_i32 = arith.constant 0 : i32
    %c0_i32_0 = arith.constant 0 : i32
    %c0_i32_1 = arith.constant 0 : i32
    return %c0_i32, %c0_i32_0 : i32, i32
  }
  func.func @transform_9(%arg0: i32) -> (i32, i32) {
    %c0_i32 = arith.constant 0 : i32
    %c0_i32_0 = arith.constant 0 : i32
    %c0_i32_1 = arith.constant 0 : i32
    return %c0_i32, %c0_i32_0 : i32, i32
  }
  func.func @transform_10(%arg0: i32) -> (i32, i32) {
    %c0_i32 = arith.constant 0 : i32
    %c0_i32_0 = arith.constant 0 : i32
    %c0_i32_1 = arith.constant 0 : i32
    return %c0_i32, %c0_i32_0 : i32, i32
  }
  func.func @transform_11(%arg0: i32) -> (i32, i32) {
    %c0_i32 = arith.constant 0 : i32
    %c0_i32_0 = arith.constant 0 : i32
    %c0_i32_1 = arith.constant 0 : i32
    return %c0_i32, %c0_i32_0 : i32, i32
  }
  func.func @transform_12(%arg0: i32) -> (i32, i32) {
    %c0_i32 = arith.constant 0 : i32
    %c0_i32_0 = arith.constant 0 : i32
    %c0_i32_1 = arith.constant 0 : i32
    return %c0_i32, %c0_i32_0 : i32, i32
  }
  func.func @transform_13(%arg0: i32) -> (i32, i32) {
    %c0_i32 = arith.constant 0 : i32
    %c0_i32_0 = arith.constant 0 : i32
    %c0_i32_1 = arith.constant 0 : i32
    return %c0_i32, %c0_i32_0 : i32, i32
  }
  func.func @transform_14(%arg0: i32) -> (i32, i32) {
    %c0_i32 = arith.constant 0 : i32
    %c0_i32_0 = arith.constant 0 : i32
    %c0_i32_1 = arith.constant 0 : i32
    return %c0_i32, %c0_i32_0 : i32, i32
  }
  func.func @transform_15(%arg0: i32) -> (i32, i32) {
    %c0_i32 = arith.constant 0 : i32
    %c0_i32_0 = arith.constant 0 : i32
    %c0_i32_1 = arith.constant 0 : i32
    return %c0_i32, %c0_i32_0 : i32, i32
  }
  func.func @transform_16(%arg0: i32) -> (i32, i32) {
    %c0_i32 = arith.constant 0 : i32
    %c0_i32_0 = arith.constant 0 : i32
    %c0_i32_1 = arith.constant 0 : i32
    return %c0_i32, %c0_i32_0 : i32, i32
  }
  func.func @transform_17(%arg0: i32) -> (i32, i32) {
    %c0_i32 = arith.constant 0 : i32
    %c0_i32_0 = arith.constant 0 : i32
    %c0_i32_1 = arith.constant 0 : i32
    return %c0_i32, %c0_i32_0 : i32, i32
  }
  func.func @transform_18(%arg0: i32) -> (i32, i32) {
    %c0_i32 = arith.constant 0 : i32
    %c0_i32_0 = arith.constant 0 : i32
    %c0_i32_1 = arith.constant 0 : i32
    return %c0_i32, %c0_i32_0 : i32, i32
  }
  func.func @transform_19(%arg0: i32) -> (i32, i32) {
    %c0_i32 = arith.constant 0 : i32
    %c0_i32_0 = arith.constant 0 : i32
    %c0_i32_1 = arith.constant 0 : i32
    return %c0_i32, %c0_i32_0 : i32, i32
  }
  func.func @transform_20(%arg0: i32) -> (i32, i32) {
    %c0_i32 = arith.constant 0 : i32
    %c0_i32_0 = arith.constant 0 : i32
    %c0_i32_1 = arith.constant 0 : i32
    return %c0_i32, %c0_i32_0 : i32, i32
  }
}

</mosaic_0001>

<llo_original>
// kernel: vae_forward.1
$region0: #{vae_forward.1}
  #allocation0 [shape = 'u32[]', space=smem, size = 0x4, offset = 0x4, fixed_abs, tag = 'smem constant byte address 0x4 - core index']
  #allocation1 [shape = 'u32[144,128]{1,0:T(1,128)}', space=vmem, size = 0x12000, scoped, tag = 'internal scratch']
  %s0 = inlined_call_operand.vmem [shape: f32[8,256], index: 0, kind: input, shape index: {}]
  %s1 = inlined_call_operand.vmem [shape: f32[8,128], index: 1, kind: input, shape index: {}]
  %s2 = inlined_call_operand.hbm [shape: bf16[256,512], index: 2, kind: input, shape index: {}]
  %s3 = inlined_call_operand.vmem [shape: f32[1,512], index: 3, kind: input, shape index: {}]
  %s4 = inlined_call_operand.hbm [shape: bf16[512,384], index: 4, kind: input, shape index: {}]
  %s5 = inlined_call_operand.vmem [shape: f32[1,384], index: 5, kind: input, shape index: {}]
  %s6 = inlined_call_operand.hbm [shape: bf16[384,256], index: 6, kind: input, shape index: {}]
  %s7 = inlined_call_operand.vmem [shape: f32[1,256], index: 7, kind: input, shape index: {}]
  %s8 = inlined_call_operand.hbm [shape: bf16[256,256], index: 8, kind: input, shape index: {}]
  %s9 = inlined_call_operand.vmem [shape: f32[1,256], index: 9, kind: input, shape index: {}]
  %s10 = inlined_call_operand.hbm [shape: bf16[128,256], index: 10, kind: input, shape index: {}]
  %s11 = inlined_call_operand.vmem [shape: f32[1,256], index: 11, kind: input, shape index: {}]
  %s12 = inlined_call_operand.hbm [shape: bf16[256,384], index: 12, kind: input, shape index: {}]
  %s13 = inlined_call_operand.vmem [shape: f32[1,384], index: 13, kind: input, shape index: {}]
  %s14 = inlined_call_operand.hbm [shape: bf16[384,512], index: 14, kind: input, shape index: {}]
  %s15 = inlined_call_operand.vmem [shape: f32[1,512], index: 15, kind: input, shape index: {}]
  %s16 = inlined_call_operand.hbm [shape: bf16[512,256], index: 16, kind: input, shape index: {}]
  %s17 = inlined_call_operand.vmem [shape: f32[1,256], index: 17, kind: input, shape index: {}]
  %s18 = inlined_call_operand.vmem [shape: f32[8,256], index: 18, kind: output, shape index: {0}]
  %s19 = inlined_call_operand.vmem [shape: f32[8,128], index: 19, kind: output, shape index: {1}]
  %s20 = inlined_call_operand.vmem [shape: f32[8,128], index: 20, kind: output, shape index: {2}]
  %21 = xla_tuple %s18, %s19, %s20
  %s22 = sld [smem:[#allocation0]]
  $region130: #{vae_forward.1} parent=0
    _
  %s24 = ssub.s32 1, %s22
  %s25 = scalar_select 0, %s24, %s22
  $region1: #{vae_forward.1} parent=0
    #allocation2 [shape = 'u8[262144]{0}', space=vmem, size = 0x40000, scoped, tag = 'input window, operand 2, single buffered']
    #allocation3 [shape = 's32[1]{0}', space=sflag, size = 0x4, scoped, tag = 'scoped memory for vae_forward.1']
    #allocation4 [shape = 'u8[393216]{0}', space=vmem, size = 0x60000, scoped, tag = 'input window, operand 4, single buffered']
    #allocation5 [shape = 's32[1]{0}', space=sflag, size = 0x4, scoped, tag = 'scoped memory for vae_forward.1']
    #allocation6 [shape = 'u8[196608]{0}', space=vmem, size = 0x30000, scoped, tag = 'input window, operand 6, single buffered']
    #allocation7 [shape = 'u8[131072]{0}', space=vmem, size = 0x20000, scoped, tag = 'input window, operand 8, single buffered']
    #allocation8 [shape = 's32[1]{0}', space=sflag, size = 0x4, scoped, tag = 'scoped memory for vae_forward.1']
    #allocation9 [shape = 'u8[65536]{0}', space=vmem, size = 0x10000, scoped, tag = 'input window, operand 10, single buffered']
    #allocation10 [shape = 'u8[196608]{0}', space=vmem, size = 0x30000, scoped, tag = 'input window, operand 12, single buffered']
    #allocation11 [shape = 's32[1]{0}', space=sflag, size = 0x4, scoped, tag = 'scoped memory for vae_forward.1']
    #allocation12 [shape = 'u8[393216]{0}', space=vmem, size = 0x60000, scoped, tag = 'input window, operand 14, single buffered']
    #allocation13 [shape = 'u8[262144]{0}', space=vmem, size = 0x40000, scoped, tag = 'input window, operand 16, single buffered']
    #allocation14 [shape = 's32[1]{0}', space=sflag, size = 0x4, scoped, tag = 'scoped memory for vae_forward.1']
    %26 = vsyncpa [#allocation3], 0
    %27 = vsyncpa [#allocation5], 0
    %28 = vsyncpa [#allocation8], 0
    %29 = vsyncpa [#allocation11], 0
    %30 = vsyncpa [#allocation14], 0
    // Predicated region
    $region2: #{vae_forward.1} parent=1 // pred_check
      _
    $region3: #{vae_forward.1} parent=1 // pred_check_branch
      %32 = sbr.rel (0) target = $region5
    $region4: #{vae_forward.1} parent=1 // pred_region
      _
    $region5: #{vae_forward.1} parent=1 // pred_fallthru
      _
    // Predicated region
    $region6: #{vae_forward.1} parent=1 // pred_check
      _
    $region7: #{vae_forward.1} parent=1 // pred_check_branch
      %34 = sbr.rel (0) target = $region9
    $region8: #{vae_forward.1} parent=1 // pred_region
      _
    $region9: #{vae_forward.1} parent=1 // pred_fallthru
      _
    // Predicated region
    $region10: #{vae_forward.1} parent=1 // pred_check
      _
    $region11: #{vae_forward.1} parent=1 // pred_check_branch
      %36 = sbr.rel (0) target = $region13
    $region12: #{vae_forward.1} parent=1 // pred_region
      %s38 = ssub.s32 8192, 8192
      %39 = vsyncadd [#allocation3], %s38
      %s40 = sshll.u32 [#allocation2], 4
      %s41 = int_to_ptr.vmem [resolvable:$true] %s40
      %46 = dma.hbm_to_vmem [thread:$0]  %s2, 8192, %s41, [#allocation3], 256, 256, 16
    $region13: #{vae_forward.1} parent=1 // pred_fallthru
      _
    // Predicated region
    $region14: #{vae_forward.1} parent=1 // pred_check
      _
    $region15: #{vae_forward.1} parent=1 // pred_check_branch
      %48 = sbr.rel (0) target = $region17
    $region16: #{vae_forward.1} parent=1 // pred_region
      _
    $region17: #{vae_forward.1} parent=1 // pred_fallthru
      _
    // Predicated region
    $region18: #{vae_forward.1} parent=1 // pred_check
      _
    $region19: #{vae_forward.1} parent=1 // pred_check_branch
      %50 = sbr.rel (0) target = $region21
    $region20: #{vae_forward.1} parent=1 // pred_region
      %s52 = ssub.s32 12288, 12288
      %53 = vsyncadd [#allocation5], %s52
      %s54 = sshll.u32 [#allocation4], 4
      %s55 = int_to_ptr.vmem [resolvable:$true] %s54
      %60 = dma.hbm_to_vmem [thread:$0]  %s4, 12288, %s55, [#allocation5], 192, 192, 12
    $region21: #{vae_forward.1} parent=1 // pred_fallthru
      _
    // Predicated region
    $region22: #{vae_forward.1} parent=1 // pred_check
      _
    $region23: #{vae_forward.1} parent=1 // pred_check_branch
      %62 = sbr.rel (0) target = $region25
    $region24: #{vae_forward.1} parent=1 // pred_region
      _
    $region25: #{vae_forward.1} parent=1 // pred_fallthru
      _
    // Predicated region
    $region26: #{vae_forward.1} parent=1 // pred_check
      _
    $region27: #{vae_forward.1} parent=1 // pred_check_branch
      %64 = sbr.rel (0) target = $region29
    $region28: #{vae_forward.1} parent=1 // pred_region
      %s66 = ssub.s32 6144, 6144
      %67 = vsyncadd [#allocation5], %s66
      %s68 = sshll.u32 [#allocation6], 4
      %s69 = int_to_ptr.vmem [resolvable:$true] %s68
      %74 = dma.hbm_to_vmem [thread:$0]  %s6, 6144, %s69, [#allocation5], 128, 128, 8
    $region29: #{vae_forward.1} parent=1 // pred_fallthru
      _
    // Predicated region
    $region30: #{vae_forward.1} parent=1 // pred_check
      _
    $region31: #{vae_forward.1} parent=1 // pred_check_branch
      %76 = sbr.rel (0) target = $region33
    $region32: #{vae_forward.1} parent=1 // pred_region
      _
    $region33: #{vae_forward.1} parent=1 // pred_fallthru
      _
    // Predicated region
    $region34: #{vae_forward.1} parent=1 // pred_check
      _
    $region35: #{vae_forward.1} parent=1 // pred_check_branch
      %78 = sbr.rel (0) target = $region37
    $region36: #{vae_forward.1} parent=1 // pred_region
      %s80 = ssub.s32 4096, 4096
      %81 = vsyncadd [#allocation8], %s80
      %s82 = sshll.u32 [#allocation7], 4
      %s83 = int_to_ptr.vmem [resolvable:$true] %s82
      %88 = dma.hbm_to_vmem [thread:$0]  %s8, 4096, %s83, [#allocation8], 128, 128, 8
    $region37: #{vae_forward.1} parent=1 // pred_fallthru
      _
    // Predicated region
    $region38: #{vae_forward.1} parent=1 // pred_check
      _
    $region39: #{vae_forward.1} parent=1 // pred_check_branch
      %90 = sbr.rel (0) target = $region41
    $region40: #{vae_forward.1} parent=1 // pred_region
      _
    $region41: #{vae_forward.1} parent=1 // pred_fallthru
      _
    // Predicated region
    $region42: #{vae_forward.1} parent=1 // pred_check
      _
    $region43: #{vae_forward.1} parent=1 // pred_check_branch
      %92 = sbr.rel (0) target = $region45
    $region44: #{vae_forward.1} parent=1 // pred_region
      %s94 = ssub.s32 2048, 2048
      %95 = vsyncadd [#allocation8], %s94
      %s96 = sshll.u32 [#allocation9], 4
      %s97 = int_to_ptr.vmem [resolvable:$true] %s96
      %102 = dma.hbm_to_vmem [thread:$0]  %s10, 2048, %s97, [#allocation8], 128, 128, 8
    $region45: #{vae_forward.1} parent=1 // pred_fallthru
      _
    // Predicated region
    $region46: #{vae_forward.1} parent=1 // pred_check
      _
    $region47: #{vae_forward.1} parent=1 // pred_check_branch
      %104 = sbr.rel (0) target = $region49
    $region48: #{vae_forward.1} parent=1 // pred_region
      _
    $region49: #{vae_forward.1} parent=1 // pred_fallthru
      _
    // Predicated region
    $region50: #{vae_forward.1} parent=1 // pred_check
      _
    $region51: #{vae_forward.1} parent=1 // pred_check_branch
      %106 = sbr.rel (0) target = $region53
    $region52: #{vae_forward.1} parent=1 // pred_region
      %s108 = ssub.s32 6144, 6144
      %109 = vsyncadd [#allocation11], %s108
      %s110 = sshll.u32 [#allocation10], 4
      %s111 = int_to_ptr.vmem [resolvable:$true] %s110
      %116 = dma.hbm_to_vmem [thread:$0]  %s12, 6144, %s111, [#allocation11], 192, 192, 12
    $region53: #{vae_forward.1} parent=1 // pred_fallthru
      _
    // Predicated region
    $region54: #{vae_forward.1} parent=1 // pred_check
      _
    $region55: #{vae_forward.1} parent=1 // pred_check_branch
      %118 = sbr.rel (0) target = $region57
    $region56: #{vae_forward.1} parent=1 // pred_region
      _
    $region57: #{vae_forward.1} parent=1 // pred_fallthru
      _
    // Predicated region
    $region58: #{vae_forward.1} parent=1 // pred_check
      _
    $region59: #{vae_forward.1} parent=1 // pred_check_branch
      %120 = sbr.rel (0) target = $region61
    $region60: #{vae_forward.1} parent=1 // pred_region
      %s122 = ssub.s32 12288, 12288
      %123 = vsyncadd [#allocation11], %s122
      %s124 = sshll.u32 [#allocation12], 4
      %s125 = int_to_ptr.vmem [resolvable:$true] %s124
      %130 = dma.hbm_to_vmem [thread:$0]  %s14, 12288, %s125, [#allocation11], 256, 256, 16
    $region61: #{vae_forward.1} parent=1 // pred_fallthru
      _
    // Predicated region
    $region62: #{vae_forward.1} parent=1 // pred_check
      _
    $region63: #{vae_forward.1} parent=1 // pred_check_branch
      %132 = sbr.rel (0) target = $region65
    $region64: #{vae_forward.1} parent=1 // pred_region
      _
    $region65: #{vae_forward.1} parent=1 // pred_fallthru
      _
    // Predicated region
    $region66: #{vae_forward.1} parent=1 // pred_check
      _
    $region67: #{vae_forward.1} parent=1 // pred_check_branch
      %134 = sbr.rel (0) target = $region69
    $region68: #{vae_forward.1} parent=1 // pred_region
      %s136 = ssub.s32 8192, 8192
      %137 = vsyncadd [#allocation14], %s136
      %s138 = sshll.u32 [#allocation13], 4
      %s139 = int_to_ptr.vmem [resolvable:$true] %s138
      %144 = dma.hbm_to_vmem [thread:$0]  %s16, 8192, %s139, [#allocation14], 128, 128, 8
    $region69: #{vae_forward.1} parent=1 // pred_fallthru
      _
    // Predicated region
    $region70: #{vae_forward.1} parent=1 // pred_check
      _
    $region71: #{vae_forward.1} parent=1 // pred_check_branch
      %146 = sbr.rel (0) target = $region73
    $region72: #{vae_forward.1} parent=1 // pred_region
      _
    $region73: #{vae_forward.1} parent=1 // pred_fallthru
      _
    // Predicated region
    $region74: #{vae_forward.1} parent=1 // pred_check
      _
    $region75: #{vae_forward.1} parent=1 // pred_check_branch
      %148 = sbr.rel (0) target = $region77
    $region76: #{vae_forward.1} parent=1 // pred_region
      %149 = dma.done [#allocation3], 8192
    $region77: #{vae_forward.1} parent=1 // pred_fallthru
      _
    // Predicated region
    $region78: #{vae_forward.1} parent=1 // pred_check
      _
    $region79: #{vae_forward.1} parent=1 // pred_check_branch
      %151 = sbr.rel (0) target = $region81
    $region80: #{vae_forward.1} parent=1 // pred_region
      %152 = dma.done [#allocation5], 12288
    $region81: #{vae_forward.1} parent=1 // pred_fallthru
      _
    // Predicated region
    $region82: #{vae_forward.1} parent=1 // pred_check
      _
    $region83: #{vae_forward.1} parent=1 // pred_check_branch
      %154 = sbr.rel (0) target = $region85
    $region84: #{vae_forward.1} parent=1 // pred_region
      %155 = dma.done [#allocation5], 6144
    $region85: #{vae_forward.1} parent=1 // pred_fallthru
      _
    // Predicated region
    $region86: #{vae_forward.1} parent=1 // pred_check
      _
    $region87: #{vae_forward.1} parent=1 // pred_check_branch
      %157 = sbr.rel (0) target = $region89
    $region88: #{vae_forward.1} parent=1 // pred_region
      %158 = dma.done [#allocation8], 4096
    $region89: #{vae_forward.1} parent=1 // pred_fallthru
      _
    // Predicated region
    $region90: #{vae_forward.1} parent=1 // pred_check
      _
    $region91: #{vae_forward.1} parent=1 // pred_check_branch
      %160 = sbr.rel (0) target = $region93
    $region92: #{vae_forward.1} parent=1 // pred_region
      %161 = dma.done [#allocation8], 2048
    $region93: #{vae_forward.1} parent=1 // pred_fallthru
      _
    // Predicated region
    $region94: #{vae_forward.1} parent=1 // pred_check
      _
    $region95: #{vae_forward.1} parent=1 // pred_check_branch
      %163 = sbr.rel (0) target = $region97
    $region96: #{vae_forward.1} parent=1 // pred_region
      %164 = dma.done [#allocation11], 6144
    $region97: #{vae_forward.1} parent=1 // pred_fallthru
      _
    // Predicated region
    $region98: #{vae_forward.1} parent=1 // pred_check
      _
    $region99: #{vae_forward.1} parent=1 // pred_check_branch
      %166 = sbr.rel (0) target = $region101
    $region100: #{vae_forward.1} parent=1 // pred_region
      %167 = dma.done [#allocation11], 12288
    $region101: #{vae_forward.1} parent=1 // pred_fallthru
      _
    // Predicated region
    $region102: #{vae_forward.1} parent=1 // pred_check
      _
    $region103: #{vae_forward.1} parent=1 // pred_check_branch
      %169 = sbr.rel (0) target = $region105
    $region104: #{vae_forward.1} parent=1 // pred_region
      %170 = dma.done [#allocation14], 8192
    $region105: #{vae_forward.1} parent=1 // pred_fallthru
      _
    %v172 = vld [vmem:[%s0] sm:$0xff]
    %v173 = vld [vmem:[%s0 + $0x8] sm:$0xff]
    %v174 = vpack.c.bf16 %v172, %v172
    %v175 = vpack.c.bf16 %v173, %v173
    %v176 = vld [vmem:[#allocation2] sm:$0xff]
    %v177 = vld [vmem:[#allocation2 + $0x8] sm:$0xff]
    %v178 = vld [vmem:[#allocation2 + $0x10] sm:$0xff]
    %v179 = vld [vmem:[#allocation2 + $0x18] sm:$0xff]
    %v180 = vld [vmem:[#allocation2 + $0x20] sm:$0xff]
    %v181 = vld [vmem:[#allocation2 + $0x28] sm:$0xff]
    %v182 = vld [vmem:[#allocation2 + $0x30] sm:$0xff]
    %v183 = vld [vmem:[#allocation2 + $0x38] sm:$0xff]
    %v184 = vld [vmem:[#allocation2 + $0x40] sm:$0xff]
    %v185 = vld [vmem:[#allocation2 + $0x48] sm:$0xff]
    %v186 = vld [vmem:[#allocation2 + $0x50] sm:$0xff]
    %v187 = vld [vmem:[#allocation2 + $0x58] sm:$0xff]
    %v188 = vld [vmem:[#allocation2 + $0x60] sm:$0xff]
    %v189 = vld [vmem:[#allocation2 + $0x68] sm:$0xff]
    %v190 = vld [vmem:[#allocation2 + $0x70] sm:$0xff]
    %v191 = vld [vmem:[#allocation2 + $0x78] sm:$0xff]
    %v192 = vld [vmem:[#allocation2 + $0x80] sm:$0xff]
    %v193 = vld [vmem:[#allocation2 + $0x88] sm:$0xff]
    %v194 = vld [vmem:[#allocation2 + $0x90] sm:$0xff]
    %v195 = vld [vmem:[#allocation2 + $0x98] sm:$0xff]
    %v196 = vld [vmem:[#allocation2 + $0xa0] sm:$0xff]
    %v197 = vld [vmem:[#allocation2 + $0xa8] sm:$0xff]
    %v198 = vld [vmem:[#allocation2 + $0xb0] sm:$0xff]
    %v199 = vld [vmem:[#allocation2 + $0xb8] sm:$0xff]
    %v200 = vld [vmem:[#allocation2 + $0xc0] sm:$0xff]
    %v201 = vld [vmem:[#allocation2 + $0xc8] sm:$0xff]
    %v202 = vld [vmem:[#allocation2 + $0xd0] sm:$0xff]
    %v203 = vld [vmem:[#allocation2 + $0xd8] sm:$0xff]
    %v204 = vld [vmem:[#allocation2 + $0xe0] sm:$0xff]
    %v205 = vld [vmem:[#allocation2 + $0xe8] sm:$0xff]
    %v206 = vld [vmem:[#allocation2 + $0xf0] sm:$0xff]
    %v207 = vld [vmem:[#allocation2 + $0xf8] sm:$0xff]
    %v208 = vld [vmem:[#allocation2 + $0x100] sm:$0xff]
    %v209 = vld [vmem:[#allocation2 + $0x108] sm:$0xff]
    %v210 = vld [vmem:[#allocation2 + $0x110] sm:$0xff]
    %v211 = vld [vmem:[#allocation2 + $0x118] sm:$0xff]
    %v212 = vld [vmem:[#allocation2 + $0x120] sm:$0xff]
    %v213 = vld [vmem:[#allocation2 + $0x128] sm:$0xff]
    %v214 = vld [vmem:[#allocation2 + $0x130] sm:$0xff]
    %v215 = vld [vmem:[#allocation2 + $0x138] sm:$0xff]
    %v216 = vld [vmem:[#allocation2 + $0x140] sm:$0xff]
    %v217 = vld [vmem:[#allocation2 + $0x148] sm:$0xff]
    %v218 = vld [vmem:[#allocation2 + $0x150] sm:$0xff]
    %v219 = vld [vmem:[#allocation2 + $0x158] sm:$0xff]
    %v220 = vld [vmem:[#allocation2 + $0x160] sm:$0xff]
    %v221 = vld [vmem:[#allocation2 + $0x168] sm:$0xff]
    %v222 = vld [vmem:[#allocation2 + $0x170] sm:$0xff]
    %v223 = vld [vmem:[#allocation2 + $0x178] sm:$0xff]
    %v224 = vld [vmem:[#allocation2 + $0x180] sm:$0xff]
    %v225 = vld [vmem:[#allocation2 + $0x188] sm:$0xff]
    %v226 = vld [vmem:[#allocation2 + $0x190] sm:$0xff]
    %v227 = vld [vmem:[#allocation2 + $0x198] sm:$0xff]
    %v228 = vld [vmem:[#allocation2 + $0x1a0] sm:$0xff]
    %v229 = vld [vmem:[#allocation2 + $0x1a8] sm:$0xff]
    %v230 = vld [vmem:[#allocation2 + $0x1b0] sm:$0xff]
    %v231 = vld [vmem:[#allocation2 + $0x1b8] sm:$0xff]
    %v232 = vld [vmem:[#allocation2 + $0x1c0] sm:$0xff]
    %v233 = vld [vmem:[#allocation2 + $0x1c8] sm:$0xff]
    %v234 = vld [vmem:[#allocation2 + $0x1d0] sm:$0xff]
    %v235 = vld [vmem:[#allocation2 + $0x1d8] sm:$0xff]
    %v236 = vld [vmem:[#allocation2 + $0x1e0] sm:$0xff]
    %v237 = vld [vmem:[#allocation2 + $0x1e8] sm:$0xff]
    %v238 = vld [vmem:[#allocation2 + $0x1f0] sm:$0xff]
    %v239 = vld [vmem:[#allocation2 + $0x1f8] sm:$0xff]
    %v240 = vld [vmem:[%s3] sm:$0xf]
    %v242 = vlaneseq
    %v243 = vshrl.u32 %v242, 7
    %v244 = vsub.s32 0, %v243
    %v245 = vrot.slane %v240, %v244
    %v246 = vlaneseq
    %v247 = vshrl.u32 %v246, 7
    %v248 = vsub.s32 1, %v247
    %v249 = vrot.slane %v240, %v248
    %v250 = vlaneseq
    %v251 = vshrl.u32 %v250, 7
    %v252 = vsub.s32 2, %v251
    %v253 = vrot.slane %v240, %v252
    %v254 = vlaneseq
    %v255 = vshrl.u32 %v254, 7
    %v256 = vsub.s32 3, %v255
    %v257 = vrot.slane %v240, %v256
    %v326 = vunpack.c.l.b16 %v176
    %v327 = vunpack.c.h.b16 %v176
    %v328 = vunpack.c.l.b16 %v177
    %v329 = vunpack.c.h.b16 %v177
    %v330 = vunpack.c.l.b16 %v178
    %v331 = vunpack.c.h.b16 %v178
    %v332 = vunpack.c.l.b16 %v179
    %v333 = vunpack.c.h.b16 %v179
    %v334 = vunpack.c.l.b16 %v180
    %v335 = vunpack.c.h.b16 %v180
    %v336 = vunpack.c.l.b16 %v181
    %v337 = vunpack.c.h.b16 %v181
    %v338 = vunpack.c.l.b16 %v182
    %v339 = vunpack.c.h.b16 %v182
    %v340 = vunpack.c.l.b16 %v183
    %v341 = vunpack.c.h.b16 %v183
    %v342 = vunpack.c.l.b16 %v184
    %v343 = vunpack.c.h.b16 %v184
    %v344 = vunpack.c.l.b16 %v185
    %v345 = vunpack.c.h.b16 %v185
    %v346 = vunpack.c.l.b16 %v186
    %v347 = vunpack.c.h.b16 %v186
    %v348 = vunpack.c.l.b16 %v187
    %v349 = vunpack.c.h.b16 %v187
    %v350 = vunpack.c.l.b16 %v188
    %v351 = vunpack.c.h.b16 %v188
    %v352 = vunpack.c.l.b16 %v189
    %v353 = vunpack.c.h.b16 %v189
    %v354 = vunpack.c.l.b16 %v190
    %v355 = vunpack.c.h.b16 %v190
    %v356 = vunpack.c.l.b16 %v191
    %v357 = vunpack.c.h.b16 %v191
    %v358 = vunpack.c.l.b16 %v192
    %v359 = vunpack.c.h.b16 %v192
    %v360 = vunpack.c.l.b16 %v193
    %v361 = vunpack.c.h.b16 %v193
    %v362 = vunpack.c.l.b16 %v194
    %v363 = vunpack.c.h.b16 %v194
    %v364 = vunpack.c.l.b16 %v195
    %v365 = vunpack.c.h.b16 %v195
    %v366 = vunpack.c.l.b16 %v196
    %v367 = vunpack.c.h.b16 %v196
    %v368 = vunpack.c.l.b16 %v197
    %v369 = vunpack.c.h.b16 %v197
    %v370 = vunpack.c.l.b16 %v198
    %v371 = vunpack.c.h.b16 %v198
    %v372 = vunpack.c.l.b16 %v199
    %v373 = vunpack.c.h.b16 %v199
    %v374 = vunpack.c.l.b16 %v200
    %v375 = vunpack.c.h.b16 %v200
    %v376 = vunpack.c.l.b16 %v201
    %v377 = vunpack.c.h.b16 %v201
    %v378 = vunpack.c.l.b16 %v202
    %v379 = vunpack.c.h.b16 %v202
    %v380 = vunpack.c.l.b16 %v203
    %v381 = vunpack.c.h.b16 %v203
    %v382 = vunpack.c.l.b16 %v204
    %v383 = vunpack.c.h.b16 %v204
    %v384 = vunpack.c.l.b16 %v205
    %v385 = vunpack.c.h.b16 %v205
    %v386 = vunpack.c.l.b16 %v206
    %v387 = vunpack.c.h.b16 %v206
    %v388 = vunpack.c.l.b16 %v207
    %v389 = vunpack.c.h.b16 %v207
    %v390 = vunpack.c.l.b16 %v208
    %v391 = vunpack.c.h.b16 %v208
    %v392 = vunpack.c.l.b16 %v209
    %v393 = vunpack.c.h.b16 %v209
    %v394 = vunpack.c.l.b16 %v210
    %v395 = vunpack.c.h.b16 %v210
    %v396 = vunpack.c.l.b16 %v211
    %v397 = vunpack.c.h.b16 %v211
    %v398 = vunpack.c.l.b16 %v212
    %v399 = vunpack.c.h.b16 %v212
    %v400 = vunpack.c.l.b16 %v213
    %v401 = vunpack.c.h.b16 %v213
    %v402 = vunpack.c.l.b16 %v214
    %v403 = vunpack.c.h.b16 %v214
    %v404 = vunpack.c.l.b16 %v215
    %v405 = vunpack.c.h.b16 %v215
    %v406 = vunpack.c.l.b16 %v216
    %v407 = vunpack.c.h.b16 %v216
    %v408 = vunpack.c.l.b16 %v217
    %v409 = vunpack.c.h.b16 %v217
    %v410 = vunpack.c.l.b16 %v218
    %v411 = vunpack.c.h.b16 %v218
    %v412 = vunpack.c.l.b16 %v219
    %v413 = vunpack.c.h.b16 %v219
    %v414 = vunpack.c.l.b16 %v220
    %v415 = vunpack.c.h.b16 %v220
    %v416 = vunpack.c.l.b16 %v221
    %v417 = vunpack.c.h.b16 %v221
    %v418 = vunpack.c.l.b16 %v222
    %v419 = vunpack.c.h.b16 %v222
    %v420 = vunpack.c.l.b16 %v223
    %v421 = vunpack.c.h.b16 %v223
    %v422 = vunpack.c.l.b16 %v224
    %v423 = vunpack.c.h.b16 %v224
    %v424 = vunpack.c.l.b16 %v225
    %v425 = vunpack.c.h.b16 %v225
    %v426 = vunpack.c.l.b16 %v226
    %v427 = vunpack.c.h.b16 %v226
    %v428 = vunpack.c.l.b16 %v227
    %v429 = vunpack.c.h.b16 %v227
    %v430 = vunpack.c.l.b16 %v228
    %v431 = vunpack.c.h.b16 %v228
    %v432 = vunpack.c.l.b16 %v229
    %v433 = vunpack.c.h.b16 %v229
    %v434 = vunpack.c.l.b16 %v230
    %v435 = vunpack.c.h.b16 %v230
    %v436 = vunpack.c.l.b16 %v231
    %v437 = vunpack.c.h.b16 %v231
    %v438 = vunpack.c.l.b16 %v232
    %v439 = vunpack.c.h.b16 %v232
    %v440 = vunpack.c.l.b16 %v233
    %v441 = vunpack.c.h.b16 %v233
    %v442 = vunpack.c.l.b16 %v234
    %v443 = vunpack.c.h.b16 %v234
    %v444 = vunpack.c.l.b16 %v235
    %v445 = vunpack.c.h.b16 %v235
    %v446 = vunpack.c.l.b16 %v236
    %v447 = vunpack.c.h.b16 %v236
    %v448 = vunpack.c.l.b16 %v237
    %v449 = vunpack.c.h.b16 %v237
    %v450 = vunpack.c.l.b16 %v238
    %v451 = vunpack.c.h.b16 %v238
    %v452 = vunpack.c.l.b16 %v239
    %v453 = vunpack.c.h.b16 %v239
    %v454 = vpack.c.b16 %v330, %v326
    %v455 = vpack.c.b16 %v331, %v327
    %v456 = vpack.c.b16 %v332, %v328
    %v457 = vpack.c.b16 %v333, %v329
    %v458 = vpack.c.b16 %v338, %v334
    %v459 = vpack.c.b16 %v339, %v335
    %v460 = vpack.c.b16 %v340, %v336
    %v461 = vpack.c.b16 %v341, %v337
    %v462 = vpack.c.b16 %v346, %v342
    %v463 = vpack.c.b16 %v347, %v343
    %v464 = vpack.c.b16 %v348, %v344
    %v465 = vpack.c.b16 %v349, %v345
    %v466 = vpack.c.b16 %v354, %v350
    %v467 = vpack.c.b16 %v355, %v351
    %v468 = vpack.c.b16 %v356, %v352
    %v469 = vpack.c.b16 %v357, %v353
    %v470 = vpack.c.b16 %v362, %v358
    %v471 = vpack.c.b16 %v363, %v359
    %v472 = vpack.c.b16 %v364, %v360
    %v473 = vpack.c.b16 %v365, %v361
    %v474 = vpack.c.b16 %v370, %v366
    %v475 = vpack.c.b16 %v371, %v367
    %v476 = vpack.c.b16 %v372, %v368
    %v477 = vpack.c.b16 %v373, %v369
    %v478 = vpack.c.b16 %v378, %v374
    %v479 = vpack.c.b16 %v379, %v375
    %v480 = vpack.c.b16 %v380, %v376
    %v481 = vpack.c.b16 %v381, %v377
    %v482 = vpack.c.b16 %v386, %v382
    %v483 = vpack.c.b16 %v387, %v383
    %v484 = vpack.c.b16 %v388, %v384
    %v485 = vpack.c.b16 %v389, %v385
    %v486 = vpack.c.b16 %v394, %v390
    %v487 = vpack.c.b16 %v395, %v391
    %v488 = vpack.c.b16 %v396, %v392
    %v489 = vpack.c.b16 %v397, %v393
    %v490 = vpack.c.b16 %v402, %v398
    %v491 = vpack.c.b16 %v403, %v399
    %v492 = vpack.c.b16 %v404, %v400
    %v493 = vpack.c.b16 %v405, %v401
    %v494 = vpack.c.b16 %v410, %v406
    %v495 = vpack.c.b16 %v411, %v407
    %v496 = vpack.c.b16 %v412, %v408
    %v497 = vpack.c.b16 %v413, %v409
    %v498 = vpack.c.b16 %v418, %v414
    %v499 = vpack.c.b16 %v419, %v415
    %v500 = vpack.c.b16 %v420, %v416
    %v501 = vpack.c.b16 %v421, %v417
    %v502 = vpack.c.b16 %v426, %v422
    %v503 = vpack.c.b16 %v427, %v423
    %v504 = vpack.c.b16 %v428, %v424
    %v505 = vpack.c.b16 %v429, %v425
    %v506 = vpack.c.b16 %v434, %v430
    %v507 = vpack.c.b16 %v435, %v431
    %v508 = vpack.c.b16 %v436, %v432
    %v509 = vpack.c.b16 %v437, %v433
    %v510 = vpack.c.b16 %v442, %v438
    %v511 = vpack.c.b16 %v443, %v439
    %v512 = vpack.c.b16 %v444, %v440
    %v513 = vpack.c.b16 %v445, %v441
    %v514 = vpack.c.b16 %v450, %v446
    %v515 = vpack.c.b16 %v451, %v447
    %v516 = vpack.c.b16 %v452, %v448
    %v517 = vpack.c.b16 %v453, %v449
    %582 = vmatprep.subr.bf16.mxu0 %v483
    %583 = vmatpush1.bf16.msra.mxu0 %v482
    %584 = vmatprep.subr.bf16.mxu0 %v479
    %585 = vmatpush1.bf16.msra.mxu0 %v478
    %586 = vmatprep.subr.bf16.mxu0 %v475
    %587 = vmatpush1.bf16.msra.mxu0 %v474
    %588 = vmatprep.subr.bf16.mxu0 %v471
    %589 = vmatpush1.bf16.msra.mxu0 %v470
    %590 = vmatprep.subr.bf16.mxu0 %v467
    %591 = vmatpush1.bf16.msra.mxu0 %v466
    %592 = vmatprep.subr.bf16.mxu0 %v463
    %593 = vmatpush1.bf16.msra.mxu0 %v462
    %594 = vmatprep.subr.bf16.mxu0 %v459
    %595 = vmatpush1.bf16.msra.mxu0 %v458
    %596 = vmatprep.subr.bf16.mxu0 %v455
    %597 = vmatpush1.bf16.msra.mxu0 %v454
    %598 = vmatprep.subr.bf16.mxu0 %v515
    %599 = vmatpush2.bf16.msra.mxu0 %v514
    %600 = vmatprep.subr.bf16.mxu0 %v511
    %601 = vmatpush2.bf16.msra.mxu0 %v510
    %602 = vmatprep.subr.bf16.mxu0 %v507
    %603 = vmatpush2.bf16.msra.mxu0 %v506
    %604 = vmatprep.subr.bf16.mxu0 %v503
    %605 = vmatpush2.bf16.msra.mxu0 %v502
    %606 = vmatprep.subr.bf16.mxu0 %v499
    %607 = vmatpush2.bf16.msra.mxu0 %v498
    %608 = vmatprep.subr.bf16.mxu0 %v495
    %609 = vmatpush2.bf16.msra.mxu0 %v494
    %610 = vmatprep.subr.bf16.mxu0 %v491
    %611 = vmatpush2.bf16.msra.mxu0 %v490
    %612 = vmatprep.subr.bf16.mxu0 %v487
    %613 = vmatpush2.bf16.msra.mxu0 %v486
    %614 = vmatprep.mubr.bf16.mxu0 %v175
    %615 = vmatmul.mubr.bf16.gmra.mxu0 %v174
    %v616 = vpop.f32.mrf.mxu0
    %v617 = vadd.f32 %v245, %v616
    %v618 = vpop.f32.mrf.mxu0
    %v619 = vadd.f32 %v249, %v618
    %v620 = vpop.f32.mrf.mxu0
    %v621 = vpop.f32.mrf.mxu0
    %622 = vdwg.mxu0
    %623 = vmatprep.subr.bf16.mxu0 %v485
    %624 = vmatpush1.bf16.msra.mxu0 %v484
    %625 = vmatprep.subr.bf16.mxu0 %v481
    %626 = vmatpush1.bf16.msra.mxu0 %v480
    %627 = vmatprep.subr.bf16.mxu0 %v477
    %628 = vmatpush1.bf16.msra.mxu0 %v476
    %629 = vmatprep.subr.bf16.mxu0 %v473
    %630 = vmatpush1.bf16.msra.mxu0 %v472
    %631 = vmatprep.subr.bf16.mxu0 %v469
    %632 = vmatpush1.bf16.msra.mxu0 %v468
    %633 = vmatprep.subr.bf16.mxu0 %v465
    %634 = vmatpush1.bf16.msra.mxu0 %v464
    %635 = vmatprep.subr.bf16.mxu0 %v461
    %636 = vmatpush1.bf16.msra.mxu0 %v460
    %637 = vmatprep.subr.bf16.mxu0 %v457
    %638 = vmatpush1.bf16.msra.mxu0 %v456
    %639 = vmatprep.subr.bf16.mxu0 %v517
    %640 = vmatpush2.bf16.msra.mxu0 %v516
    %641 = vmatprep.subr.bf16.mxu0 %v513
    %642 = vmatpush2.bf16.msra.mxu0 %v512
    %643 = vmatprep.subr.bf16.mxu0 %v509
    %644 = vmatpush2.bf16.msra.mxu0 %v508
    %645 = vmatprep.subr.bf16.mxu0 %v505
    %646 = vmatpush2.bf16.msra.mxu0 %v504
    %647 = vmatprep.subr.bf16.mxu0 %v501
    %648 = vmatpush2.bf16.msra.mxu0 %v500
    %649 = vmatprep.subr.bf16.mxu0 %v497
    %650 = vmatpush2.bf16.msra.mxu0 %v496
    %651 = vmatprep.subr.bf16.mxu0 %v493
    %652 = vmatpush2.bf16.msra.mxu0 %v492
    %653 = vmatprep.subr.bf16.mxu0 %v489
    %654 = vmatpush2.bf16.msra.mxu0 %v488
    %655 = vmatprep.mubr.bf16.mxu0 %v175
    %656 = vmatmul.mubr.bf16.gmra.mxu0 %v174
    %v657 = vpop.f32.mrf.mxu0
    %v658 = vadd.f32 %v253, %v657
    %v659 = vpop.f32.mrf.mxu0
    %v660 = vadd.f32 %v257, %v659
    %v661 = vpop.f32.mrf.mxu0
    %v662 = vpop.f32.mrf.mxu0
    %663 = vdwg.mxu0
    %v664 = vmax.f32 %v617, 0.0
    %v665 = vmax.f32 %v619, 0.0
    %v666 = vmax.f32 %v658, 0.0
    %v667 = vmax.f32 %v660, 0.0
    %v668 = vpack.c.bf16 %v664, %v664
    %v669 = vpack.c.bf16 %v665, %v665
    %v670 = vpack.c.bf16 %v666, %v666
    %v671 = vpack.c.bf16 %v667, %v667
    %v672 = vld [vmem:[#allocation4] sm:$0xff]
    %v673 = vld [vmem:[#allocation4 + $0x8] sm:$0xf]
    %v674 = vld [vmem:[#allocation4 + $0xc] sm:$0xff]
    %v675 = vld [vmem:[#allocation4 + $0x14] sm:$0xf]
    %v676 = vld [vmem:[#allocation4 + $0x18] sm:$0xff]
    %v677 = vld [vmem:[#allocation4 + $0x20] sm:$0xf]
    %v678 = vld [vmem:[#allocation4 + $0x24] sm:$0xff]
    %v679 = vld [vmem:[#allocation4 + $0x2c] sm:$0xf]
    %v680 = vld [vmem:[#allocation4 + $0x30] sm:$0xff]
    %v681 = vld [vmem:[#allocation4 + $0x38] sm:$0xf]
    %v682 = vld [vmem:[#allocation4 + $0x3c] sm:$0xff]
    %v683 = vld [vmem:[#allocation4 + $0x44] sm:$0xf]
    %v684 = vld [vmem:[#allocation4 + $0x48] sm:$0xff]
    %v685 = vld [vmem:[#allocation4 + $0x50] sm:$0xf]
    %v686 = vld [vmem:[#allocation4 + $0x54] sm:$0xff]
    %v687 = vld [vmem:[#allocation4 + $0x5c] sm:$0xf]
    %v688 = vld [vmem:[#allocation4 + $0x60] sm:$0xff]
    %v689 = vld [vmem:[#allocation4 + $0x68] sm:$0xf]
    %v690 = vld [vmem:[#allocation4 + $0x6c] sm:$0xff]
    %v691 = vld [vmem:[#allocation4 + $0x74] sm:$0xf]
    %v692 = vld [vmem:[#allocation4 + $0x78] sm:$0xff]
    %v693 = vld [vmem:[#allocation4 + $0x80] sm:$0xf]
    %v694 = vld [vmem:[#allocation4 + $0x84] sm:$0xff]
    %v695 = vld [vmem:[#allocation4 + $0x8c] sm:$0xf]
    %v696 = vld [vmem:[#allocation4 + $0x90] sm:$0xff]
    %v697 = vld [vmem:[#allocation4 + $0x98] sm:$0xf]
    %v698 = vld [vmem:[#allocation4 + $0x9c] sm:$0xff]
    %v699 = vld [vmem:[#allocation4 + $0xa4] sm:$0xf]
    %v700 = vld [vmem:[#allocation4 + $0xa8] sm:$0xff]
    %v701 = vld [vmem:[#allocation4 + $0xb0] sm:$0xf]
    %v702 = vld [vmem:[#allocation4 + $0xb4] sm:$0xff]
    %v703 = vld [vmem:[#allocation4 + $0xbc] sm:$0xf]
    %v704 = vld [vmem:[#allocation4 + $0xc0] sm:$0xff]
    %v705 = vld [vmem:[#allocation4 + $0xc8] sm:$0xf]
    %v706 = vld [vmem:[#allocation4 + $0xcc] sm:$0xff]
    %v707 = vld [vmem:[#allocation4 + $0xd4] sm:$0xf]
    %v708 = vld [vmem:[#allocation4 + $0xd8] sm:$0xff]
    %v709 = vld [vmem:[#allocation4 + $0xe0] sm:$0xf]
    %v710 = vld [vmem:[#allocation4 + $0xe4] sm:$0xff]
    %v711 = vld [vmem:[#allocation4 + $0xec] sm:$0xf]
    %v712 = vld [vmem:[#allocation4 + $0xf0] sm:$0xff]
    %v713 = vld [vmem:[#allocation4 + $0xf8] sm:$0xf]
    %v714 = vld [vmem:[#allocation4 + $0xfc] sm:$0xff]
    %v715 = vld [vmem:[#allocation4 + $0x104] sm:$0xf]
    %v716 = vld [vmem:[#allocation4 + $0x108] sm:$0xff]
    %v717 = vld [vmem:[#allocation4 + $0x110] sm:$0xf]
    %v718 = vld [vmem:[#allocation4 + $0x114] sm:$0xff]
    %v719 = vld [vmem:[#allocation4 + $0x11c] sm:$0xf]
    %v720 = vld [vmem:[#allocation4 + $0x120] sm:$0xff]
    %v721 = vld [vmem:[#allocation4 + $0x128] sm:$0xf]
    %v722 = vld [vmem:[#allocation4 + $0x12c] sm:$0xff]
    %v723 = vld [vmem:[#allocation4 + $0x134] sm:$0xf]
    %v724 = vld [vmem:[#allocation4 + $0x138] sm:$0xff]
    %v725 = vld [vmem:[#allocation4 + $0x140] sm:$0xf]
    %v726 = vld [vmem:[#allocation4 + $0x144] sm:$0xff]
    %v727 = vld [vmem:[#allocation4 + $0x14c] sm:$0xf]
    %v728 = vld [vmem:[#allocation4 + $0x150] sm:$0xff]
    %v729 = vld [vmem:[#allocation4 + $0x158] sm:$0xf]
    %v730 = vld [vmem:[#allocation4 + $0x15c] sm:$0xff]
    %v731 = vld [vmem:[#allocation4 + $0x164] sm:$0xf]
    %v732 = vld [vmem:[#allocation4 + $0x168] sm:$0xff]
    %v733 = vld [vmem:[#allocation4 + $0x170] sm:$0xf]
    %v734 = vld [vmem:[#allocation4 + $0x174] sm:$0xff]
    %v735 = vld [vmem:[#allocation4 + $0x17c] sm:$0xf]
    %v736 = vld [vmem:[#allocation4 + $0x180] sm:$0xff]
    %v737 = vld [vmem:[#allocation4 + $0x188] sm:$0xf]
    %v738 = vld [vmem:[#allocation4 + $0x18c] sm:$0xff]
    %v739 = vld [vmem:[#allocation4 + $0x194] sm:$0xf]
    %v740 = vld [vmem:[#allocation4 + $0x198] sm:$0xff]
    %v741 = vld [vmem:[#allocation4 + $0x1a0] sm:$0xf]
    %v742 = vld [vmem:[#allocation4 + $0x1a4] sm:$0xff]
    %v743 = vld [vmem:[#allocation4 + $0x1ac] sm:$0xf]
    %v744 = vld [vmem:[#allocation4 + $0x1b0] sm:$0xff]
    %v745 = vld [vmem:[#allocation4 + $0x1b8] sm:$0xf]
    %v746 = vld [vmem:[#allocation4 + $0x1bc] sm:$0xff]
    %v747 = vld [vmem:[#allocation4 + $0x1c4] sm:$0xf]
    %v748 = vld [vmem:[#allocation4 + $0x1c8] sm:$0xff]
    %v749 = vld [vmem:[#allocation4 + $0x1d0] sm:$0xf]
    %v750 = vld [vmem:[#allocation4 + $0x1d4] sm:$0xff]
    %v751 = vld [vmem:[#allocation4 + $0x1dc] sm:$0xf]
    %v752 = vld [vmem:[#allocation4 + $0x1e0] sm:$0xff]
    %v753 = vld [vmem:[#allocation4 + $0x1e8] sm:$0xf]
    %v754 = vld [vmem:[#allocation4 + $0x1ec] sm:$0xff]
    %v755 = vld [vmem:[#allocation4 + $0x1f4] sm:$0xf]
    %v756 = vld [vmem:[#allocation4 + $0x1f8] sm:$0xff]
    %v757 = vld [vmem:[#allocation4 + $0x200] sm:$0xf]
    %v758 = vld [vmem:[#allocation4 + $0x204] sm:$0xff]
    %v759 = vld [vmem:[#allocation4 + $0x20c] sm:$0xf]
    %v760 = vld [vmem:[#allocation4 + $0x210] sm:$0xff]
    %v761 = vld [vmem:[#allocation4 + $0x218] sm:$0xf]
    %v762 = vld [vmem:[#allocation4 + $0x21c] sm:$0xff]
    %v763 = vld [vmem:[#allocation4 + $0x224] sm:$0xf]
    %v764 = vld [vmem:[#allocation4 + $0x228] sm:$0xff]
    %v765 = vld [vmem:[#allocation4 + $0x230] sm:$0xf]
    %v766 = vld [vmem:[#allocation4 + $0x234] sm:$0xff]
    %v767 = vld [vmem:[#allocation4 + $0x23c] sm:$0xf]
    %v768 = vld [vmem:[#allocation4 + $0x240] sm:$0xff]
    %v769 = vld [vmem:[#allocation4 + $0x248] sm:$0xf]
    %v770 = vld [vmem:[#allocation4 + $0x24c] sm:$0xff]
    %v771 = vld [vmem:[#allocation4 + $0x254] sm:$0xf]
    %v772 = vld [vmem:[#allocation4 + $0x258] sm:$0xff]
    %v773 = vld [vmem:[#allocation4 + $0x260] sm:$0xf]
    %v774 = vld [vmem:[#allocation4 + $0x264] sm:$0xff]
    %v775 = vld [vmem:[#allocation4 + $0x26c] sm:$0xf]
    %v776 = vld [vmem:[#allocation4 + $0x270] sm:$0xff]
    %v777 = vld [vmem:[#allocation4 + $0x278] sm:$0xf]
    %v778 = vld [vmem:[#allocation4 + $0x27c] sm:$0xff]
    %v779 = vld [vmem:[#allocation4 + $0x284] sm:$0xf]
    %v780 = vld [vmem:[#allocation4 + $0x288] sm:$0xff]
    %v781 = vld [vmem:[#allocation4 + $0x290] sm:$0xf]
    %v782 = vld [vmem:[#allocation4 + $0x294] sm:$0xff]
    %v783 = vld [vmem:[#allocation4 + $0x29c] sm:$0xf]
    %v784 = vld [vmem:[#allocation4 + $0x2a0] sm:$0xff]
    %v785 = vld [vmem:[#allocation4 + $0x2a8] sm:$0xf]
    %v786 = vld [vmem:[#allocation4 + $0x2ac] sm:$0xff]
    %v787 = vld [vmem:[#allocation4 + $0x2b4] sm:$0xf]
    %v788 = vld [vmem:[#allocation4 + $0x2b8] sm:$0xff]
    %v789 = vld [vmem:[#allocation4 + $0x2c0] sm:$0xf]
    %v790 = vld [vmem:[#allocation4 + $0x2c4] sm:$0xff]
    %v791 = vld [vmem:[#allocation4 + $0x2cc] sm:$0xf]
    %v792 = vld [vmem:[#allocation4 + $0x2d0] sm:$0xff]
    %v793 = vld [vmem:[#allocation4 + $0x2d8] sm:$0xf]
    %v794 = vld [vmem:[#allocation4 + $0x2dc] sm:$0xff]
    %v795 = vld [vmem:[#allocation4 + $0x2e4] sm:$0xf]
    %v796 = vld [vmem:[#allocation4 + $0x2e8] sm:$0xff]
    %v797 = vld [vmem:[#allocation4 + $0x2f0] sm:$0xf]
    %v798 = vld [vmem:[#allocation4 + $0x2f4] sm:$0xff]
    %v799 = vld [vmem:[#allocation4 + $0x2fc] sm:$0xf]
    %v800 = vld [vmem:[%s5] sm:$0x7]
    %v802 = vlaneseq
    %v803 = vshrl.u32 %v802, 7
    %v804 = vsub.s32 0, %v803
    %v805 = vrot.slane %v800, %v804
    %v806 = vlaneseq
    %v807 = vshrl.u32 %v806, 7
    %v808 = vsub.s32 1, %v807
    %v809 = vrot.slane %v800, %v808
    %v810 = vlaneseq
    %v811 = vshrl.u32 %v810, 7
    %v812 = vsub.s32 2, %v811
    %v813 = vrot.slane %v800, %v812
    %v945 = vunpack.c.l.b16 %v672
    %v946 = vunpack.c.h.b16 %v672
    %v947 = vunpack.c.l.b16 %v673
    %v948 = vunpack.c.l.b16 %v674
    %v949 = vunpack.c.h.b16 %v674
    %v950 = vunpack.c.l.b16 %v675
    %v951 = vunpack.c.l.b16 %v676
    %v952 = vunpack.c.h.b16 %v676
    %v953 = vunpack.c.l.b16 %v677
    %v954 = vunpack.c.l.b16 %v678
    %v955 = vunpack.c.h.b16 %v678
    %v956 = vunpack.c.l.b16 %v679
    %v957 = vunpack.c.l.b16 %v680
    %v958 = vunpack.c.h.b16 %v680
    %v959 = vunpack.c.l.b16 %v681
    %v960 = vunpack.c.l.b16 %v682
    %v961 = vunpack.c.h.b16 %v682
    %v962 = vunpack.c.l.b16 %v683
    %v963 = vunpack.c.l.b16 %v684
    %v964 = vunpack.c.h.b16 %v684
    %v965 = vunpack.c.l.b16 %v685
    %v966 = vunpack.c.l.b16 %v686
    %v967 = vunpack.c.h.b16 %v686
    %v968 = vunpack.c.l.b16 %v687
    %v969 = vunpack.c.l.b16 %v688
    %v970 = vunpack.c.h.b16 %v688
    %v971 = vunpack.c.l.b16 %v689
    %v972 = vunpack.c.l.b16 %v690
    %v973 = vunpack.c.h.b16 %v690
    %v974 = vunpack.c.l.b16 %v691
    %v975 = vunpack.c.l.b16 %v692
    %v976 = vunpack.c.h.b16 %v692
    %v977 = vunpack.c.l.b16 %v693
    %v978 = vunpack.c.l.b16 %v694
    %v979 = vunpack.c.h.b16 %v694
    %v980 = vunpack.c.l.b16 %v695
    %v981 = vunpack.c.l.b16 %v696
    %v982 = vunpack.c.h.b16 %v696
    %v983 = vunpack.c.l.b16 %v697
    %v984 = vunpack.c.l.b16 %v698
    %v985 = vunpack.c.h.b16 %v698
    %v986 = vunpack.c.l.b16 %v699
    %v987 = vunpack.c.l.b16 %v700
    %v988 = vunpack.c.h.b16 %v700
    %v989 = vunpack.c.l.b16 %v701
    %v990 = vunpack.c.l.b16 %v702
    %v991 = vunpack.c.h.b16 %v702
    %v992 = vunpack.c.l.b16 %v703
    %v993 = vunpack.c.l.b16 %v704
    %v994 = vunpack.c.h.b16 %v704
    %v995 = vunpack.c.l.b16 %v705
    %v996 = vunpack.c.l.b16 %v706
    %v997 = vunpack.c.h.b16 %v706
    %v998 = vunpack.c.l.b16 %v707
    %v999 = vunpack.c.l.b16 %v708
    %v1000 = vunpack.c.h.b16 %v708
    %v1001 = vunpack.c.l.b16 %v709
    %v1002 = vunpack.c.l.b16 %v710
    %v1003 = vunpack.c.h.b16 %v710
    %v1004 = vunpack.c.l.b16 %v711
    %v1005 = vunpack.c.l.b16 %v712
    %v1006 = vunpack.c.h.b16 %v712
    %v1007 = vunpack.c.l.b16 %v713
    %v1008 = vunpack.c.l.b16 %v714
    %v1009 = vunpack.c.h.b16 %v714
    %v1010 = vunpack.c.l.b16 %v715
    %v1011 = vunpack.c.l.b16 %v716
    %v1012 = vunpack.c.h.b16 %v716
    %v1013 = vunpack.c.l.b16 %v717
    %v1014 = vunpack.c.l.b16 %v718
    %v1015 = vunpack.c.h.b16 %v718
    %v1016 = vunpack.c.l.b16 %v719
    %v1017 = vunpack.c.l.b16 %v720
    %v1018 = vunpack.c.h.b16 %v720
    %v1019 = vunpack.c.l.b16 %v721
    %v1020 = vunpack.c.l.b16 %v722
    %v1021 = vunpack.c.h.b16 %v722
    %v1022 = vunpack.c.l.b16 %v723
    %v1023 = vunpack.c.l.b16 %v724
    %v1024 = vunpack.c.h.b16 %v724
    %v1025 = vunpack.c.l.b16 %v725
    %v1026 = vunpack.c.l.b16 %v726
    %v1027 = vunpack.c.h.b16 %v726
    %v1028 = vunpack.c.l.b16 %v727
    %v1029 = vunpack.c.l.b16 %v728
    %v1030 = vunpack.c.h.b16 %v728
    %v1031 = vunpack.c.l.b16 %v729
    %v1032 = vunpack.c.l.b16 %v730
    %v1033 = vunpack.c.h.b16 %v730
    %v1034 = vunpack.c.l.b16 %v731
    %v1035 = vunpack.c.l.b16 %v732
    %v1036 = vunpack.c.h.b16 %v732
    %v1037 = vunpack.c.l.b16 %v733
    %v1038 = vunpack.c.l.b16 %v734
    %v1039 = vunpack.c.h.b16 %v734
    %v1040 = vunpack.c.l.b16 %v735
    %v1041 = vunpack.c.l.b16 %v736
    %v1042 = vunpack.c.h.b16 %v736
    %v1043 = vunpack.c.l.b16 %v737
    %v1044 = vunpack.c.l.b16 %v738
    %v1045 = vunpack.c.h.b16 %v738
    %v1046 = vunpack.c.l.b16 %v739
    %v1047 = vunpack.c.l.b16 %v740
    %v1048 = vunpack.c.h.b16 %v740
    %v1049 = vunpack.c.l.b16 %v741
    %v1050 = vunpack.c.l.b16 %v742
    %v1051 = vunpack.c.h.b16 %v742
    %v1052 = vunpack.c.l.b16 %v743
    %v1053 = vunpack.c.l.b16 %v744
    %v1054 = vunpack.c.h.b16 %v744
    %v1055 = vunpack.c.l.b16 %v745
    %v1056 = vunpack.c.l.b16 %v746
    %v1057 = vunpack.c.h.b16 %v746
    %v1058 = vunpack.c.l.b16 %v747
    %v1059 = vunpack.c.l.b16 %v748
    %v1060 = vunpack.c.h.b16 %v748
    %v1061 = vunpack.c.l.b16 %v749
    %v1062 = vunpack.c.l.b16 %v750
    %v1063 = vunpack.c.h.b16 %v750
    %v1064 = vunpack.c.l.b16 %v751
    %v1065 = vunpack.c.l.b16 %v752
    %v1066 = vunpack.c.h.b16 %v752
    %v1067 = vunpack.c.l.b16 %v753
    %v1068 = vunpack.c.l.b16 %v754
    %v1069 = vunpack.c.h.b16 %v754
    %v1070 = vunpack.c.l.b16 %v755
    %v1071 = vunpack.c.l.b16 %v756
    %v1072 = vunpack.c.h.b16 %v756
    %v1073 = vunpack.c.l.b16 %v757
    %v1074 = vunpack.c.l.b16 %v758
    %v1075 = vunpack.c.h.b16 %v758
    %v1076 = vunpack.c.l.b16 %v759
    %v1077 = vunpack.c.l.b16 %v760
    %v1078 = vunpack.c.h.b16 %v760
    %v1079 = vunpack.c.l.b16 %v761
    %v1080 = vunpack.c.l.b16 %v762
    %v1081 = vunpack.c.h.b16 %v762
    %v1082 = vunpack.c.l.b16 %v763
    %v1083 = vunpack.c.l.b16 %v764
    %v1084 = vunpack.c.h.b16 %v764
    %v1085 = vunpack.c.l.b16 %v765
    %v1086 = vunpack.c.l.b16 %v766
    %v1087 = vunpack.c.h.b16 %v766
    %v1088 = vunpack.c.l.b16 %v767
    %v1089 = vunpack.c.l.b16 %v768
    %v1090 = vunpack.c.h.b16 %v768
    %v1091 = vunpack.c.l.b16 %v769
    %v1092 = vunpack.c.l.b16 %v770
    %v1093 = vunpack.c.h.b16 %v770
    %v1094 = vunpack.c.l.b16 %v771
    %v1095 = vunpack.c.l.b16 %v772
    %v1096 = vunpack.c.h.b16 %v772
    %v1097 = vunpack.c.l.b16 %v773
    %v1098 = vunpack.c.l.b16 %v774
    %v1099 = vunpack.c.h.b16 %v774
    %v1100 = vunpack.c.l.b16 %v775
    %v1101 = vunpack.c.l.b16 %v776
    %v1102 = vunpack.c.h.b16 %v776
    %v1103 = vunpack.c.l.b16 %v777
    %v1104 = vunpack.c.l.b16 %v778
    %v1105 = vunpack.c.h.b16 %v778
    %v1106 = vunpack.c.l.b16 %v779
    %v1107 = vunpack.c.l.b16 %v780
    %v1108 = vunpack.c.h.b16 %v780
    %v1109 = vunpack.c.l.b16 %v781
    %v1110 = vunpack.c.l.b16 %v782
    %v1111 = vunpack.c.h.b16 %v782
    %v1112 = vunpack.c.l.b16 %v783
    %v1113 = vunpack.c.l.b16 %v784
    %v1114 = vunpack.c.h.b16 %v784
    %v1115 = vunpack.c.l.b16 %v785
    %v1116 = vunpack.c.l.b16 %v786
    %v1117 = vunpack.c.h.b16 %v786
    %v1118 = vunpack.c.l.b16 %v787
    %v1119 = vunpack.c.l.b16 %v788
    %v1120 = vunpack.c.h.b16 %v788
    %v1121 = vunpack.c.l.b16 %v789
    %v1122 = vunpack.c.l.b16 %v790
    %v1123 = vunpack.c.h.b16 %v790
    %v1124 = vunpack.c.l.b16 %v791
    %v1125 = vunpack.c.l.b16 %v792
    %v1126 = vunpack.c.h.b16 %v792
    %v1127 = vunpack.c.l.b16 %v793
    %v1128 = vunpack.c.l.b16 %v794
    %v1129 = vunpack.c.h.b16 %v794
    %v1130 = vunpack.c.l.b16 %v795
    %v1131 = vunpack.c.l.b16 %v796
    %v1132 = vunpack.c.h.b16 %v796
    %v1133 = vunpack.c.l.b16 %v797
    %v1134 = vunpack.c.l.b16 %v798
    %v1135 = vunpack.c.h.b16 %v798
    %v1136 = vunpack.c.l.b16 %v799
    %v1137 = vpack.c.b16 %v948, %v945
    %v1138 = vpack.c.b16 %v949, %v946
    %v1139 = vpack.c.b16 %v950, %v947
    %v1140 = vpack.c.b16 %v954, %v951
    %v1141 = vpack.c.b16 %v955, %v952
    %v1142 = vpack.c.b16 %v956, %v953
    %v1143 = vpack.c.b16 %v960, %v957
    %v1144 = vpack.c.b16 %v961, %v958
    %v1145 = vpack.c.b16 %v962, %v959
    %v1146 = vpack.c.b16 %v966, %v963
    %v1147 = vpack.c.b16 %v967, %v964
    %v1148 = vpack.c.b16 %v968, %v965
    %v1149 = vpack.c.b16 %v972, %v969
    %v1150 = vpack.c.b16 %v973, %v970
    %v1151 = vpack.c.b16 %v974, %v971
    %v1152 = vpack.c.b16 %v978, %v975
    %v1153 = vpack.c.b16 %v979, %v976
    %v1154 = vpack.c.b16 %v980, %v977
    %v1155 = vpack.c.b16 %v984, %v981
    %v1156 = vpack.c.b16 %v985, %v982
    %v1157 = vpack.c.b16 %v986, %v983
    %v1158 = vpack.c.b16 %v990, %v987
    %v1159 = vpack.c.b16 %v991, %v988
    %v1160 = vpack.c.b16 %v992, %v989
    %v1161 = vpack.c.b16 %v996, %v993
    %v1162 = vpack.c.b16 %v997, %v994
    %v1163 = vpack.c.b16 %v998, %v995
    %v1164 = vpack.c.b16 %v1002, %v999
    %v1165 = vpack.c.b16 %v1003, %v1000
    %v1166 = vpack.c.b16 %v1004, %v1001
    %v1167 = vpack.c.b16 %v1008, %v1005
    %v1168 = vpack.c.b16 %v1009, %v1006
    %v1169 = vpack.c.b16 %v1010, %v1007
    %v1170 = vpack.c.b16 %v1014, %v1011
    %v1171 = vpack.c.b16 %v1015, %v1012
    %v1172 = vpack.c.b16 %v1016, %v1013
    %v1173 = vpack.c.b16 %v1020, %v1017
    %v1174 = vpack.c.b16 %v1021, %v1018
    %v1175 = vpack.c.b16 %v1022, %v1019
    %v1176 = vpack.c.b16 %v1026, %v1023
    %v1177 = vpack.c.b16 %v1027, %v1024
    %v1178 = vpack.c.b16 %v1028, %v1025
    %v1179 = vpack.c.b16 %v1032, %v1029
    %v1180 = vpack.c.b16 %v1033, %v1030
    %v1181 = vpack.c.b16 %v1034, %v1031
    %v1182 = vpack.c.b16 %v1038, %v1035
    %v1183 = vpack.c.b16 %v1039, %v1036
    %v1184 = vpack.c.b16 %v1040, %v1037
    %v1185 = vpack.c.b16 %v1044, %v1041
    %v1186 = vpack.c.b16 %v1045, %v1042
    %v1187 = vpack.c.b16 %v1046, %v1043
    %v1188 = vpack.c.b16 %v1050, %v1047
    %v1189 = vpack.c.b16 %v1051, %v1048
    %v1190 = vpack.c.b16 %v1052, %v1049
    %v1191 = vpack.c.b16 %v1056, %v1053
    %v1192 = vpack.c.b16 %v1057, %v1054
    %v1193 = vpack.c.b16 %v1058, %v1055
    %v1194 = vpack.c.b16 %v1062, %v1059
    %v1195 = vpack.c.b16 %v1063, %v1060
    %v1196 = vpack.c.b16 %v1064, %v1061
    %v1197 = vpack.c.b16 %v1068, %v1065
    %v1198 = vpack.c.b16 %v1069, %v1066
    %v1199 = vpack.c.b16 %v1070, %v1067
    %v1200 = vpack.c.b16 %v1074, %v1071
    %v1201 = vpack.c.b16 %v1075, %v1072
    %v1202 = vpack.c.b16 %v1076, %v1073
    %v1203 = vpack.c.b16 %v1080, %v1077
    %v1204 = vpack.c.b16 %v1081, %v1078
    %v1205 = vpack.c.b16 %v1082, %v1079
    %v1206 = vpack.c.b16 %v1086, %v1083
    %v1207 = vpack.c.b16 %v1087, %v1084
    %v1208 = vpack.c.b16 %v1088, %v1085
    %v1209 = vpack.c.b16 %v1092, %v1089
    %v1210 = vpack.c.b16 %v1093, %v1090
    %v1211 = vpack.c.b16 %v1094, %v1091
    %v1212 = vpack.c.b16 %v1098, %v1095
    %v1213 = vpack.c.b16 %v1099, %v1096
    %v1214 = vpack.c.b16 %v1100, %v1097
    %v1215 = vpack.c.b16 %v1104, %v1101
    %v1216 = vpack.c.b16 %v1105, %v1102
    %v1217 = vpack.c.b16 %v1106, %v1103
    %v1218 = vpack.c.b16 %v1110, %v1107
    %v1219 = vpack.c.b16 %v1111, %v1108
    %v1220 = vpack.c.b16 %v1112, %v1109
    %v1221 = vpack.c.b16 %v1116, %v1113
    %v1222 = vpack.c.b16 %v1117, %v1114
    %v1223 = vpack.c.b16 %v1118, %v1115
    %v1224 = vpack.c.b16 %v1122, %v1119
    %v1225 = vpack.c.b16 %v1123, %v1120
    %v1226 = vpack.c.b16 %v1124, %v1121
    %v1227 = vpack.c.b16 %v1128, %v1125
    %v1228 = vpack.c.b16 %v1129, %v1126
    %v1229 = vpack.c.b16 %v1130, %v1127
    %v1230 = vpack.c.b16 %v1134, %v1131
    %v1231 = vpack.c.b16 %v1135, %v1132
    %v1232 = vpack.c.b16 %v1136, %v1133
    %1329 = vmatprep.subr.bf16.mxu0 %v1159
    %1330 = vmatpush1.bf16.msra.mxu0 %v1158
    %1331 = vmatprep.subr.bf16.mxu0 %v1156
    %1332 = vmatpush1.bf16.msra.mxu0 %v1155
    %1333 = vmatprep.subr.bf16.mxu0 %v1153
    %1334 = vmatpush1.bf16.msra.mxu0 %v1152
    %1335 = vmatprep.subr.bf16.mxu0 %v1150
    %1336 = vmatpush1.bf16.msra.mxu0 %v1149
    %1337 = vmatprep.subr.bf16.mxu0 %v1147
    %1338 = vmatpush1.bf16.msra.mxu0 %v1146
    %1339 = vmatprep.subr.bf16.mxu0 %v1144
    %1340 = vmatpush1.bf16.msra.mxu0 %v1143
    %1341 = vmatprep.subr.bf16.mxu0 %v1141
    %1342 = vmatpush1.bf16.msra.mxu0 %v1140
    %1343 = vmatprep.subr.bf16.mxu0 %v1138
    %1344 = vmatpush1.bf16.msra.mxu0 %v1137
    %1345 = vmatprep.subr.bf16.mxu0 %v1183
    %1346 = vmatpush2.bf16.msra.mxu0 %v1182
    %1347 = vmatprep.subr.bf16.mxu0 %v1180
    %1348 = vmatpush2.bf16.msra.mxu0 %v1179
    %1349 = vmatprep.subr.bf16.mxu0 %v1177
    %1350 = vmatpush2.bf16.msra.mxu0 %v1176
    %1351 = vmatprep.subr.bf16.mxu0 %v1174
    %1352 = vmatpush2.bf16.msra.mxu0 %v1173
    %1353 = vmatprep.subr.bf16.mxu0 %v1171
    %1354 = vmatpush2.bf16.msra.mxu0 %v1170
    %1355 = vmatprep.subr.bf16.mxu0 %v1168
    %1356 = vmatpush2.bf16.msra.mxu0 %v1167
    %1357 = vmatprep.subr.bf16.mxu0 %v1165
    %1358 = vmatpush2.bf16.msra.mxu0 %v1164
    %1359 = vmatprep.subr.bf16.mxu0 %v1162
    %1360 = vmatpush2.bf16.msra.mxu0 %v1161
    %1361 = vmatprep.mubr.bf16.mxu0 %v669
    %1362 = vmatmul.mubr.bf16.gmra.mxu0 %v668
    %v1363 = vpop.f32.mrf.mxu0
    %v1364 = vadd.f32 %v805, %v1363
    %v1365 = vpop.f32.mrf.mxu0
    %v1366 = vadd.f32 %v809, %v1365
    %v1367 = vpop.f32.mrf.mxu0
    %v1368 = vpop.f32.mrf.mxu0
    %1369 = vdwg.mxu0
    %1370 = vmatprep.subr.bf16.mxu0 %v1207
    %1371 = vmatpush1.bf16.msra.mxu0 %v1206
    %1372 = vmatprep.subr.bf16.mxu0 %v1204
    %1373 = vmatpush1.bf16.msra.mxu0 %v1203
    %1374 = vmatprep.subr.bf16.mxu0 %v1201
    %1375 = vmatpush1.bf16.msra.mxu0 %v1200
    %1376 = vmatprep.subr.bf16.mxu0 %v1198
    %1377 = vmatpush1.bf16.msra.mxu0 %v1197
    %1378 = vmatprep.subr.bf16.mxu0 %v1195
    %1379 = vmatpush1.bf16.msra.mxu0 %v1194
    %1380 = vmatprep.subr.bf16.mxu0 %v1192
    %1381 = vmatpush1.bf16.msra.mxu0 %v1191
    %1382 = vmatprep.subr.bf16.mxu0 %v1189
    %1383 = vmatpush1.bf16.msra.mxu0 %v1188
    %1384 = vmatprep.subr.bf16.mxu0 %v1186
    %1385 = vmatpush1.bf16.msra.mxu0 %v1185
    %1386 = vmatprep.subr.bf16.mxu0 %v1231
    %1387 = vmatpush2.bf16.msra.mxu0 %v1230
    %1388 = vmatprep.subr.bf16.mxu0 %v1228
    %1389 = vmatpush2.bf16.msra.mxu0 %v1227
    %1390 = vmatprep.subr.bf16.mxu0 %v1225
    %1391 = vmatpush2.bf16.msra.mxu0 %v1224
    %1392 = vmatprep.subr.bf16.mxu0 %v1222
    %1393 = vmatpush2.bf16.msra.mxu0 %v1221
    %1394 = vmatprep.subr.bf16.mxu0 %v1219
    %1395 = vmatpush2.bf16.msra.mxu0 %v1218
    %1396 = vmatprep.subr.bf16.mxu0 %v1216
    %1397 = vmatpush2.bf16.msra.mxu0 %v1215
    %1398 = vmatprep.subr.bf16.mxu0 %v1213
    %1399 = vmatpush2.bf16.msra.mxu0 %v1212
    %1400 = vmatprep.subr.bf16.mxu0 %v1210
    %1401 = vmatpush2.bf16.msra.mxu0 %v1209
    %1402 = vmatprep.mubr.bf16.mxu0 %v671
    %1403 = vmatmul.mubr.bf16.gmra.mxu0 %v670
    %v1404 = vpop.f32.mrf.mxu0
    %v1405 = vadd.f32 %v1364, %v1404
    %v1406 = vpop.f32.mrf.mxu0
    %v1407 = vadd.f32 %v1366, %v1406
    %v1408 = vpop.f32.mrf.mxu0
    %v1409 = vpop.f32.mrf.mxu0
    %1410 = vdwg.mxu0
    %1411 = vmatprep.subr.bf16.mxu0 0
    %1412 = vmatpush1.bf16.msra.mxu0 %v1160
    %1413 = vmatprep.subr.bf16.mxu0 0
    %1414 = vmatpush1.bf16.msra.mxu0 %v1157
    %1415 = vmatprep.subr.bf16.mxu0 0
    %1416 = vmatpush1.bf16.msra.mxu0 %v1154
    %1417 = vmatprep.subr.bf16.mxu0 0
    %1418 = vmatpush1.bf16.msra.mxu0 %v1151
    %1419 = vmatprep.subr.bf16.mxu0 0
    %1420 = vmatpush1.bf16.msra.mxu0 %v1148
    %1421 = vmatprep.subr.bf16.mxu0 0
    %1422 = vmatpush1.bf16.msra.mxu0 %v1145
    %1423 = vmatprep.subr.bf16.mxu0 0
    %1424 = vmatpush1.bf16.msra.mxu0 %v1142
    %1425 = vmatprep.subr.bf16.mxu0 0
    %1426 = vmatpush1.bf16.msra.mxu0 %v1139
    %1427 = vmatprep.subr.bf16.mxu0 0
    %1428 = vmatpush2.bf16.msra.mxu0 %v1184
    %1429 = vmatprep.subr.bf16.mxu0 0
    %1430 = vmatpush2.bf16.msra.mxu0 %v1181
    %1431 = vmatprep.subr.bf16.mxu0 0
    %1432 = vmatpush2.bf16.msra.mxu0 %v1178
    %1433 = vmatprep.subr.bf16.mxu0 0
    %1434 = vmatpush2.bf16.msra.mxu0 %v1175
    %1435 = vmatprep.subr.bf16.mxu0 0
    %1436 = vmatpush2.bf16.msra.mxu0 %v1172
    %1437 = vmatprep.subr.bf16.mxu0 0
    %1438 = vmatpush2.bf16.msra.mxu0 %v1169
    %1439 = vmatprep.subr.bf16.mxu0 0
    %1440 = vmatpush2.bf16.msra.mxu0 %v1166
    %1441 = vmatprep.subr.bf16.mxu0 0
    %1442 = vmatpush2.bf16.msra.mxu0 %v1163
    %1443 = vmatprep.mubr.bf16.mxu0 %v669
    %1444 = vmatmul.mubr.bf16.gmra.mxu0 %v668
    %v1445 = vpop.f32.mrf.mxu0
    %v1446 = vadd.f32 %v813, %v1445
    %v1447 = vpop.f32.mrf.mxu0
    %v1448 = vpop.f32.mrf.mxu0
    %v1449 = vpop.f32.mrf.mxu0
    %1450 = vdwg.mxu0
    %1451 = vmatprep.subr.bf16.mxu0 0
    %1452 = vmatpush1.bf16.msra.mxu0 %v1208
    %1453 = vmatprep.subr.bf16.mxu0 0
    %1454 = vmatpush1.bf16.msra.mxu0 %v1205
    %1455 = vmatprep.subr.bf16.mxu0 0
    %1456 = vmatpush1.bf16.msra.mxu0 %v1202
    %1457 = vmatprep.subr.bf16.mxu0 0
    %1458 = vmatpush1.bf16.msra.mxu0 %v1199
    %1459 = vmatprep.subr.bf16.mxu0 0
    %1460 = vmatpush1.bf16.msra.mxu0 %v1196
    %1461 = vmatprep.subr.bf16.mxu0 0
    %1462 = vmatpush1.bf16.msra.mxu0 %v1193
    %1463 = vmatprep.subr.bf16.mxu0 0
    %1464 = vmatpush1.bf16.msra.mxu0 %v1190
    %1465 = vmatprep.subr.bf16.mxu0 0
    %1466 = vmatpush1.bf16.msra.mxu0 %v1187
    %1467 = vmatprep.subr.bf16.mxu0 0
    %1468 = vmatpush2.bf16.msra.mxu0 %v1232
    %1469 = vmatprep.subr.bf16.mxu0 0
    %1470 = vmatpush2.bf16.msra.mxu0 %v1229
    %1471 = vmatprep.subr.bf16.mxu0 0
    %1472 = vmatpush2.bf16.msra.mxu0 %v1226
    %1473 = vmatprep.subr.bf16.mxu0 0
    %1474 = vmatpush2.bf16.msra.mxu0 %v1223
    %1475 = vmatprep.subr.bf16.mxu0 0
    %1476 = vmatpush2.bf16.msra.mxu0 %v1220
    %1477 = vmatprep.subr.bf16.mxu0 0
    %1478 = vmatpush2.bf16.msra.mxu0 %v1217
    %1479 = vmatprep.subr.bf16.mxu0 0
    %1480 = vmatpush2.bf16.msra.mxu0 %v1214
    %1481 = vmatprep.subr.bf16.mxu0 0
    %1482 = vmatpush2.bf16.msra.mxu0 %v1211
    %1483 = vmatprep.mubr.bf16.mxu0 %v671
    %1484 = vmatmul.mubr.bf16.gmra.mxu0 %v670
    %v1485 = vpop.f32.mrf.mxu0
    %v1486 = vadd.f32 %v1446, %v1485
    %v1487 = vpop.f32.mrf.mxu0
    %v1488 = vpop.f32.mrf.mxu0
    %v1489 = vpop.f32.mrf.mxu0
    %1490 = vdwg.mxu0
    %v1491 = vmax.f32 %v1405, 0.0
    %v1492 = vmax.f32 %v1407, 0.0
    %v1493 = vmax.f32 %v1486, 0.0
    %v1494 = vpack.c.bf16 %v1491, %v1491
    %v1495 = vpack.c.bf16 %v1492, %v1492
    %v1496 = vpack.c.bf16 %v1493, %v1493
    %v1497 = vld [vmem:[#allocation6] sm:$0xff]
    %v1498 = vld [vmem:[#allocation6 + $0x8] sm:$0xff]
    %v1499 = vld [vmem:[#allocation6 + $0x10] sm:$0xff]
    %v1500 = vld [vmem:[#allocation6 + $0x18] sm:$0xff]
    %v1501 = vld [vmem:[#allocation6 + $0x20] sm:$0xff]
    %v1502 = vld [vmem:[#allocation6 + $0x28] sm:$0xff]
    %v1503 = vld [vmem:[#allocation6 + $0x30] sm:$0xff]
    %v1504 = vld [vmem:[#allocation6 + $0x38] sm:$0xff]
    %v1505 = vld [vmem:[#allocation6 + $0x40] sm:$0xff]
    %v1506 = vld [vmem:[#allocation6 + $0x48] sm:$0xff]
    %v1507 = vld [vmem:[#allocation6 + $0x50] sm:$0xff]
    %v1508 = vld [vmem:[#allocation6 + $0x58] sm:$0xff]
    %v1509 = vld [vmem:[#allocation6 + $0x60] sm:$0xff]
    %v1510 = vld [vmem:[#allocation6 + $0x68] sm:$0xff]
    %v1511 = vld [vmem:[#allocation6 + $0x70] sm:$0xff]
    %v1512 = vld [vmem:[#allocation6 + $0x78] sm:$0xff]
    %v1513 = vld [vmem:[#allocation6 + $0x80] sm:$0xff]
    %v1514 = vld [vmem:[#allocation6 + $0x88] sm:$0xff]
    %v1515 = vld [vmem:[#allocation6 + $0x90] sm:$0xff]
    %v1516 = vld [vmem:[#allocation6 + $0x98] sm:$0xff]
    %v1517 = vld [vmem:[#allocation6 + $0xa0] sm:$0xff]
    %v1518 = vld [vmem:[#allocation6 + $0xa8] sm:$0xff]
    %v1519 = vld [vmem:[#allocation6 + $0xb0] sm:$0xff]
    %v1520 = vld [vmem:[#allocation6 + $0xb8] sm:$0xff]
    %v1521 = vld [vmem:[#allocation6 + $0xc0] sm:$0xff]
    %v1522 = vld [vmem:[#allocation6 + $0xc8] sm:$0xff]
    %v1523 = vld [vmem:[#allocation6 + $0xd0] sm:$0xff]
    %v1524 = vld [vmem:[#allocation6 + $0xd8] sm:$0xff]
    %v1525 = vld [vmem:[#allocation6 + $0xe0] sm:$0xff]
    %v1526 = vld [vmem:[#allocation6 + $0xe8] sm:$0xff]
    %v1527 = vld [vmem:[#allocation6 + $0xf0] sm:$0xff]
    %v1528 = vld [vmem:[#allocation6 + $0xf8] sm:$0xff]
    %v1529 = vld [vmem:[#allocation6 + $0x100] sm:$0xff]
    %v1530 = vld [vmem:[#allocation6 + $0x108] sm:$0xff]
    %v1531 = vld [vmem:[#allocation6 + $0x110] sm:$0xff]
    %v1532 = vld [vmem:[#allocation6 + $0x118] sm:$0xff]
    %v1533 = vld [vmem:[#allocation6 + $0x120] sm:$0xff]
    %v1534 = vld [vmem:[#allocation6 + $0x128] sm:$0xff]
    %v1535 = vld [vmem:[#allocation6 + $0x130] sm:$0xff]
    %v1536 = vld [vmem:[#allocation6 + $0x138] sm:$0xff]
    %v1537 = vld [vmem:[#allocation6 + $0x140] sm:$0xff]
    %v1538 = vld [vmem:[#allocation6 + $0x148] sm:$0xff]
    %v1539 = vld [vmem:[#allocation6 + $0x150] sm:$0xff]
    %v1540 = vld [vmem:[#allocation6 + $0x158] sm:$0xff]
    %v1541 = vld [vmem:[#allocation6 + $0x160] sm:$0xff]
    %v1542 = vld [vmem:[#allocation6 + $0x168] sm:$0xff]
    %v1543 = vld [vmem:[#allocation6 + $0x170] sm:$0xff]
    %v1544 = vld [vmem:[#allocation6 + $0x178] sm:$0xff]
    %v1545 = vld [vmem:[%s7] sm:$0x3]
    %v1547 = vlaneseq
    %v1548 = vshrl.u32 %v1547, 7
    %v1549 = vsub.s32 0, %v1548
    %v1550 = vrot.slane %v1545, %v1549
    %v1551 = vlaneseq
    %v1552 = vshrl.u32 %v1551, 7
    %v1553 = vsub.s32 1, %v1552
    %v1554 = vrot.slane %v1545, %v1553
    %v1605 = vunpack.c.l.b16 %v1497
    %v1606 = vunpack.c.h.b16 %v1497
    %v1607 = vunpack.c.l.b16 %v1498
    %v1608 = vunpack.c.h.b16 %v1498
    %v1609 = vunpack.c.l.b16 %v1499
    %v1610 = vunpack.c.h.b16 %v1499
    %v1611 = vunpack.c.l.b16 %v1500
    %v1612 = vunpack.c.h.b16 %v1500
    %v1613 = vunpack.c.l.b16 %v1501
    %v1614 = vunpack.c.h.b16 %v1501
    %v1615 = vunpack.c.l.b16 %v1502
    %v1616 = vunpack.c.h.b16 %v1502
    %v1617 = vunpack.c.l.b16 %v1503
    %v1618 = vunpack.c.h.b16 %v1503
    %v1619 = vunpack.c.l.b16 %v1504
    %v1620 = vunpack.c.h.b16 %v1504
    %v1621 = vunpack.c.l.b16 %v1505
    %v1622 = vunpack.c.h.b16 %v1505
    %v1623 = vunpack.c.l.b16 %v1506
    %v1624 = vunpack.c.h.b16 %v1506
    %v1625 = vunpack.c.l.b16 %v1507
    %v1626 = vunpack.c.h.b16 %v1507
    %v1627 = vunpack.c.l.b16 %v1508
    %v1628 = vunpack.c.h.b16 %v1508
    %v1629 = vunpack.c.l.b16 %v1509
    %v1630 = vunpack.c.h.b16 %v1509
    %v1631 = vunpack.c.l.b16 %v1510
    %v1632 = vunpack.c.h.b16 %v1510
    %v1633 = vunpack.c.l.b16 %v1511
    %v1634 = vunpack.c.h.b16 %v1511
    %v1635 = vunpack.c.l.b16 %v1512
    %v1636 = vunpack.c.h.b16 %v1512
    %v1637 = vunpack.c.l.b16 %v1513
    %v1638 = vunpack.c.h.b16 %v1513
    %v1639 = vunpack.c.l.b16 %v1514
    %v1640 = vunpack.c.h.b16 %v1514
    %v1641 = vunpack.c.l.b16 %v1515
    %v1642 = vunpack.c.h.b16 %v1515
    %v1643 = vunpack.c.l.b16 %v1516
    %v1644 = vunpack.c.h.b16 %v1516
    %v1645 = vunpack.c.l.b16 %v1517
    %v1646 = vunpack.c.h.b16 %v1517
    %v1647 = vunpack.c.l.b16 %v1518
    %v1648 = vunpack.c.h.b16 %v1518
    %v1649 = vunpack.c.l.b16 %v1519
    %v1650 = vunpack.c.h.b16 %v1519
    %v1651 = vunpack.c.l.b16 %v1520
    %v1652 = vunpack.c.h.b16 %v1520
    %v1653 = vunpack.c.l.b16 %v1521
    %v1654 = vunpack.c.h.b16 %v1521
    %v1655 = vunpack.c.l.b16 %v1522
    %v1656 = vunpack.c.h.b16 %v1522
    %v1657 = vunpack.c.l.b16 %v1523
    %v1658 = vunpack.c.h.b16 %v1523
    %v1659 = vunpack.c.l.b16 %v1524
    %v1660 = vunpack.c.h.b16 %v1524
    %v1661 = vunpack.c.l.b16 %v1525
    %v1662 = vunpack.c.h.b16 %v1525
    %v1663 = vunpack.c.l.b16 %v1526
    %v1664 = vunpack.c.h.b16 %v1526
    %v1665 = vunpack.c.l.b16 %v1527
    %v1666 = vunpack.c.h.b16 %v1527
    %v1667 = vunpack.c.l.b16 %v1528
    %v1668 = vunpack.c.h.b16 %v1528
    %v1669 = vunpack.c.l.b16 %v1529
    %v1670 = vunpack.c.h.b16 %v1529
    %v1671 = vunpack.c.l.b16 %v1530
    %v1672 = vunpack.c.h.b16 %v1530
    %v1673 = vunpack.c.l.b16 %v1531
    %v1674 = vunpack.c.h.b16 %v1531
    %v1675 = vunpack.c.l.b16 %v1532
    %v1676 = vunpack.c.h.b16 %v1532
    %v1677 = vunpack.c.l.b16 %v1533
    %v1678 = vunpack.c.h.b16 %v1533
    %v1679 = vunpack.c.l.b16 %v1534
    %v1680 = vunpack.c.h.b16 %v1534
    %v1681 = vunpack.c.l.b16 %v1535
    %v1682 = vunpack.c.h.b16 %v1535
    %v1683 = vunpack.c.l.b16 %v1536
    %v1684 = vunpack.c.h.b16 %v1536
    %v1685 = vunpack.c.l.b16 %v1537
    %v1686 = vunpack.c.h.b16 %v1537
    %v1687 = vunpack.c.l.b16 %v1538
    %v1688 = vunpack.c.h.b16 %v1538
    %v1689 = vunpack.c.l.b16 %v1539
    %v1690 = vunpack.c.h.b16 %v1539
    %v1691 = vunpack.c.l.b16 %v1540
    %v1692 = vunpack.c.h.b16 %v1540
    %v1693 = vunpack.c.l.b16 %v1541
    %v1694 = vunpack.c.h.b16 %v1541
    %v1695 = vunpack.c.l.b16 %v1542
    %v1696 = vunpack.c.h.b16 %v1542
    %v1697 = vunpack.c.l.b16 %v1543
    %v1698 = vunpack.c.h.b16 %v1543
    %v1699 = vunpack.c.l.b16 %v1544
    %v1700 = vunpack.c.h.b16 %v1544
    %v1701 = vpack.c.b16 %v1607, %v1605
    %v1702 = vpack.c.b16 %v1608, %v1606
    %v1703 = vpack.c.b16 %v1611, %v1609
    %v1704 = vpack.c.b16 %v1612, %v1610
    %v1705 = vpack.c.b16 %v1615, %v1613
    %v1706 = vpack.c.b16 %v1616, %v1614
    %v1707 = vpack.c.b16 %v1619, %v1617
    %v1708 = vpack.c.b16 %v1620, %v1618
    %v1709 = vpack.c.b16 %v1623, %v1621
    %v1710 = vpack.c.b16 %v1624, %v1622
    %v1711 = vpack.c.b16 %v1627, %v1625
    %v1712 = vpack.c.b16 %v1628, %v1626
    %v1713 = vpack.c.b16 %v1631, %v1629
    %v1714 = vpack.c.b16 %v1632, %v1630
    %v1715 = vpack.c.b16 %v1635, %v1633
    %v1716 = vpack.c.b16 %v1636, %v1634
    %v1717 = vpack.c.b16 %v1639, %v1637
    %v1718 = vpack.c.b16 %v1640, %v1638
    %v1719 = vpack.c.b16 %v1643, %v1641
    %v1720 = vpack.c.b16 %v1644, %v1642
    %v1721 = vpack.c.b16 %v1647, %v1645
    %v1722 = vpack.c.b16 %v1648, %v1646
    %v1723 = vpack.c.b16 %v1651, %v1649
    %v1724 = vpack.c.b16 %v1652, %v1650
    %v1725 = vpack.c.b16 %v1655, %v1653
    %v1726 = vpack.c.b16 %v1656, %v1654
    %v1727 = vpack.c.b16 %v1659, %v1657
    %v1728 = vpack.c.b16 %v1660, %v1658
    %v1729 = vpack.c.b16 %v1663, %v1661
    %v1730 = vpack.c.b16 %v1664, %v1662
    %v1731 = vpack.c.b16 %v1667, %v1665
    %v1732 = vpack.c.b16 %v1668, %v1666
    %v1733 = vpack.c.b16 %v1671, %v1669
    %v1734 = vpack.c.b16 %v1672, %v1670
    %v1735 = vpack.c.b16 %v1675, %v1673
    %v1736 = vpack.c.b16 %v1676, %v1674
    %v1737 = vpack.c.b16 %v1679, %v1677
    %v1738 = vpack.c.b16 %v1680, %v1678
    %v1739 = vpack.c.b16 %v1683, %v1681
    %v1740 = vpack.c.b16 %v1684, %v1682
    %v1741 = vpack.c.b16 %v1687, %v1685
    %v1742 = vpack.c.b16 %v1688, %v1686
    %v1743 = vpack.c.b16 %v1691, %v1689
    %v1744 = vpack.c.b16 %v1692, %v1690
    %v1745 = vpack.c.b16 %v1695, %v1693
    %v1746 = vpack.c.b16 %v1696, %v1694
    %v1747 = vpack.c.b16 %v1699, %v1697
    %v1748 = vpack.c.b16 %v1700, %v1698
    %1797 = vmatprep.subr.bf16.mxu0 %v1716
    %1798 = vmatpush1.bf16.msra.mxu0 %v1715
    %1799 = vmatprep.subr.bf16.mxu0 %v1714
    %1800 = vmatpush1.bf16.msra.mxu0 %v1713
    %1801 = vmatprep.subr.bf16.mxu0 %v1712
    %1802 = vmatpush1.bf16.msra.mxu0 %v1711
    %1803 = vmatprep.subr.bf16.mxu0 %v1710
    %1804 = vmatpush1.bf16.msra.mxu0 %v1709
    %1805 = vmatprep.subr.bf16.mxu0 %v1708
    %1806 = vmatpush1.bf16.msra.mxu0 %v1707
    %1807 = vmatprep.subr.bf16.mxu0 %v1706
    %1808 = vmatpush1.bf16.msra.mxu0 %v1705
    %1809 = vmatprep.subr.bf16.mxu0 %v1704
    %1810 = vmatpush1.bf16.msra.mxu0 %v1703
    %1811 = vmatprep.subr.bf16.mxu0 %v1702
    %1812 = vmatpush1.bf16.msra.mxu0 %v1701
    %1813 = vmatprep.subr.bf16.mxu0 %v1732
    %1814 = vmatpush2.bf16.msra.mxu0 %v1731
    %1815 = vmatprep.subr.bf16.mxu0 %v1730
    %1816 = vmatpush2.bf16.msra.mxu0 %v1729
    %1817 = vmatprep.subr.bf16.mxu0 %v1728
    %1818 = vmatpush2.bf16.msra.mxu0 %v1727
    %1819 = vmatprep.subr.bf16.mxu0 %v1726
    %1820 = vmatpush2.bf16.msra.mxu0 %v1725
    %1821 = vmatprep.subr.bf16.mxu0 %v1724
    %1822 = vmatpush2.bf16.msra.mxu0 %v1723
    %1823 = vmatprep.subr.bf16.mxu0 %v1722
    %1824 = vmatpush2.bf16.msra.mxu0 %v1721
    %1825 = vmatprep.subr.bf16.mxu0 %v1720
    %1826 = vmatpush2.bf16.msra.mxu0 %v1719
    %1827 = vmatprep.subr.bf16.mxu0 %v1718
    %1828 = vmatpush2.bf16.msra.mxu0 %v1717
    %1829 = vmatprep.mubr.bf16.mxu0 %v1495
    %1830 = vmatmul.mubr.bf16.gmra.mxu0 %v1494
    %v1831 = vpop.f32.mrf.mxu0
    %v1832 = vadd.f32 %v1550, %v1831
    %v1833 = vpop.f32.mrf.mxu0
    %v1834 = vadd.f32 %v1554, %v1833
    %v1835 = vpop.f32.mrf.mxu0
    %v1836 = vpop.f32.mrf.mxu0
    %1837 = vdwg.mxu0
    %1838 = vmatprep.subr.bf16.mxu0 %v1748
    %1839 = vmatpush1.bf16.msra.mxu0 %v1747
    %1840 = vmatprep.subr.bf16.mxu0 %v1746
    %1841 = vmatpush1.bf16.msra.mxu0 %v1745
    %1842 = vmatprep.subr.bf16.mxu0 %v1744
    %1843 = vmatpush1.bf16.msra.mxu0 %v1743
    %1844 = vmatprep.subr.bf16.mxu0 %v1742
    %1845 = vmatpush1.bf16.msra.mxu0 %v1741
    %1846 = vmatprep.subr.bf16.mxu0 %v1740
    %1847 = vmatpush1.bf16.msra.mxu0 %v1739
    %1848 = vmatprep.subr.bf16.mxu0 %v1738
    %1849 = vmatpush1.bf16.msra.mxu0 %v1737
    %1850 = vmatprep.subr.bf16.mxu0 %v1736
    %1851 = vmatpush1.bf16.msra.mxu0 %v1735
    %1852 = vmatprep.subr.bf16.mxu0 %v1734
    %1853 = vmatpush1.bf16.msra.mxu0 %v1733
    %1854 = vmatprep.subr.bf16.mxu0 0
    %1855 = vmatpush2.bf16.msra.mxu0 0
    %1856 = vmatprep.subr.bf16.mxu0 0
    %1857 = vmatpush2.bf16.msra.mxu0 0
    %1858 = vmatprep.subr.bf16.mxu0 0
    %1859 = vmatpush2.bf16.msra.mxu0 0
    %1860 = vmatprep.subr.bf16.mxu0 0
    %1861 = vmatpush2.bf16.msra.mxu0 0
    %1862 = vmatprep.subr.bf16.mxu0 0
    %1863 = vmatpush2.bf16.msra.mxu0 0
    %1864 = vmatprep.subr.bf16.mxu0 0
    %1865 = vmatpush2.bf16.msra.mxu0 0
    %1866 = vmatprep.subr.bf16.mxu0 0
    %1867 = vmatpush2.bf16.msra.mxu0 0
    %1868 = vmatprep.subr.bf16.mxu0 0
    %1869 = vmatpush2.bf16.msra.mxu0 0
    %1870 = vmatprep.mubr.bf16.mxu0 0
    %1871 = vmatmul.mubr.bf16.gmra.mxu0 %v1496
    %v1872 = vpop.f32.mrf.mxu0
    %v1873 = vadd.f32 %v1832, %v1872
    %v1874 = vpop.f32.mrf.mxu0
    %v1875 = vadd.f32 %v1834, %v1874
    %v1876 = vpop.f32.mrf.mxu0
    %v1877 = vpop.f32.mrf.mxu0
    %1878 = vdwg.mxu0
    %v1879 = vmax.f32 %v1873, 0.0
    %v1880 = vmax.f32 %v1875, 0.0
    %v1881 = vpack.c.bf16 %v1879, %v1879
    %v1882 = vpack.c.bf16 %v1880, %v1880
    %v1883 = vld [vmem:[#allocation7] sm:$0xff]
    %v1884 = vld [vmem:[#allocation7 + $0x8] sm:$0xff]
    %v1885 = vld [vmem:[#allocation7 + $0x10] sm:$0xff]
    %v1886 = vld [vmem:[#allocation7 + $0x18] sm:$0xff]
    %v1887 = vld [vmem:[#allocation7 + $0x20] sm:$0xff]
    %v1888 = vld [vmem:[#allocation7 + $0x28] sm:$0xff]
    %v1889 = vld [vmem:[#allocation7 + $0x30] sm:$0xff]
    %v1890 = vld [vmem:[#allocation7 + $0x38] sm:$0xff]
    %v1891 = vld [vmem:[#allocation7 + $0x40] sm:$0xff]
    %v1892 = vld [vmem:[#allocation7 + $0x48] sm:$0xff]
    %v1893 = vld [vmem:[#allocation7 + $0x50] sm:$0xff]
    %v1894 = vld [vmem:[#allocation7 + $0x58] sm:$0xff]
    %v1895 = vld [vmem:[#allocation7 + $0x60] sm:$0xff]
    %v1896 = vld [vmem:[#allocation7 + $0x68] sm:$0xff]
    %v1897 = vld [vmem:[#allocation7 + $0x70] sm:$0xff]
    %v1898 = vld [vmem:[#allocation7 + $0x78] sm:$0xff]
    %v1899 = vld [vmem:[#allocation7 + $0x80] sm:$0xff]
    %v1900 = vld [vmem:[#allocation7 + $0x88] sm:$0xff]
    %v1901 = vld [vmem:[#allocation7 + $0x90] sm:$0xff]
    %v1902 = vld [vmem:[#allocation7 + $0x98] sm:$0xff]
    %v1903 = vld [vmem:[#allocation7 + $0xa0] sm:$0xff]
    %v1904 = vld [vmem:[#allocation7 + $0xa8] sm:$0xff]
    %v1905 = vld [vmem:[#allocation7 + $0xb0] sm:$0xff]
    %v1906 = vld [vmem:[#allocation7 + $0xb8] sm:$0xff]
    %v1907 = vld [vmem:[#allocation7 + $0xc0] sm:$0xff]
    %v1908 = vld [vmem:[#allocation7 + $0xc8] sm:$0xff]
    %v1909 = vld [vmem:[#allocation7 + $0xd0] sm:$0xff]
    %v1910 = vld [vmem:[#allocation7 + $0xd8] sm:$0xff]
    %v1911 = vld [vmem:[#allocation7 + $0xe0] sm:$0xff]
    %v1912 = vld [vmem:[#allocation7 + $0xe8] sm:$0xff]
    %v1913 = vld [vmem:[#allocation7 + $0xf0] sm:$0xff]
    %v1914 = vld [vmem:[#allocation7 + $0xf8] sm:$0xff]
    %v1915 = vld [vmem:[%s9] sm:$0x3]
    %v1917 = vlaneseq
    %v1918 = vshrl.u32 %v1917, 7
    %v1919 = vsub.s32 0, %v1918
    %v1920 = vrot.slane %v1915, %v1919
    %v1921 = vlaneseq
    %v1922 = vshrl.u32 %v1921, 7
    %v1923 = vsub.s32 1, %v1922
    %v1924 = vrot.slane %v1915, %v1923
    %v1959 = vunpack.c.l.b16 %v1883
    %v1960 = vunpack.c.h.b16 %v1883
    %v1961 = vunpack.c.l.b16 %v1884
    %v1962 = vunpack.c.h.b16 %v1884
    %v1963 = vunpack.c.l.b16 %v1885
    %v1964 = vunpack.c.h.b16 %v1885
    %v1965 = vunpack.c.l.b16 %v1886
    %v1966 = vunpack.c.h.b16 %v1886
    %v1967 = vunpack.c.l.b16 %v1887
    %v1968 = vunpack.c.h.b16 %v1887
    %v1969 = vunpack.c.l.b16 %v1888
    %v1970 = vunpack.c.h.b16 %v1888
    %v1971 = vunpack.c.l.b16 %v1889
    %v1972 = vunpack.c.h.b16 %v1889
    %v1973 = vunpack.c.l.b16 %v1890
    %v1974 = vunpack.c.h.b16 %v1890
    %v1975 = vunpack.c.l.b16 %v1891
    %v1976 = vunpack.c.h.b16 %v1891
    %v1977 = vunpack.c.l.b16 %v1892
    %v1978 = vunpack.c.h.b16 %v1892
    %v1979 = vunpack.c.l.b16 %v1893
    %v1980 = vunpack.c.h.b16 %v1893
    %v1981 = vunpack.c.l.b16 %v1894
    %v1982 = vunpack.c.h.b16 %v1894
    %v1983 = vunpack.c.l.b16 %v1895
    %v1984 = vunpack.c.h.b16 %v1895
    %v1985 = vunpack.c.l.b16 %v1896
    %v1986 = vunpack.c.h.b16 %v1896
    %v1987 = vunpack.c.l.b16 %v1897
    %v1988 = vunpack.c.h.b16 %v1897
    %v1989 = vunpack.c.l.b16 %v1898
    %v1990 = vunpack.c.h.b16 %v1898
    %v1991 = vunpack.c.l.b16 %v1899
    %v1992 = vunpack.c.h.b16 %v1899
    %v1993 = vunpack.c.l.b16 %v1900
    %v1994 = vunpack.c.h.b16 %v1900
    %v1995 = vunpack.c.l.b16 %v1901
    %v1996 = vunpack.c.h.b16 %v1901
    %v1997 = vunpack.c.l.b16 %v1902
    %v1998 = vunpack.c.h.b16 %v1902
    %v1999 = vunpack.c.l.b16 %v1903
    %v2000 = vunpack.c.h.b16 %v1903
    %v2001 = vunpack.c.l.b16 %v1904
    %v2002 = vunpack.c.h.b16 %v1904
    %v2003 = vunpack.c.l.b16 %v1905
    %v2004 = vunpack.c.h.b16 %v1905
    %v2005 = vunpack.c.l.b16 %v1906
    %v2006 = vunpack.c.h.b16 %v1906
    %v2007 = vunpack.c.l.b16 %v1907
    %v2008 = vunpack.c.h.b16 %v1907
    %v2009 = vunpack.c.l.b16 %v1908
    %v2010 = vunpack.c.h.b16 %v1908
    %v2011 = vunpack.c.l.b16 %v1909
    %v2012 = vunpack.c.h.b16 %v1909
    %v2013 = vunpack.c.l.b16 %v1910
    %v2014 = vunpack.c.h.b16 %v1910
    %v2015 = vunpack.c.l.b16 %v1911
    %v2016 = vunpack.c.h.b16 %v1911
    %v2017 = vunpack.c.l.b16 %v1912
    %v2018 = vunpack.c.h.b16 %v1912
    %v2019 = vunpack.c.l.b16 %v1913
    %v2020 = vunpack.c.h.b16 %v1913
    %v2021 = vunpack.c.l.b16 %v1914
    %v2022 = vunpack.c.h.b16 %v1914
    %v2023 = vpack.c.b16 %v1961, %v1959
    %v2024 = vpack.c.b16 %v1962, %v1960
    %v2025 = vpack.c.b16 %v1965, %v1963
    %v2026 = vpack.c.b16 %v1966, %v1964
    %v2027 = vpack.c.b16 %v1969, %v1967
    %v2028 = vpack.c.b16 %v1970, %v1968
    %v2029 = vpack.c.b16 %v1973, %v1971
    %v2030 = vpack.c.b16 %v1974, %v1972
    %v2031 = vpack.c.b16 %v1977, %v1975
    %v2032 = vpack.c.b16 %v1978, %v1976
    %v2033 = vpack.c.b16 %v1981, %v1979
    %v2034 = vpack.c.b16 %v1982, %v1980
    %v2035 = vpack.c.b16 %v1985, %v1983
    %v2036 = vpack.c.b16 %v1986, %v1984
    %v2037 = vpack.c.b16 %v1989, %v1987
    %v2038 = vpack.c.b16 %v1990, %v1988
    %v2039 = vpack.c.b16 %v1993, %v1991
    %v2040 = vpack.c.b16 %v1994, %v1992
    %v2041 = vpack.c.b16 %v1997, %v1995
    %v2042 = vpack.c.b16 %v1998, %v1996
    %v2043 = vpack.c.b16 %v2001, %v1999
    %v2044 = vpack.c.b16 %v2002, %v2000
    %v2045 = vpack.c.b16 %v2005, %v2003
    %v2046 = vpack.c.b16 %v2006, %v2004
    %v2047 = vpack.c.b16 %v2009, %v2007
    %v2048 = vpack.c.b16 %v2010, %v2008
    %v2049 = vpack.c.b16 %v2013, %v2011
    %v2050 = vpack.c.b16 %v2014, %v2012
    %v2051 = vpack.c.b16 %v2017, %v2015
    %v2052 = vpack.c.b16 %v2018, %v2016
    %v2053 = vpack.c.b16 %v2021, %v2019
    %v2054 = vpack.c.b16 %v2022, %v2020
    %2087 = vmatprep.subr.bf16.mxu0 %v2038
    %2088 = vmatpush1.bf16.msra.mxu0 %v2037
    %2089 = vmatprep.subr.bf16.mxu0 %v2036
    %2090 = vmatpush1.bf16.msra.mxu0 %v2035
    %2091 = vmatprep.subr.bf16.mxu0 %v2034
    %2092 = vmatpush1.bf16.msra.mxu0 %v2033
    %2093 = vmatprep.subr.bf16.mxu0 %v2032
    %2094 = vmatpush1.bf16.msra.mxu0 %v2031
    %2095 = vmatprep.subr.bf16.mxu0 %v2030
    %2096 = vmatpush1.bf16.msra.mxu0 %v2029
    %2097 = vmatprep.subr.bf16.mxu0 %v2028
    %2098 = vmatpush1.bf16.msra.mxu0 %v2027
    %2099 = vmatprep.subr.bf16.mxu0 %v2026
    %2100 = vmatpush1.bf16.msra.mxu0 %v2025
    %2101 = vmatprep.subr.bf16.mxu0 %v2024
    %2102 = vmatpush1.bf16.msra.mxu0 %v2023
    %2103 = vmatprep.subr.bf16.mxu0 %v2054
    %2104 = vmatpush2.bf16.msra.mxu0 %v2053
    %2105 = vmatprep.subr.bf16.mxu0 %v2052
    %2106 = vmatpush2.bf16.msra.mxu0 %v2051
    %2107 = vmatprep.subr.bf16.mxu0 %v2050
    %2108 = vmatpush2.bf16.msra.mxu0 %v2049
    %2109 = vmatprep.subr.bf16.mxu0 %v2048
    %2110 = vmatpush2.bf16.msra.mxu0 %v2047
    %2111 = vmatprep.subr.bf16.mxu0 %v2046
    %2112 = vmatpush2.bf16.msra.mxu0 %v2045
    %2113 = vmatprep.subr.bf16.mxu0 %v2044
    %2114 = vmatpush2.bf16.msra.mxu0 %v2043
    %2115 = vmatprep.subr.bf16.mxu0 %v2042
    %2116 = vmatpush2.bf16.msra.mxu0 %v2041
    %2117 = vmatprep.subr.bf16.mxu0 %v2040
    %2118 = vmatpush2.bf16.msra.mxu0 %v2039
    %2119 = vmatprep.mubr.bf16.mxu0 %v1882
    %2120 = vmatmul.mubr.bf16.gmra.mxu0 %v1881
    %v2121 = vpop.f32.mrf.mxu0
    %v2122 = vadd.f32 %v1920, %v2121
    %v2123 = vpop.f32.mrf.mxu0
    %v2124 = vadd.f32 %v1924, %v2123
    %v2125 = vpop.f32.mrf.mxu0
    %v2126 = vpop.f32.mrf.mxu0
    %2127 = vdwg.mxu0
    %2128 = vst [vmem:[%s19] sm:$0xff] %v2122
    %2129 = vst [vmem:[%s20] sm:$0xff] %v2124
    %v2130 = vld [vmem:[%s1] sm:$0xff]
    %v2131 = vmul.f32 %v2130, %v2124
    %v2132 = vadd.f32 %v2122, %v2131
    %v2133 = vpack.c.bf16 %v2132, %v2132
    %v2134 = vld [vmem:[#allocation9] sm:$0xff]
    %v2135 = vld [vmem:[#allocation9 + $0x8] sm:$0xff]
    %v2136 = vld [vmem:[#allocation9 + $0x10] sm:$0xff]
    %v2137 = vld [vmem:[#allocation9 + $0x18] sm:$0xff]
    %v2138 = vld [vmem:[#allocation9 + $0x20] sm:$0xff]
    %v2139 = vld [vmem:[#allocation9 + $0x28] sm:$0xff]
    %v2140 = vld [vmem:[#allocation9 + $0x30] sm:$0xff]
    %v2141 = vld [vmem:[#allocation9 + $0x38] sm:$0xff]
    %v2142 = vld [vmem:[#allocation9 + $0x40] sm:$0xff]
    %v2143 = vld [vmem:[#allocation9 + $0x48] sm:$0xff]
    %v2144 = vld [vmem:[#allocation9 + $0x50] sm:$0xff]
    %v2145 = vld [vmem:[#allocation9 + $0x58] sm:$0xff]
    %v2146 = vld [vmem:[#allocation9 + $0x60] sm:$0xff]
    %v2147 = vld [vmem:[#allocation9 + $0x68] sm:$0xff]
    %v2148 = vld [vmem:[#allocation9 + $0x70] sm:$0xff]
    %v2149 = vld [vmem:[#allocation9 + $0x78] sm:$0xff]
    %v2150 = vld [vmem:[%s11] sm:$0x3]
    %v2152 = vlaneseq
    %v2153 = vshrl.u32 %v2152, 7
    %v2154 = vsub.s32 0, %v2153
    %v2155 = vrot.slane %v2150, %v2154
    %v2156 = vlaneseq
    %v2157 = vshrl.u32 %v2156, 7
    %v2158 = vsub.s32 1, %v2157
    %v2159 = vrot.slane %v2150, %v2158
    %v2178 = vunpack.c.l.b16 %v2134
    %v2179 = vunpack.c.h.b16 %v2134
    %v2180 = vunpack.c.l.b16 %v2135
    %v2181 = vunpack.c.h.b16 %v2135
    %v2182 = vunpack.c.l.b16 %v2136
    %v2183 = vunpack.c.h.b16 %v2136
    %v2184 = vunpack.c.l.b16 %v2137
    %v2185 = vunpack.c.h.b16 %v2137
    %v2186 = vunpack.c.l.b16 %v2138
    %v2187 = vunpack.c.h.b16 %v2138
    %v2188 = vunpack.c.l.b16 %v2139
    %v2189 = vunpack.c.h.b16 %v2139
    %v2190 = vunpack.c.l.b16 %v2140
    %v2191 = vunpack.c.h.b16 %v2140
    %v2192 = vunpack.c.l.b16 %v2141
    %v2193 = vunpack.c.h.b16 %v2141
    %v2194 = vunpack.c.l.b16 %v2142
    %v2195 = vunpack.c.h.b16 %v2142
    %v2196 = vunpack.c.l.b16 %v2143
    %v2197 = vunpack.c.h.b16 %v2143
    %v2198 = vunpack.c.l.b16 %v2144
    %v2199 = vunpack.c.h.b16 %v2144
    %v2200 = vunpack.c.l.b16 %v2145
    %v2201 = vunpack.c.h.b16 %v2145
    %v2202 = vunpack.c.l.b16 %v2146
    %v2203 = vunpack.c.h.b16 %v2146
    %v2204 = vunpack.c.l.b16 %v2147
    %v2205 = vunpack.c.h.b16 %v2147
    %v2206 = vunpack.c.l.b16 %v2148
    %v2207 = vunpack.c.h.b16 %v2148
    %v2208 = vunpack.c.l.b16 %v2149
    %v2209 = vunpack.c.h.b16 %v2149
    %v2210 = vpack.c.b16 %v2180, %v2178
    %v2211 = vpack.c.b16 %v2181, %v2179
    %v2212 = vpack.c.b16 %v2184, %v2182
    %v2213 = vpack.c.b16 %v2185, %v2183
    %v2214 = vpack.c.b16 %v2188, %v2186
    %v2215 = vpack.c.b16 %v2189, %v2187
    %v2216 = vpack.c.b16 %v2192, %v2190
    %v2217 = vpack.c.b16 %v2193, %v2191
    %v2218 = vpack.c.b16 %v2196, %v2194
    %v2219 = vpack.c.b16 %v2197, %v2195
    %v2220 = vpack.c.b16 %v2200, %v2198
    %v2221 = vpack.c.b16 %v2201, %v2199
    %v2222 = vpack.c.b16 %v2204, %v2202
    %v2223 = vpack.c.b16 %v2205, %v2203
    %v2224 = vpack.c.b16 %v2208, %v2206
    %v2225 = vpack.c.b16 %v2209, %v2207
    %2242 = vmatprep.subr.bf16.mxu0 %v2225
    %2243 = vmatpush1.bf16.msra.mxu0 %v2224
    %2244 = vmatprep.subr.bf16.mxu0 %v2223
    %2245 = vmatpush1.bf16.msra.mxu0 %v2222
    %2246 = vmatprep.subr.bf16.mxu0 %v2221
    %2247 = vmatpush1.bf16.msra.mxu0 %v2220
    %2248 = vmatprep.subr.bf16.mxu0 %v2219
    %2249 = vmatpush1.bf16.msra.mxu0 %v2218
    %2250 = vmatprep.subr.bf16.mxu0 %v2217
    %2251 = vmatpush1.bf16.msra.mxu0 %v2216
    %2252 = vmatprep.subr.bf16.mxu0 %v2215
    %2253 = vmatpush1.bf16.msra.mxu0 %v2214
    %2254 = vmatprep.subr.bf16.mxu0 %v2213
    %2255 = vmatpush1.bf16.msra.mxu0 %v2212
    %2256 = vmatprep.subr.bf16.mxu0 %v2211
    %2257 = vmatpush1.bf16.msra.mxu0 %v2210
    %2258 = vmatprep.subr.bf16.mxu0 0
    %2259 = vmatpush2.bf16.msra.mxu0 0
    %2260 = vmatprep.subr.bf16.mxu0 0
    %2261 = vmatpush2.bf16.msra.mxu0 0
    %2262 = vmatprep.subr.bf16.mxu0 0
    %2263 = vmatpush2.bf16.msra.mxu0 0
    %2264 = vmatprep.subr.bf16.mxu0 0
    %2265 = vmatpush2.bf16.msra.mxu0 0
    %2266 = vmatprep.subr.bf16.mxu0 0
    %2267 = vmatpush2.bf16.msra.mxu0 0
    %2268 = vmatprep.subr.bf16.mxu0 0
    %2269 = vmatpush2.bf16.msra.mxu0 0
    %2270 = vmatprep.subr.bf16.mxu0 0
    %2271 = vmatpush2.bf16.msra.mxu0 0
    %2272 = vmatprep.subr.bf16.mxu0 0
    %2273 = vmatpush2.bf16.msra.mxu0 0
    %2274 = vmatprep.mubr.bf16.mxu0 0
    %2275 = vmatmul.mubr.bf16.gmra.mxu0 %v2133
    %v2276 = vpop.f32.mrf.mxu0
    %v2277 = vadd.f32 %v2155, %v2276
    %v2278 = vpop.f32.mrf.mxu0
    %v2279 = vadd.f32 %v2159, %v2278
    %v2280 = vpop.f32.mrf.mxu0
    %v2281 = vpop.f32.mrf.mxu0
    %2282 = vdwg.mxu0
    %v2283 = vmax.f32 %v2277, 0.0
    %v2284 = vmax.f32 %v2279, 0.0
    %v2285 = vpack.c.bf16 %v2283, %v2283
    %v2286 = vpack.c.bf16 %v2284, %v2284
    %v2287 = vld [vmem:[#allocation10] sm:$0xff]
    %v2288 = vld [vmem:[#allocation10 + $0x8] sm:$0xf]
    %v2289 = vld [vmem:[#allocation10 + $0xc] sm:$0xff]
    %v2290 = vld [vmem:[#allocation10 + $0x14] sm:$0xf]
    %v2291 = vld [vmem:[#allocation10 + $0x18] sm:$0xff]
    %v2292 = vld [vmem:[#allocation10 + $0x20] sm:$0xf]
    %v2293 = vld [vmem:[#allocation10 + $0x24] sm:$0xff]
    %v2294 = vld [vmem:[#allocation10 + $0x2c] sm:$0xf]
    %v2295 = vld [vmem:[#allocation10 + $0x30] sm:$0xff]
    %v2296 = vld [vmem:[#allocation10 + $0x38] sm:$0xf]
    %v2297 = vld [vmem:[#allocation10 + $0x3c] sm:$0xff]
    %v2298 = vld [vmem:[#allocation10 + $0x44] sm:$0xf]
    %v2299 = vld [vmem:[#allocation10 + $0x48] sm:$0xff]
    %v2300 = vld [vmem:[#allocation10 + $0x50] sm:$0xf]
    %v2301 = vld [vmem:[#allocation10 + $0x54] sm:$0xff]
    %v2302 = vld [vmem:[#allocation10 + $0x5c] sm:$0xf]
    %v2303 = vld [vmem:[#allocation10 + $0x60] sm:$0xff]
    %v2304 = vld [vmem:[#allocation10 + $0x68] sm:$0xf]
    %v2305 = vld [vmem:[#allocation10 + $0x6c] sm:$0xff]
    %v2306 = vld [vmem:[#allocation10 + $0x74] sm:$0xf]
    %v2307 = vld [vmem:[#allocation10 + $0x78] sm:$0xff]
    %v2308 = vld [vmem:[#allocation10 + $0x80] sm:$0xf]
    %v2309 = vld [vmem:[#allocation10 + $0x84] sm:$0xff]
    %v2310 = vld [vmem:[#allocation10 + $0x8c] sm:$0xf]
    %v2311 = vld [vmem:[#allocation10 + $0x90] sm:$0xff]
    %v2312 = vld [vmem:[#allocation10 + $0x98] sm:$0xf]
    %v2313 = vld [vmem:[#allocation10 + $0x9c] sm:$0xff]
    %v2314 = vld [vmem:[#allocation10 + $0xa4] sm:$0xf]
    %v2315 = vld [vmem:[#allocation10 + $0xa8] sm:$0xff]
    %v2316 = vld [vmem:[#allocation10 + $0xb0] sm:$0xf]
    %v2317 = vld [vmem:[#allocation10 + $0xb4] sm:$0xff]
    %v2318 = vld [vmem:[#allocation10 + $0xbc] sm:$0xf]
    %v2319 = vld [vmem:[#allocation10 + $0xc0] sm:$0xff]
    %v2320 = vld [vmem:[#allocation10 + $0xc8] sm:$0xf]
    %v2321 = vld [vmem:[#allocation10 + $0xcc] sm:$0xff]
    %v2322 = vld [vmem:[#allocation10 + $0xd4] sm:$0xf]
    %v2323 = vld [vmem:[#allocation10 + $0xd8] sm:$0xff]
    %v2324 = vld [vmem:[#allocation10 + $0xe0] sm:$0xf]
    %v2325 = vld [vmem:[#allocation10 + $0xe4] sm:$0xff]
    %v2326 = vld [vmem:[#allocation10 + $0xec] sm:$0xf]
    %v2327 = vld [vmem:[#allocation10 + $0xf0] sm:$0xff]
    %v2328 = vld [vmem:[#allocation10 + $0xf8] sm:$0xf]
    %v2329 = vld [vmem:[#allocation10 + $0xfc] sm:$0xff]
    %v2330 = vld [vmem:[#allocation10 + $0x104] sm:$0xf]
    %v2331 = vld [vmem:[#allocation10 + $0x108] sm:$0xff]
    %v2332 = vld [vmem:[#allocation10 + $0x110] sm:$0xf]
    %v2333 = vld [vmem:[#allocation10 + $0x114] sm:$0xff]
    %v2334 = vld [vmem:[#allocation10 + $0x11c] sm:$0xf]
    %v2335 = vld [vmem:[#allocation10 + $0x120] sm:$0xff]
    %v2336 = vld [vmem:[#allocation10 + $0x128] sm:$0xf]
    %v2337 = vld [vmem:[#allocation10 + $0x12c] sm:$0xff]
    %v2338 = vld [vmem:[#allocation10 + $0x134] sm:$0xf]
    %v2339 = vld [vmem:[#allocation10 + $0x138] sm:$0xff]
    %v2340 = vld [vmem:[#allocation10 + $0x140] sm:$0xf]
    %v2341 = vld [vmem:[#allocation10 + $0x144] sm:$0xff]
    %v2342 = vld [vmem:[#allocation10 + $0x14c] sm:$0xf]
    %v2343 = vld [vmem:[#allocation10 + $0x150] sm:$0xff]
    %v2344 = vld [vmem:[#allocation10 + $0x158] sm:$0xf]
    %v2345 = vld [vmem:[#allocation10 + $0x15c] sm:$0xff]
    %v2346 = vld [vmem:[#allocation10 + $0x164] sm:$0xf]
    %v2347 = vld [vmem:[#allocation10 + $0x168] sm:$0xff]
    %v2348 = vld [vmem:[#allocation10 + $0x170] sm:$0xf]
    %v2349 = vld [vmem:[#allocation10 + $0x174] sm:$0xff]
    %v2350 = vld [vmem:[#allocation10 + $0x17c] sm:$0xf]
    %v2351 = vld [vmem:[%s13] sm:$0x7]
    %v2353 = vlaneseq
    %v2354 = vshrl.u32 %v2353, 7
    %v2355 = vsub.s32 0, %v2354
    %v2356 = vrot.slane %v2351, %v2355
    %v2357 = vlaneseq
    %v2358 = vshrl.u32 %v2357, 7
    %v2359 = vsub.s32 1, %v2358
    %v2360 = vrot.slane %v2351, %v2359
    %v2361 = vlaneseq
    %v2362 = vshrl.u32 %v2361, 7
    %v2363 = vsub.s32 2, %v2362
    %v2364 = vrot.slane %v2351, %v2363
    %v2432 = vunpack.c.l.b16 %v2287
    %v2433 = vunpack.c.h.b16 %v2287
    %v2434 = vunpack.c.l.b16 %v2288
    %v2435 = vunpack.c.l.b16 %v2289
    %v2436 = vunpack.c.h.b16 %v2289
    %v2437 = vunpack.c.l.b16 %v2290
    %v2438 = vunpack.c.l.b16 %v2291
    %v2439 = vunpack.c.h.b16 %v2291
    %v2440 = vunpack.c.l.b16 %v2292
    %v2441 = vunpack.c.l.b16 %v2293
    %v2442 = vunpack.c.h.b16 %v2293
    %v2443 = vunpack.c.l.b16 %v2294
    %v2444 = vunpack.c.l.b16 %v2295
    %v2445 = vunpack.c.h.b16 %v2295
    %v2446 = vunpack.c.l.b16 %v2296
    %v2447 = vunpack.c.l.b16 %v2297
    %v2448 = vunpack.c.h.b16 %v2297
    %v2449 = vunpack.c.l.b16 %v2298
    %v2450 = vunpack.c.l.b16 %v2299
    %v2451 = vunpack.c.h.b16 %v2299
    %v2452 = vunpack.c.l.b16 %v2300
    %v2453 = vunpack.c.l.b16 %v2301
    %v2454 = vunpack.c.h.b16 %v2301
    %v2455 = vunpack.c.l.b16 %v2302
    %v2456 = vunpack.c.l.b16 %v2303
    %v2457 = vunpack.c.h.b16 %v2303
    %v2458 = vunpack.c.l.b16 %v2304
    %v2459 = vunpack.c.l.b16 %v2305
    %v2460 = vunpack.c.h.b16 %v2305
    %v2461 = vunpack.c.l.b16 %v2306
    %v2462 = vunpack.c.l.b16 %v2307
    %v2463 = vunpack.c.h.b16 %v2307
    %v2464 = vunpack.c.l.b16 %v2308
    %v2465 = vunpack.c.l.b16 %v2309
    %v2466 = vunpack.c.h.b16 %v2309
    %v2467 = vunpack.c.l.b16 %v2310
    %v2468 = vunpack.c.l.b16 %v2311
    %v2469 = vunpack.c.h.b16 %v2311
    %v2470 = vunpack.c.l.b16 %v2312
    %v2471 = vunpack.c.l.b16 %v2313
    %v2472 = vunpack.c.h.b16 %v2313
    %v2473 = vunpack.c.l.b16 %v2314
    %v2474 = vunpack.c.l.b16 %v2315
    %v2475 = vunpack.c.h.b16 %v2315
    %v2476 = vunpack.c.l.b16 %v2316
    %v2477 = vunpack.c.l.b16 %v2317
    %v2478 = vunpack.c.h.b16 %v2317
    %v2479 = vunpack.c.l.b16 %v2318
    %v2480 = vunpack.c.l.b16 %v2319
    %v2481 = vunpack.c.h.b16 %v2319
    %v2482 = vunpack.c.l.b16 %v2320
    %v2483 = vunpack.c.l.b16 %v2321
    %v2484 = vunpack.c.h.b16 %v2321
    %v2485 = vunpack.c.l.b16 %v2322
    %v2486 = vunpack.c.l.b16 %v2323
    %v2487 = vunpack.c.h.b16 %v2323
    %v2488 = vunpack.c.l.b16 %v2324
    %v2489 = vunpack.c.l.b16 %v2325
    %v2490 = vunpack.c.h.b16 %v2325
    %v2491 = vunpack.c.l.b16 %v2326
    %v2492 = vunpack.c.l.b16 %v2327
    %v2493 = vunpack.c.h.b16 %v2327
    %v2494 = vunpack.c.l.b16 %v2328
    %v2495 = vunpack.c.l.b16 %v2329
    %v2496 = vunpack.c.h.b16 %v2329
    %v2497 = vunpack.c.l.b16 %v2330
    %v2498 = vunpack.c.l.b16 %v2331
    %v2499 = vunpack.c.h.b16 %v2331
    %v2500 = vunpack.c.l.b16 %v2332
    %v2501 = vunpack.c.l.b16 %v2333
    %v2502 = vunpack.c.h.b16 %v2333
    %v2503 = vunpack.c.l.b16 %v2334
    %v2504 = vunpack.c.l.b16 %v2335
    %v2505 = vunpack.c.h.b16 %v2335
    %v2506 = vunpack.c.l.b16 %v2336
    %v2507 = vunpack.c.l.b16 %v2337
    %v2508 = vunpack.c.h.b16 %v2337
    %v2509 = vunpack.c.l.b16 %v2338
    %v2510 = vunpack.c.l.b16 %v2339
    %v2511 = vunpack.c.h.b16 %v2339
    %v2512 = vunpack.c.l.b16 %v2340
    %v2513 = vunpack.c.l.b16 %v2341
    %v2514 = vunpack.c.h.b16 %v2341
    %v2515 = vunpack.c.l.b16 %v2342
    %v2516 = vunpack.c.l.b16 %v2343
    %v2517 = vunpack.c.h.b16 %v2343
    %v2518 = vunpack.c.l.b16 %v2344
    %v2519 = vunpack.c.l.b16 %v2345
    %v2520 = vunpack.c.h.b16 %v2345
    %v2521 = vunpack.c.l.b16 %v2346
    %v2522 = vunpack.c.l.b16 %v2347
    %v2523 = vunpack.c.h.b16 %v2347
    %v2524 = vunpack.c.l.b16 %v2348
    %v2525 = vunpack.c.l.b16 %v2349
    %v2526 = vunpack.c.h.b16 %v2349
    %v2527 = vunpack.c.l.b16 %v2350
    %v2528 = vpack.c.b16 %v2435, %v2432
    %v2529 = vpack.c.b16 %v2436, %v2433
    %v2530 = vpack.c.b16 %v2437, %v2434
    %v2531 = vpack.c.b16 %v2441, %v2438
    %v2532 = vpack.c.b16 %v2442, %v2439
    %v2533 = vpack.c.b16 %v2443, %v2440
    %v2534 = vpack.c.b16 %v2447, %v2444
    %v2535 = vpack.c.b16 %v2448, %v2445
    %v2536 = vpack.c.b16 %v2449, %v2446
    %v2537 = vpack.c.b16 %v2453, %v2450
    %v2538 = vpack.c.b16 %v2454, %v2451
    %v2539 = vpack.c.b16 %v2455, %v2452
    %v2540 = vpack.c.b16 %v2459, %v2456
    %v2541 = vpack.c.b16 %v2460, %v2457
    %v2542 = vpack.c.b16 %v2461, %v2458
    %v2543 = vpack.c.b16 %v2465, %v2462
    %v2544 = vpack.c.b16 %v2466, %v2463
    %v2545 = vpack.c.b16 %v2467, %v2464
    %v2546 = vpack.c.b16 %v2471, %v2468
    %v2547 = vpack.c.b16 %v2472, %v2469
    %v2548 = vpack.c.b16 %v2473, %v2470
    %v2549 = vpack.c.b16 %v2477, %v2474
    %v2550 = vpack.c.b16 %v2478, %v2475
    %v2551 = vpack.c.b16 %v2479, %v2476
    %v2552 = vpack.c.b16 %v2483, %v2480
    %v2553 = vpack.c.b16 %v2484, %v2481
    %v2554 = vpack.c.b16 %v2485, %v2482
    %v2555 = vpack.c.b16 %v2489, %v2486
    %v2556 = vpack.c.b16 %v2490, %v2487
    %v2557 = vpack.c.b16 %v2491, %v2488
    %v2558 = vpack.c.b16 %v2495, %v2492
    %v2559 = vpack.c.b16 %v2496, %v2493
    %v2560 = vpack.c.b16 %v2497, %v2494
    %v2561 = vpack.c.b16 %v2501, %v2498
    %v2562 = vpack.c.b16 %v2502, %v2499
    %v2563 = vpack.c.b16 %v2503, %v2500
    %v2564 = vpack.c.b16 %v2507, %v2504
    %v2565 = vpack.c.b16 %v2508, %v2505
    %v2566 = vpack.c.b16 %v2509, %v2506
    %v2567 = vpack.c.b16 %v2513, %v2510
    %v2568 = vpack.c.b16 %v2514, %v2511
    %v2569 = vpack.c.b16 %v2515, %v2512
    %v2570 = vpack.c.b16 %v2519, %v2516
    %v2571 = vpack.c.b16 %v2520, %v2517
    %v2572 = vpack.c.b16 %v2521, %v2518
    %v2573 = vpack.c.b16 %v2525, %v2522
    %v2574 = vpack.c.b16 %v2526, %v2523
    %v2575 = vpack.c.b16 %v2527, %v2524
    %2624 = vmatprep.subr.bf16.mxu0 %v2550
    %2625 = vmatpush1.bf16.msra.mxu0 %v2549
    %2626 = vmatprep.subr.bf16.mxu0 %v2547
    %2627 = vmatpush1.bf16.msra.mxu0 %v2546
    %2628 = vmatprep.subr.bf16.mxu0 %v2544
    %2629 = vmatpush1.bf16.msra.mxu0 %v2543
    %2630 = vmatprep.subr.bf16.mxu0 %v2541
    %2631 = vmatpush1.bf16.msra.mxu0 %v2540
    %2632 = vmatprep.subr.bf16.mxu0 %v2538
    %2633 = vmatpush1.bf16.msra.mxu0 %v2537
    %2634 = vmatprep.subr.bf16.mxu0 %v2535
    %2635 = vmatpush1.bf16.msra.mxu0 %v2534
    %2636 = vmatprep.subr.bf16.mxu0 %v2532
    %2637 = vmatpush1.bf16.msra.mxu0 %v2531
    %2638 = vmatprep.subr.bf16.mxu0 %v2529
    %2639 = vmatpush1.bf16.msra.mxu0 %v2528
    %2640 = vmatprep.subr.bf16.mxu0 %v2574
    %2641 = vmatpush2.bf16.msra.mxu0 %v2573
    %2642 = vmatprep.subr.bf16.mxu0 %v2571
    %2643 = vmatpush2.bf16.msra.mxu0 %v2570
    %2644 = vmatprep.subr.bf16.mxu0 %v2568
    %2645 = vmatpush2.bf16.msra.mxu0 %v2567
    %2646 = vmatprep.subr.bf16.mxu0 %v2565
    %2647 = vmatpush2.bf16.msra.mxu0 %v2564
    %2648 = vmatprep.subr.bf16.mxu0 %v2562
    %2649 = vmatpush2.bf16.msra.mxu0 %v2561
    %2650 = vmatprep.subr.bf16.mxu0 %v2559
    %2651 = vmatpush2.bf16.msra.mxu0 %v2558
    %2652 = vmatprep.subr.bf16.mxu0 %v2556
    %2653 = vmatpush2.bf16.msra.mxu0 %v2555
    %2654 = vmatprep.subr.bf16.mxu0 %v2553
    %2655 = vmatpush2.bf16.msra.mxu0 %v2552
    %2656 = vmatprep.mubr.bf16.mxu0 %v2286
    %2657 = vmatmul.mubr.bf16.gmra.mxu0 %v2285
    %v2658 = vpop.f32.mrf.mxu0
    %v2659 = vadd.f32 %v2356, %v2658
    %v2660 = vpop.f32.mrf.mxu0
    %v2661 = vadd.f32 %v2360, %v2660
    %v2662 = vpop.f32.mrf.mxu0
    %v2663 = vpop.f32.mrf.mxu0
    %2664 = vdwg.mxu0
    %2665 = vmatprep.subr.bf16.mxu0 0
    %2666 = vmatpush1.bf16.msra.mxu0 %v2551
    %2667 = vmatprep.subr.bf16.mxu0 0
    %2668 = vmatpush1.bf16.msra.mxu0 %v2548
    %2669 = vmatprep.subr.bf16.mxu0 0
    %2670 = vmatpush1.bf16.msra.mxu0 %v2545
    %2671 = vmatprep.subr.bf16.mxu0 0
    %2672 = vmatpush1.bf16.msra.mxu0 %v2542
    %2673 = vmatprep.subr.bf16.mxu0 0
    %2674 = vmatpush1.bf16.msra.mxu0 %v2539
    %2675 = vmatprep.subr.bf16.mxu0 0
    %2676 = vmatpush1.bf16.msra.mxu0 %v2536
    %2677 = vmatprep.subr.bf16.mxu0 0
    %2678 = vmatpush1.bf16.msra.mxu0 %v2533
    %2679 = vmatprep.subr.bf16.mxu0 0
    %2680 = vmatpush1.bf16.msra.mxu0 %v2530
    %2681 = vmatprep.subr.bf16.mxu0 0
    %2682 = vmatpush2.bf16.msra.mxu0 %v2575
    %2683 = vmatprep.subr.bf16.mxu0 0
    %2684 = vmatpush2.bf16.msra.mxu0 %v2572
    %2685 = vmatprep.subr.bf16.mxu0 0
    %2686 = vmatpush2.bf16.msra.mxu0 %v2569
    %2687 = vmatprep.subr.bf16.mxu0 0
    %2688 = vmatpush2.bf16.msra.mxu0 %v2566
    %2689 = vmatprep.subr.bf16.mxu0 0
    %2690 = vmatpush2.bf16.msra.mxu0 %v2563
    %2691 = vmatprep.subr.bf16.mxu0 0
    %2692 = vmatpush2.bf16.msra.mxu0 %v2560
    %2693 = vmatprep.subr.bf16.mxu0 0
    %2694 = vmatpush2.bf16.msra.mxu0 %v2557
    %2695 = vmatprep.subr.bf16.mxu0 0
    %2696 = vmatpush2.bf16.msra.mxu0 %v2554
    %2697 = vmatprep.mubr.bf16.mxu0 %v2286
    %2698 = vmatmul.mubr.bf16.gmra.mxu0 %v2285
    %v2699 = vpop.f32.mrf.mxu0
    %v2700 = vadd.f32 %v2364, %v2699
    %v2701 = vpop.f32.mrf.mxu0
    %v2702 = vpop.f32.mrf.mxu0
    %v2703 = vpop.f32.mrf.mxu0
    %2704 = vdwg.mxu0
    %v2705 = vmax.f32 %v2659, 0.0
    %v2706 = vmax.f32 %v2661, 0.0
    %v2707 = vmax.f32 %v2700, 0.0
    %v2708 = vpack.c.bf16 %v2705, %v2705
    %v2709 = vpack.c.bf16 %v2706, %v2706
    %v2710 = vpack.c.bf16 %v2707, %v2707
    %v2711 = vld [vmem:[#allocation12] sm:$0xff]
    %v2712 = vld [vmem:[#allocation12 + $0x8] sm:$0xff]
    %v2713 = vld [vmem:[#allocation12 + $0x10] sm:$0xff]
    %v2714 = vld [vmem:[#allocation12 + $0x18] sm:$0xff]
    %v2715 = vld [vmem:[#allocation12 + $0x20] sm:$0xff]
    %v2716 = vld [vmem:[#allocation12 + $0x28] sm:$0xff]
    %v2717 = vld [vmem:[#allocation12 + $0x30] sm:$0xff]
    %v2718 = vld [vmem:[#allocation12 + $0x38] sm:$0xff]
    %v2719 = vld [vmem:[#allocation12 + $0x40] sm:$0xff]
    %v2720 = vld [vmem:[#allocation12 + $0x48] sm:$0xff]
    %v2721 = vld [vmem:[#allocation12 + $0x50] sm:$0xff]
    %v2722 = vld [vmem:[#allocation12 + $0x58] sm:$0xff]
    %v2723 = vld [vmem:[#allocation12 + $0x60] sm:$0xff]
    %v2724 = vld [vmem:[#allocation12 + $0x68] sm:$0xff]
    %v2725 = vld [vmem:[#allocation12 + $0x70] sm:$0xff]
    %v2726 = vld [vmem:[#allocation12 + $0x78] sm:$0xff]
    %v2727 = vld [vmem:[#allocation12 + $0x80] sm:$0xff]
    %v2728 = vld [vmem:[#allocation12 + $0x88] sm:$0xff]
    %v2729 = vld [vmem:[#allocation12 + $0x90] sm:$0xff]
    %v2730 = vld [vmem:[#allocation12 + $0x98] sm:$0xff]
    %v2731 = vld [vmem:[#allocation12 + $0xa0] sm:$0xff]
    %v2732 = vld [vmem:[#allocation12 + $0xa8] sm:$0xff]
    %v2733 = vld [vmem:[#allocation12 + $0xb0] sm:$0xff]
    %v2734 = vld [vmem:[#allocation12 + $0xb8] sm:$0xff]
    %v2735 = vld [vmem:[#allocation12 + $0xc0] sm:$0xff]
    %v2736 = vld [vmem:[#allocation12 + $0xc8] sm:$0xff]
    %v2737 = vld [vmem:[#allocation12 + $0xd0] sm:$0xff]
    %v2738 = vld [vmem:[#allocation12 + $0xd8] sm:$0xff]
    %v2739 = vld [vmem:[#allocation12 + $0xe0] sm:$0xff]
    %v2740 = vld [vmem:[#allocation12 + $0xe8] sm:$0xff]
    %v2741 = vld [vmem:[#allocation12 + $0xf0] sm:$0xff]
    %v2742 = vld [vmem:[#allocation12 + $0xf8] sm:$0xff]
    %v2743 = vld [vmem:[#allocation12 + $0x100] sm:$0xff]
    %v2744 = vld [vmem:[#allocation12 + $0x108] sm:$0xff]
    %v2745 = vld [vmem:[#allocation12 + $0x110] sm:$0xff]
    %v2746 = vld [vmem:[#allocation12 + $0x118] sm:$0xff]
    %v2747 = vld [vmem:[#allocation12 + $0x120] sm:$0xff]
    %v2748 = vld [vmem:[#allocation12 + $0x128] sm:$0xff]
    %v2749 = vld [vmem:[#allocation12 + $0x130] sm:$0xff]
    %v2750 = vld [vmem:[#allocation12 + $0x138] sm:$0xff]
    %v2751 = vld [vmem:[#allocation12 + $0x140] sm:$0xff]
    %v2752 = vld [vmem:[#allocation12 + $0x148] sm:$0xff]
    %v2753 = vld [vmem:[#allocation12 + $0x150] sm:$0xff]
    %v2754 = vld [vmem:[#allocation12 + $0x158] sm:$0xff]
    %v2755 = vld [vmem:[#allocation12 + $0x160] sm:$0xff]
    %v2756 = vld [vmem:[#allocation12 + $0x168] sm:$0xff]
    %v2757 = vld [vmem:[#allocation12 + $0x170] sm:$0xff]
    %v2758 = vld [vmem:[#allocation12 + $0x178] sm:$0xff]
    %v2759 = vld [vmem:[#allocation12 + $0x180] sm:$0xff]
    %v2760 = vld [vmem:[#allocation12 + $0x188] sm:$0xff]
    %v2761 = vld [vmem:[#allocation12 + $0x190] sm:$0xff]
    %v2762 = vld [vmem:[#allocation12 + $0x198] sm:$0xff]
    %v2763 = vld [vmem:[#allocation12 + $0x1a0] sm:$0xff]
    %v2764 = vld [vmem:[#allocation12 + $0x1a8] sm:$0xff]
    %v2765 = vld [vmem:[#allocation12 + $0x1b0] sm:$0xff]
    %v2766 = vld [vmem:[#allocation12 + $0x1b8] sm:$0xff]
    %v2767 = vld [vmem:[#allocation12 + $0x1c0] sm:$0xff]
    %v2768 = vld [vmem:[#allocation12 + $0x1c8] sm:$0xff]
    %v2769 = vld [vmem:[#allocation12 + $0x1d0] sm:$0xff]
    %v2770 = vld [vmem:[#allocation12 + $0x1d8] sm:$0xff]
    %v2771 = vld [vmem:[#allocation12 + $0x1e0] sm:$0xff]
    %v2772 = vld [vmem:[#allocation12 + $0x1e8] sm:$0xff]
    %v2773 = vld [vmem:[#allocation12 + $0x1f0] sm:$0xff]
    %v2774 = vld [vmem:[#allocation12 + $0x1f8] sm:$0xff]
    %v2775 = vld [vmem:[#allocation12 + $0x200] sm:$0xff]
    %v2776 = vld [vmem:[#allocation12 + $0x208] sm:$0xff]
    %v2777 = vld [vmem:[#allocation12 + $0x210] sm:$0xff]
    %v2778 = vld [vmem:[#allocation12 + $0x218] sm:$0xff]
    %v2779 = vld [vmem:[#allocation12 + $0x220] sm:$0xff]
    %v2780 = vld [vmem:[#allocation12 + $0x228] sm:$0xff]
    %v2781 = vld [vmem:[#allocation12 + $0x230] sm:$0xff]
    %v2782 = vld [vmem:[#allocation12 + $0x238] sm:$0xff]
    %v2783 = vld [vmem:[#allocation12 + $0x240] sm:$0xff]
    %v2784 = vld [vmem:[#allocation12 + $0x248] sm:$0xff]
    %v2785 = vld [vmem:[#allocation12 + $0x250] sm:$0xff]
    %v2786 = vld [vmem:[#allocation12 + $0x258] sm:$0xff]
    %v2787 = vld [vmem:[#allocation12 + $0x260] sm:$0xff]
    %v2788 = vld [vmem:[#allocation12 + $0x268] sm:$0xff]
    %v2789 = vld [vmem:[#allocation12 + $0x270] sm:$0xff]
    %v2790 = vld [vmem:[#allocation12 + $0x278] sm:$0xff]
    %v2791 = vld [vmem:[#allocation12 + $0x280] sm:$0xff]
    %v2792 = vld [vmem:[#allocation12 + $0x288] sm:$0xff]
    %v2793 = vld [vmem:[#allocation12 + $0x290] sm:$0xff]
    %v2794 = vld [vmem:[#allocation12 + $0x298] sm:$0xff]
    %v2795 = vld [vmem:[#allocation12 + $0x2a0] sm:$0xff]
    %v2796 = vld [vmem:[#allocation12 + $0x2a8] sm:$0xff]
    %v2797 = vld [vmem:[#allocation12 + $0x2b0] sm:$0xff]
    %v2798 = vld [vmem:[#allocation12 + $0x2b8] sm:$0xff]
    %v2799 = vld [vmem:[#allocation12 + $0x2c0] sm:$0xff]
    %v2800 = vld [vmem:[#allocation12 + $0x2c8] sm:$0xff]
    %v2801 = vld [vmem:[#allocation12 + $0x2d0] sm:$0xff]
    %v2802 = vld [vmem:[#allocation12 + $0x2d8] sm:$0xff]
    %v2803 = vld [vmem:[#allocation12 + $0x2e0] sm:$0xff]
    %v2804 = vld [vmem:[#allocation12 + $0x2e8] sm:$0xff]
    %v2805 = vld [vmem:[#allocation12 + $0x2f0] sm:$0xff]
    %v2806 = vld [vmem:[#allocation12 + $0x2f8] sm:$0xff]
    %v2807 = vld [vmem:[%s15] sm:$0xf]
    %v2809 = vlaneseq
    %v2810 = vshrl.u32 %v2809, 7
    %v2811 = vsub.s32 0, %v2810
    %v2812 = vrot.slane %v2807, %v2811
    %v2813 = vlaneseq
    %v2814 = vshrl.u32 %v2813, 7
    %v2815 = vsub.s32 1, %v2814
    %v2816 = vrot.slane %v2807, %v2815
    %v2817 = vlaneseq
    %v2818 = vshrl.u32 %v2817, 7
    %v2819 = vsub.s32 2, %v2818
    %v2820 = vrot.slane %v2807, %v2819
    %v2821 = vlaneseq
    %v2822 = vshrl.u32 %v2821, 7
    %v2823 = vsub.s32 3, %v2822
    %v2824 = vrot.slane %v2807, %v2823
    %v2925 = vunpack.c.l.b16 %v2711
    %v2926 = vunpack.c.h.b16 %v2711
    %v2927 = vunpack.c.l.b16 %v2712
    %v2928 = vunpack.c.h.b16 %v2712
    %v2929 = vunpack.c.l.b16 %v2713
    %v2930 = vunpack.c.h.b16 %v2713
    %v2931 = vunpack.c.l.b16 %v2714
    %v2932 = vunpack.c.h.b16 %v2714
    %v2933 = vunpack.c.l.b16 %v2715
    %v2934 = vunpack.c.h.b16 %v2715
    %v2935 = vunpack.c.l.b16 %v2716
    %v2936 = vunpack.c.h.b16 %v2716
    %v2937 = vunpack.c.l.b16 %v2717
    %v2938 = vunpack.c.h.b16 %v2717
    %v2939 = vunpack.c.l.b16 %v2718
    %v2940 = vunpack.c.h.b16 %v2718
    %v2941 = vunpack.c.l.b16 %v2719
    %v2942 = vunpack.c.h.b16 %v2719
    %v2943 = vunpack.c.l.b16 %v2720
    %v2944 = vunpack.c.h.b16 %v2720
    %v2945 = vunpack.c.l.b16 %v2721
    %v2946 = vunpack.c.h.b16 %v2721
    %v2947 = vunpack.c.l.b16 %v2722
    %v2948 = vunpack.c.h.b16 %v2722
    %v2949 = vunpack.c.l.b16 %v2723
    %v2950 = vunpack.c.h.b16 %v2723
    %v2951 = vunpack.c.l.b16 %v2724
    %v2952 = vunpack.c.h.b16 %v2724
    %v2953 = vunpack.c.l.b16 %v2725
    %v2954 = vunpack.c.h.b16 %v2725
    %v2955 = vunpack.c.l.b16 %v2726
    %v2956 = vunpack.c.h.b16 %v2726
    %v2957 = vunpack.c.l.b16 %v2727
    %v2958 = vunpack.c.h.b16 %v2727
    %v2959 = vunpack.c.l.b16 %v2728
    %v2960 = vunpack.c.h.b16 %v2728
    %v2961 = vunpack.c.l.b16 %v2729
    %v2962 = vunpack.c.h.b16 %v2729
    %v2963 = vunpack.c.l.b16 %v2730
    %v2964 = vunpack.c.h.b16 %v2730
    %v2965 = vunpack.c.l.b16 %v2731
    %v2966 = vunpack.c.h.b16 %v2731
    %v2967 = vunpack.c.l.b16 %v2732
    %v2968 = vunpack.c.h.b16 %v2732
    %v2969 = vunpack.c.l.b16 %v2733
    %v2970 = vunpack.c.h.b16 %v2733
    %v2971 = vunpack.c.l.b16 %v2734
    %v2972 = vunpack.c.h.b16 %v2734
    %v2973 = vunpack.c.l.b16 %v2735
    %v2974 = vunpack.c.h.b16 %v2735
    %v2975 = vunpack.c.l.b16 %v2736
    %v2976 = vunpack.c.h.b16 %v2736
    %v2977 = vunpack.c.l.b16 %v2737
    %v2978 = vunpack.c.h.b16 %v2737
    %v2979 = vunpack.c.l.b16 %v2738
    %v2980 = vunpack.c.h.b16 %v2738
    %v2981 = vunpack.c.l.b16 %v2739
    %v2982 = vunpack.c.h.b16 %v2739
    %v2983 = vunpack.c.l.b16 %v2740
    %v2984 = vunpack.c.h.b16 %v2740
    %v2985 = vunpack.c.l.b16 %v2741
    %v2986 = vunpack.c.h.b16 %v2741
    %v2987 = vunpack.c.l.b16 %v2742
    %v2988 = vunpack.c.h.b16 %v2742
    %v2989 = vunpack.c.l.b16 %v2743
    %v2990 = vunpack.c.h.b16 %v2743
    %v2991 = vunpack.c.l.b16 %v2744
    %v2992 = vunpack.c.h.b16 %v2744
    %v2993 = vunpack.c.l.b16 %v2745
    %v2994 = vunpack.c.h.b16 %v2745
    %v2995 = vunpack.c.l.b16 %v2746
    %v2996 = vunpack.c.h.b16 %v2746
    %v2997 = vunpack.c.l.b16 %v2747
    %v2998 = vunpack.c.h.b16 %v2747
    %v2999 = vunpack.c.l.b16 %v2748
    %v3000 = vunpack.c.h.b16 %v2748
    %v3001 = vunpack.c.l.b16 %v2749
    %v3002 = vunpack.c.h.b16 %v2749
    %v3003 = vunpack.c.l.b16 %v2750
    %v3004 = vunpack.c.h.b16 %v2750
    %v3005 = vunpack.c.l.b16 %v2751
    %v3006 = vunpack.c.h.b16 %v2751
    %v3007 = vunpack.c.l.b16 %v2752
    %v3008 = vunpack.c.h.b16 %v2752
    %v3009 = vunpack.c.l.b16 %v2753
    %v3010 = vunpack.c.h.b16 %v2753
    %v3011 = vunpack.c.l.b16 %v2754
    %v3012 = vunpack.c.h.b16 %v2754
    %v3013 = vunpack.c.l.b16 %v2755
    %v3014 = vunpack.c.h.b16 %v2755
    %v3015 = vunpack.c.l.b16 %v2756
    %v3016 = vunpack.c.h.b16 %v2756
    %v3017 = vunpack.c.l.b16 %v2757
    %v3018 = vunpack.c.h.b16 %v2757
    %v3019 = vunpack.c.l.b16 %v2758
    %v3020 = vunpack.c.h.b16 %v2758
    %v3021 = vunpack.c.l.b16 %v2759
    %v3022 = vunpack.c.h.b16 %v2759
    %v3023 = vunpack.c.l.b16 %v2760
    %v3024 = vunpack.c.h.b16 %v2760
    %v3025 = vunpack.c.l.b16 %v2761
    %v3026 = vunpack.c.h.b16 %v2761
    %v3027 = vunpack.c.l.b16 %v2762
    %v3028 = vunpack.c.h.b16 %v2762
    %v3029 = vunpack.c.l.b16 %v2763
    %v3030 = vunpack.c.h.b16 %v2763
    %v3031 = vunpack.c.l.b16 %v2764
    %v3032 = vunpack.c.h.b16 %v2764
    %v3033 = vunpack.c.l.b16 %v2765
    %v3034 = vunpack.c.h.b16 %v2765
    %v3035 = vunpack.c.l.b16 %v2766
    %v3036 = vunpack.c.h.b16 %v2766
    %v3037 = vunpack.c.l.b16 %v2767
    %v3038 = vunpack.c.h.b16 %v2767
    %v3039 = vunpack.c.l.b16 %v2768
    %v3040 = vunpack.c.h.b16 %v2768
    %v3041 = vunpack.c.l.b16 %v2769
    %v3042 = vunpack.c.h.b16 %v2769
    %v3043 = vunpack.c.l.b16 %v2770
    %v3044 = vunpack.c.h.b16 %v2770
    %v3045 = vunpack.c.l.b16 %v2771
    %v3046 = vunpack.c.h.b16 %v2771
    %v3047 = vunpack.c.l.b16 %v2772
    %v3048 = vunpack.c.h.b16 %v2772
    %v3049 = vunpack.c.l.b16 %v2773
    %v3050 = vunpack.c.h.b16 %v2773
    %v3051 = vunpack.c.l.b16 %v2774
    %v3052 = vunpack.c.h.b16 %v2774
    %v3053 = vunpack.c.l.b16 %v2775
    %v3054 = vunpack.c.h.b16 %v2775
    %v3055 = vunpack.c.l.b16 %v2776
    %v3056 = vunpack.c.h.b16 %v2776
    %v3057 = vunpack.c.l.b16 %v2777
    %v3058 = vunpack.c.h.b16 %v2777
    %v3059 = vunpack.c.l.b16 %v2778
    %v3060 = vunpack.c.h.b16 %v2778
    %v3061 = vunpack.c.l.b16 %v2779
    %v3062 = vunpack.c.h.b16 %v2779
    %v3063 = vunpack.c.l.b16 %v2780
    %v3064 = vunpack.c.h.b16 %v2780
    %v3065 = vunpack.c.l.b16 %v2781
    %v3066 = vunpack.c.h.b16 %v2781
    %v3067 = vunpack.c.l.b16 %v2782
    %v3068 = vunpack.c.h.b16 %v2782
    %v3069 = vunpack.c.l.b16 %v2783
    %v3070 = vunpack.c.h.b16 %v2783
    %v3071 = vunpack.c.l.b16 %v2784
    %v3072 = vunpack.c.h.b16 %v2784
    %v3073 = vunpack.c.l.b16 %v2785
    %v3074 = vunpack.c.h.b16 %v2785
    %v3075 = vunpack.c.l.b16 %v2786
    %v3076 = vunpack.c.h.b16 %v2786
    %v3077 = vunpack.c.l.b16 %v2787
    %v3078 = vunpack.c.h.b16 %v2787
    %v3079 = vunpack.c.l.b16 %v2788
    %v3080 = vunpack.c.h.b16 %v2788
    %v3081 = vunpack.c.l.b16 %v2789
    %v3082 = vunpack.c.h.b16 %v2789
    %v3083 = vunpack.c.l.b16 %v2790
    %v3084 = vunpack.c.h.b16 %v2790
    %v3085 = vunpack.c.l.b16 %v2791
    %v3086 = vunpack.c.h.b16 %v2791
    %v3087 = vunpack.c.l.b16 %v2792
    %v3088 = vunpack.c.h.b16 %v2792
    %v3089 = vunpack.c.l.b16 %v2793
    %v3090 = vunpack.c.h.b16 %v2793
    %v3091 = vunpack.c.l.b16 %v2794
    %v3092 = vunpack.c.h.b16 %v2794
    %v3093 = vunpack.c.l.b16 %v2795
    %v3094 = vunpack.c.h.b16 %v2795
    %v3095 = vunpack.c.l.b16 %v2796
    %v3096 = vunpack.c.h.b16 %v2796
    %v3097 = vunpack.c.l.b16 %v2797
    %v3098 = vunpack.c.h.b16 %v2797
    %v3099 = vunpack.c.l.b16 %v2798
    %v3100 = vunpack.c.h.b16 %v2798
    %v3101 = vunpack.c.l.b16 %v2799
    %v3102 = vunpack.c.h.b16 %v2799
    %v3103 = vunpack.c.l.b16 %v2800
    %v3104 = vunpack.c.h.b16 %v2800
    %v3105 = vunpack.c.l.b16 %v2801
    %v3106 = vunpack.c.h.b16 %v2801
    %v3107 = vunpack.c.l.b16 %v2802
    %v3108 = vunpack.c.h.b16 %v2802
    %v3109 = vunpack.c.l.b16 %v2803
    %v3110 = vunpack.c.h.b16 %v2803
    %v3111 = vunpack.c.l.b16 %v2804
    %v3112 = vunpack.c.h.b16 %v2804
    %v3113 = vunpack.c.l.b16 %v2805
    %v3114 = vunpack.c.h.b16 %v2805
    %v3115 = vunpack.c.l.b16 %v2806
    %v3116 = vunpack.c.h.b16 %v2806
    %v3117 = vpack.c.b16 %v2929, %v2925
    %v3118 = vpack.c.b16 %v2930, %v2926
    %v3119 = vpack.c.b16 %v2931, %v2927
    %v3120 = vpack.c.b16 %v2932, %v2928
    %v3121 = vpack.c.b16 %v2937, %v2933
    %v3122 = vpack.c.b16 %v2938, %v2934
    %v3123 = vpack.c.b16 %v2939, %v2935
    %v3124 = vpack.c.b16 %v2940, %v2936
    %v3125 = vpack.c.b16 %v2945, %v2941
    %v3126 = vpack.c.b16 %v2946, %v2942
    %v3127 = vpack.c.b16 %v2947, %v2943
    %v3128 = vpack.c.b16 %v2948, %v2944
    %v3129 = vpack.c.b16 %v2953, %v2949
    %v3130 = vpack.c.b16 %v2954, %v2950
    %v3131 = vpack.c.b16 %v2955, %v2951
    %v3132 = vpack.c.b16 %v2956, %v2952
    %v3133 = vpack.c.b16 %v2961, %v2957
    %v3134 = vpack.c.b16 %v2962, %v2958
    %v3135 = vpack.c.b16 %v2963, %v2959
    %v3136 = vpack.c.b16 %v2964, %v2960
    %v3137 = vpack.c.b16 %v2969, %v2965
    %v3138 = vpack.c.b16 %v2970, %v2966
    %v3139 = vpack.c.b16 %v2971, %v2967
    %v3140 = vpack.c.b16 %v2972, %v2968
    %v3141 = vpack.c.b16 %v2977, %v2973
    %v3142 = vpack.c.b16 %v2978, %v2974
    %v3143 = vpack.c.b16 %v2979, %v2975
    %v3144 = vpack.c.b16 %v2980, %v2976
    %v3145 = vpack.c.b16 %v2985, %v2981
    %v3146 = vpack.c.b16 %v2986, %v2982
    %v3147 = vpack.c.b16 %v2987, %v2983
    %v3148 = vpack.c.b16 %v2988, %v2984
    %v3149 = vpack.c.b16 %v2993, %v2989
    %v3150 = vpack.c.b16 %v2994, %v2990
    %v3151 = vpack.c.b16 %v2995, %v2991
    %v3152 = vpack.c.b16 %v2996, %v2992
    %v3153 = vpack.c.b16 %v3001, %v2997
    %v3154 = vpack.c.b16 %v3002, %v2998
    %v3155 = vpack.c.b16 %v3003, %v2999
    %v3156 = vpack.c.b16 %v3004, %v3000
    %v3157 = vpack.c.b16 %v3009, %v3005
    %v3158 = vpack.c.b16 %v3010, %v3006
    %v3159 = vpack.c.b16 %v3011, %v3007
    %v3160 = vpack.c.b16 %v3012, %v3008
    %v3161 = vpack.c.b16 %v3017, %v3013
    %v3162 = vpack.c.b16 %v3018, %v3014
    %v3163 = vpack.c.b16 %v3019, %v3015
    %v3164 = vpack.c.b16 %v3020, %v3016
    %v3165 = vpack.c.b16 %v3025, %v3021
    %v3166 = vpack.c.b16 %v3026, %v3022
    %v3167 = vpack.c.b16 %v3027, %v3023
    %v3168 = vpack.c.b16 %v3028, %v3024
    %v3169 = vpack.c.b16 %v3033, %v3029
    %v3170 = vpack.c.b16 %v3034, %v3030
    %v3171 = vpack.c.b16 %v3035, %v3031
    %v3172 = vpack.c.b16 %v3036, %v3032
    %v3173 = vpack.c.b16 %v3041, %v3037
    %v3174 = vpack.c.b16 %v3042, %v3038
    %v3175 = vpack.c.b16 %v3043, %v3039
    %v3176 = vpack.c.b16 %v3044, %v3040
    %v3177 = vpack.c.b16 %v3049, %v3045
    %v3178 = vpack.c.b16 %v3050, %v3046
    %v3179 = vpack.c.b16 %v3051, %v3047
    %v3180 = vpack.c.b16 %v3052, %v3048
    %v3181 = vpack.c.b16 %v3057, %v3053
    %v3182 = vpack.c.b16 %v3058, %v3054
    %v3183 = vpack.c.b16 %v3059, %v3055
    %v3184 = vpack.c.b16 %v3060, %v3056
    %v3185 = vpack.c.b16 %v3065, %v3061
    %v3186 = vpack.c.b16 %v3066, %v3062
    %v3187 = vpack.c.b16 %v3067, %v3063
    %v3188 = vpack.c.b16 %v3068, %v3064
    %v3189 = vpack.c.b16 %v3073, %v3069
    %v3190 = vpack.c.b16 %v3074, %v3070
    %v3191 = vpack.c.b16 %v3075, %v3071
    %v3192 = vpack.c.b16 %v3076, %v3072
    %v3193 = vpack.c.b16 %v3081, %v3077
    %v3194 = vpack.c.b16 %v3082, %v3078
    %v3195 = vpack.c.b16 %v3083, %v3079
    %v3196 = vpack.c.b16 %v3084, %v3080
    %v3197 = vpack.c.b16 %v3089, %v3085
    %v3198 = vpack.c.b16 %v3090, %v3086
    %v3199 = vpack.c.b16 %v3091, %v3087
    %v3200 = vpack.c.b16 %v3092, %v3088
    %v3201 = vpack.c.b16 %v3097, %v3093
    %v3202 = vpack.c.b16 %v3098, %v3094
    %v3203 = vpack.c.b16 %v3099, %v3095
    %v3204 = vpack.c.b16 %v3100, %v3096
    %v3205 = vpack.c.b16 %v3105, %v3101
    %v3206 = vpack.c.b16 %v3106, %v3102
    %v3207 = vpack.c.b16 %v3107, %v3103
    %v3208 = vpack.c.b16 %v3108, %v3104
    %v3209 = vpack.c.b16 %v3113, %v3109
    %v3210 = vpack.c.b16 %v3114, %v3110
    %v3211 = vpack.c.b16 %v3115, %v3111
    %v3212 = vpack.c.b16 %v3116, %v3112
    %3309 = vmatprep.subr.bf16.mxu0 %v3146
    %3310 = vmatpush1.bf16.msra.mxu0 %v3145
    %3311 = vmatprep.subr.bf16.mxu0 %v3142
    %3312 = vmatpush1.bf16.msra.mxu0 %v3141
    %3313 = vmatprep.subr.bf16.mxu0 %v3138
    %3314 = vmatpush1.bf16.msra.mxu0 %v3137
    %3315 = vmatprep.subr.bf16.mxu0 %v3134
    %3316 = vmatpush1.bf16.msra.mxu0 %v3133
    %3317 = vmatprep.subr.bf16.mxu0 %v3130
    %3318 = vmatpush1.bf16.msra.mxu0 %v3129
    %3319 = vmatprep.subr.bf16.mxu0 %v3126
    %3320 = vmatpush1.bf16.msra.mxu0 %v3125
    %3321 = vmatprep.subr.bf16.mxu0 %v3122
    %3322 = vmatpush1.bf16.msra.mxu0 %v3121
    %3323 = vmatprep.subr.bf16.mxu0 %v3118
    %3324 = vmatpush1.bf16.msra.mxu0 %v3117
    %3325 = vmatprep.subr.bf16.mxu0 %v3178
    %3326 = vmatpush2.bf16.msra.mxu0 %v3177
    %3327 = vmatprep.subr.bf16.mxu0 %v3174
    %3328 = vmatpush2.bf16.msra.mxu0 %v3173
    %3329 = vmatprep.subr.bf16.mxu0 %v3170
    %3330 = vmatpush2.bf16.msra.mxu0 %v3169
    %3331 = vmatprep.subr.bf16.mxu0 %v3166
    %3332 = vmatpush2.bf16.msra.mxu0 %v3165
    %3333 = vmatprep.subr.bf16.mxu0 %v3162
    %3334 = vmatpush2.bf16.msra.mxu0 %v3161
    %3335 = vmatprep.subr.bf16.mxu0 %v3158
    %3336 = vmatpush2.bf16.msra.mxu0 %v3157
    %3337 = vmatprep.subr.bf16.mxu0 %v3154
    %3338 = vmatpush2.bf16.msra.mxu0 %v3153
    %3339 = vmatprep.subr.bf16.mxu0 %v3150
    %3340 = vmatpush2.bf16.msra.mxu0 %v3149
    %3341 = vmatprep.mubr.bf16.mxu0 %v2709
    %3342 = vmatmul.mubr.bf16.gmra.mxu0 %v2708
    %v3343 = vpop.f32.mrf.mxu0
    %v3344 = vadd.f32 %v2812, %v3343
    %v3345 = vpop.f32.mrf.mxu0
    %v3346 = vadd.f32 %v2816, %v3345
    %v3347 = vpop.f32.mrf.mxu0
    %v3348 = vpop.f32.mrf.mxu0
    %3349 = vdwg.mxu0
    %3350 = vmatprep.subr.bf16.mxu0 %v3210
    %3351 = vmatpush1.bf16.msra.mxu0 %v3209
    %3352 = vmatprep.subr.bf16.mxu0 %v3206
    %3353 = vmatpush1.bf16.msra.mxu0 %v3205
    %3354 = vmatprep.subr.bf16.mxu0 %v3202
    %3355 = vmatpush1.bf16.msra.mxu0 %v3201
    %3356 = vmatprep.subr.bf16.mxu0 %v3198
    %3357 = vmatpush1.bf16.msra.mxu0 %v3197
    %3358 = vmatprep.subr.bf16.mxu0 %v3194
    %3359 = vmatpush1.bf16.msra.mxu0 %v3193
    %3360 = vmatprep.subr.bf16.mxu0 %v3190
    %3361 = vmatpush1.bf16.msra.mxu0 %v3189
    %3362 = vmatprep.subr.bf16.mxu0 %v3186
    %3363 = vmatpush1.bf16.msra.mxu0 %v3185
    %3364 = vmatprep.subr.bf16.mxu0 %v3182
    %3365 = vmatpush1.bf16.msra.mxu0 %v3181
    %3366 = vmatprep.subr.bf16.mxu0 0
    %3367 = vmatpush2.bf16.msra.mxu0 0
    %3368 = vmatprep.subr.bf16.mxu0 0
    %3369 = vmatpush2.bf16.msra.mxu0 0
    %3370 = vmatprep.subr.bf16.mxu0 0
    %3371 = vmatpush2.bf16.msra.mxu0 0
    %3372 = vmatprep.subr.bf16.mxu0 0
    %3373 = vmatpush2.bf16.msra.mxu0 0
    %3374 = vmatprep.subr.bf16.mxu0 0
    %3375 = vmatpush2.bf16.msra.mxu0 0
    %3376 = vmatprep.subr.bf16.mxu0 0
    %3377 = vmatpush2.bf16.msra.mxu0 0
    %3378 = vmatprep.subr.bf16.mxu0 0
    %3379 = vmatpush2.bf16.msra.mxu0 0
    %3380 = vmatprep.subr.bf16.mxu0 0
    %3381 = vmatpush2.bf16.msra.mxu0 0
    %3382 = vmatprep.mubr.bf16.mxu0 0
    %3383 = vmatmul.mubr.bf16.gmra.mxu0 %v2710
    %v3384 = vpop.f32.mrf.mxu0
    %v3385 = vadd.f32 %v3344, %v3384
    %v3386 = vpop.f32.mrf.mxu0
    %v3387 = vadd.f32 %v3346, %v3386
    %v3388 = vpop.f32.mrf.mxu0
    %v3389 = vpop.f32.mrf.mxu0
    %3390 = vdwg.mxu0
    %3391 = vmatprep.subr.bf16.mxu0 %v3148
    %3392 = vmatpush1.bf16.msra.mxu0 %v3147
    %3393 = vmatprep.subr.bf16.mxu0 %v3144
    %3394 = vmatpush1.bf16.msra.mxu0 %v3143
    %3395 = vmatprep.subr.bf16.mxu0 %v3140
    %3396 = vmatpush1.bf16.msra.mxu0 %v3139
    %3397 = vmatprep.subr.bf16.mxu0 %v3136
    %3398 = vmatpush1.bf16.msra.mxu0 %v3135
    %3399 = vmatprep.subr.bf16.mxu0 %v3132
    %3400 = vmatpush1.bf16.msra.mxu0 %v3131
    %3401 = vmatprep.subr.bf16.mxu0 %v3128
    %3402 = vmatpush1.bf16.msra.mxu0 %v3127
    %3403 = vmatprep.subr.bf16.mxu0 %v3124
    %3404 = vmatpush1.bf16.msra.mxu0 %v3123
    %3405 = vmatprep.subr.bf16.mxu0 %v3120
    %3406 = vmatpush1.bf16.msra.mxu0 %v3119
    %3407 = vmatprep.subr.bf16.mxu0 %v3180
    %3408 = vmatpush2.bf16.msra.mxu0 %v3179
    %3409 = vmatprep.subr.bf16.mxu0 %v3176
    %3410 = vmatpush2.bf16.msra.mxu0 %v3175
    %3411 = vmatprep.subr.bf16.mxu0 %v3172
    %3412 = vmatpush2.bf16.msra.mxu0 %v3171
    %3413 = vmatprep.subr.bf16.mxu0 %v3168
    %3414 = vmatpush2.bf16.msra.mxu0 %v3167
    %3415 = vmatprep.subr.bf16.mxu0 %v3164
    %3416 = vmatpush2.bf16.msra.mxu0 %v3163
    %3417 = vmatprep.subr.bf16.mxu0 %v3160
    %3418 = vmatpush2.bf16.msra.mxu0 %v3159
    %3419 = vmatprep.subr.bf16.mxu0 %v3156
    %3420 = vmatpush2.bf16.msra.mxu0 %v3155
    %3421 = vmatprep.subr.bf16.mxu0 %v3152
    %3422 = vmatpush2.bf16.msra.mxu0 %v3151
    %3423 = vmatprep.mubr.bf16.mxu0 %v2709
    %3424 = vmatmul.mubr.bf16.gmra.mxu0 %v2708
    %v3425 = vpop.f32.mrf.mxu0
    %v3426 = vadd.f32 %v2820, %v3425
    %v3427 = vpop.f32.mrf.mxu0
    %v3428 = vadd.f32 %v2824, %v3427
    %v3429 = vpop.f32.mrf.mxu0
    %v3430 = vpop.f32.mrf.mxu0
    %3431 = vdwg.mxu0
    %3432 = vmatprep.subr.bf16.mxu0 %v3212
    %3433 = vmatpush1.bf16.msra.mxu0 %v3211
    %3434 = vmatprep.subr.bf16.mxu0 %v3208
    %3435 = vmatpush1.bf16.msra.mxu0 %v3207
    %3436 = vmatprep.subr.bf16.mxu0 %v3204
    %3437 = vmatpush1.bf16.msra.mxu0 %v3203
    %3438 = vmatprep.subr.bf16.mxu0 %v3200
    %3439 = vmatpush1.bf16.msra.mxu0 %v3199
    %3440 = vmatprep.subr.bf16.mxu0 %v3196
    %3441 = vmatpush1.bf16.msra.mxu0 %v3195
    %3442 = vmatprep.subr.bf16.mxu0 %v3192
    %3443 = vmatpush1.bf16.msra.mxu0 %v3191
    %3444 = vmatprep.subr.bf16.mxu0 %v3188
    %3445 = vmatpush1.bf16.msra.mxu0 %v3187
    %3446 = vmatprep.subr.bf16.mxu0 %v3184
    %3447 = vmatpush1.bf16.msra.mxu0 %v3183
    %3448 = vmatprep.subr.bf16.mxu0 0
    %3449 = vmatpush2.bf16.msra.mxu0 0
    %3450 = vmatprep.subr.bf16.mxu0 0
    %3451 = vmatpush2.bf16.msra.mxu0 0
    %3452 = vmatprep.subr.bf16.mxu0 0
    %3453 = vmatpush2.bf16.msra.mxu0 0
    %3454 = vmatprep.subr.bf16.mxu0 0
    %3455 = vmatpush2.bf16.msra.mxu0 0
    %3456 = vmatprep.subr.bf16.mxu0 0
    %3457 = vmatpush2.bf16.msra.mxu0 0
    %3458 = vmatprep.subr.bf16.mxu0 0
    %3459 = vmatpush2.bf16.msra.mxu0 0
    %3460 = vmatprep.subr.bf16.mxu0 0
    %3461 = vmatpush2.bf16.msra.mxu0 0
    %3462 = vmatprep.subr.bf16.mxu0 0
    %3463 = vmatpush2.bf16.msra.mxu0 0
    %3464 = vmatprep.mubr.bf16.mxu0 0
    %3465 = vmatmul.mubr.bf16.gmra.mxu0 %v2710
    %v3466 = vpop.f32.mrf.mxu0
    %v3467 = vadd.f32 %v3426, %v3466
    %v3468 = vpop.f32.mrf.mxu0
    %v3469 = vadd.f32 %v3428, %v3468
    %v3470 = vpop.f32.mrf.mxu0
    %v3471 = vpop.f32.mrf.mxu0
    %3472 = vdwg.mxu0
    %v3473 = vmax.f32 %v3385, 0.0
    %v3474 = vmax.f32 %v3387, 0.0
    %v3475 = vmax.f32 %v3467, 0.0
    %v3476 = vmax.f32 %v3469, 0.0
    %v3477 = vpack.c.bf16 %v3473, %v3473
    %v3478 = vpack.c.bf16 %v3474, %v3474
    %v3479 = vpack.c.bf16 %v3475, %v3475
    %v3480 = vpack.c.bf16 %v3476, %v3476
    %v3481 = vld [vmem:[#allocation13] sm:$0xff]
    %v3482 = vld [vmem:[#allocation13 + $0x8] sm:$0xff]
    %v3483 = vld [vmem:[#allocation13 + $0x10] sm:$0xff]
    %v3484 = vld [vmem:[#allocation13 + $0x18] sm:$0xff]
    %v3485 = vld [vmem:[#allocation13 + $0x20] sm:$0xff]
    %v3486 = vld [vmem:[#allocation13 + $0x28] sm:$0xff]
    %v3487 = vld [vmem:[#allocation13 + $0x30] sm:$0xff]
    %v3488 = vld [vmem:[#allocation13 + $0x38] sm:$0xff]
    %v3489 = vld [vmem:[#allocation13 + $0x40] sm:$0xff]
    %v3490 = vld [vmem:[#allocation13 + $0x48] sm:$0xff]
    %v3491 = vld [vmem:[#allocation13 + $0x50] sm:$0xff]
    %v3492 = vld [vmem:[#allocation13 + $0x58] sm:$0xff]
    %v3493 = vld [vmem:[#allocation13 + $0x60] sm:$0xff]
    %v3494 = vld [vmem:[#allocation13 + $0x68] sm:$0xff]
    %v3495 = vld [vmem:[#allocation13 + $0x70] sm:$0xff]
    %v3496 = vld [vmem:[#allocation13 + $0x78] sm:$0xff]
    %v3497 = vld [vmem:[#allocation13 + $0x80] sm:$0xff]
    %v3498 = vld [vmem:[#allocation13 + $0x88] sm:$0xff]
    %v3499 = vld [vmem:[#allocation13 + $0x90] sm:$0xff]
    %v3500 = vld [vmem:[#allocation13 + $0x98] sm:$0xff]
    %v3501 = vld [vmem:[#allocation13 + $0xa0] sm:$0xff]
    %v3502 = vld [vmem:[#allocation13 + $0xa8] sm:$0xff]
    %v3503 = vld [vmem:[#allocation13 + $0xb0] sm:$0xff]
    %v3504 = vld [vmem:[#allocation13 + $0xb8] sm:$0xff]
    %v3505 = vld [vmem:[#allocation13 + $0xc0] sm:$0xff]
    %v3506 = vld [vmem:[#allocation13 + $0xc8] sm:$0xff]
    %v3507 = vld [vmem:[#allocation13 + $0xd0] sm:$0xff]
    %v3508 = vld [vmem:[#allocation13 + $0xd8] sm:$0xff]
    %v3509 = vld [vmem:[#allocation13 + $0xe0] sm:$0xff]
    %v3510 = vld [vmem:[#allocation13 + $0xe8] sm:$0xff]
    %v3511 = vld [vmem:[#allocation13 + $0xf0] sm:$0xff]
    %v3512 = vld [vmem:[#allocation13 + $0xf8] sm:$0xff]
    %v3513 = vld [vmem:[#allocation13 + $0x100] sm:$0xff]
    %v3514 = vld [vmem:[#allocation13 + $0x108] sm:$0xff]
    %v3515 = vld [vmem:[#allocation13 + $0x110] sm:$0xff]
    %v3516 = vld [vmem:[#allocation13 + $0x118] sm:$0xff]
    %v3517 = vld [vmem:[#allocation13 + $0x120] sm:$0xff]
    %v3518 = vld [vmem:[#allocation13 + $0x128] sm:$0xff]
    %v3519 = vld [vmem:[#allocation13 + $0x130] sm:$0xff]
    %v3520 = vld [vmem:[#allocation13 + $0x138] sm:$0xff]
    %v3521 = vld [vmem:[#allocation13 + $0x140] sm:$0xff]
    %v3522 = vld [vmem:[#allocation13 + $0x148] sm:$0xff]
    %v3523 = vld [vmem:[#allocation13 + $0x150] sm:$0xff]
    %v3524 = vld [vmem:[#allocation13 + $0x158] sm:$0xff]
    %v3525 = vld [vmem:[#allocation13 + $0x160] sm:$0xff]
    %v3526 = vld [vmem:[#allocation13 + $0x168] sm:$0xff]
    %v3527 = vld [vmem:[#allocation13 + $0x170] sm:$0xff]
    %v3528 = vld [vmem:[#allocation13 + $0x178] sm:$0xff]
    %v3529 = vld [vmem:[#allocation13 + $0x180] sm:$0xff]
    %v3530 = vld [vmem:[#allocation13 + $0x188] sm:$0xff]
    %v3531 = vld [vmem:[#allocation13 + $0x190] sm:$0xff]
    %v3532 = vld [vmem:[#allocation13 + $0x198] sm:$0xff]
    %v3533 = vld [vmem:[#allocation13 + $0x1a0] sm:$0xff]
    %v3534 = vld [vmem:[#allocation13 + $0x1a8] sm:$0xff]
    %v3535 = vld [vmem:[#allocation13 + $0x1b0] sm:$0xff]
    %v3536 = vld [vmem:[#allocation13 + $0x1b8] sm:$0xff]
    %v3537 = vld [vmem:[#allocation13 + $0x1c0] sm:$0xff]
    %v3538 = vld [vmem:[#allocation13 + $0x1c8] sm:$0xff]
    %v3539 = vld [vmem:[#allocation13 + $0x1d0] sm:$0xff]
    %v3540 = vld [vmem:[#allocation13 + $0x1d8] sm:$0xff]
    %v3541 = vld [vmem:[#allocation13 + $0x1e0] sm:$0xff]
    %v3542 = vld [vmem:[#allocation13 + $0x1e8] sm:$0xff]
    %v3543 = vld [vmem:[#allocation13 + $0x1f0] sm:$0xff]
    %v3544 = vld [vmem:[#allocation13 + $0x1f8] sm:$0xff]
    %v3545 = vld [vmem:[%s17] sm:$0x3]
    %v3547 = vlaneseq
    %v3548 = vshrl.u32 %v3547, 7
    %v3549 = vsub.s32 0, %v3548
    %v3550 = vrot.slane %v3545, %v3549
    %v3551 = vlaneseq
    %v3552 = vshrl.u32 %v3551, 7
    %v3553 = vsub.s32 1, %v3552
    %v3554 = vrot.slane %v3545, %v3553
    %v3621 = vunpack.c.l.b16 %v3481
    %v3622 = vunpack.c.h.b16 %v3481
    %v3623 = vunpack.c.l.b16 %v3482
    %v3624 = vunpack.c.h.b16 %v3482
    %v3625 = vunpack.c.l.b16 %v3483
    %v3626 = vunpack.c.h.b16 %v3483
    %v3627 = vunpack.c.l.b16 %v3484
    %v3628 = vunpack.c.h.b16 %v3484
    %v3629 = vunpack.c.l.b16 %v3485
    %v3630 = vunpack.c.h.b16 %v3485
    %v3631 = vunpack.c.l.b16 %v3486
    %v3632 = vunpack.c.h.b16 %v3486
    %v3633 = vunpack.c.l.b16 %v3487
    %v3634 = vunpack.c.h.b16 %v3487
    %v3635 = vunpack.c.l.b16 %v3488
    %v3636 = vunpack.c.h.b16 %v3488
    %v3637 = vunpack.c.l.b16 %v3489
    %v3638 = vunpack.c.h.b16 %v3489
    %v3639 = vunpack.c.l.b16 %v3490
    %v3640 = vunpack.c.h.b16 %v3490
    %v3641 = vunpack.c.l.b16 %v3491
    %v3642 = vunpack.c.h.b16 %v3491
    %v3643 = vunpack.c.l.b16 %v3492
    %v3644 = vunpack.c.h.b16 %v3492
    %v3645 = vunpack.c.l.b16 %v3493
    %v3646 = vunpack.c.h.b16 %v3493
    %v3647 = vunpack.c.l.b16 %v3494
    %v3648 = vunpack.c.h.b16 %v3494
    %v3649 = vunpack.c.l.b16 %v3495
    %v3650 = vunpack.c.h.b16 %v3495
    %v3651 = vunpack.c.l.b16 %v3496
    %v3652 = vunpack.c.h.b16 %v3496
    %v3653 = vunpack.c.l.b16 %v3497
    %v3654 = vunpack.c.h.b16 %v3497
    %v3655 = vunpack.c.l.b16 %v3498
    %v3656 = vunpack.c.h.b16 %v3498
    %v3657 = vunpack.c.l.b16 %v3499
    %v3658 = vunpack.c.h.b16 %v3499
    %v3659 = vunpack.c.l.b16 %v3500
    %v3660 = vunpack.c.h.b16 %v3500
    %v3661 = vunpack.c.l.b16 %v3501
    %v3662 = vunpack.c.h.b16 %v3501
    %v3663 = vunpack.c.l.b16 %v3502
    %v3664 = vunpack.c.h.b16 %v3502
    %v3665 = vunpack.c.l.b16 %v3503
    %v3666 = vunpack.c.h.b16 %v3503
    %v3667 = vunpack.c.l.b16 %v3504
    %v3668 = vunpack.c.h.b16 %v3504
    %v3669 = vunpack.c.l.b16 %v3505
    %v3670 = vunpack.c.h.b16 %v3505
    %v3671 = vunpack.c.l.b16 %v3506
    %v3672 = vunpack.c.h.b16 %v3506
    %v3673 = vunpack.c.l.b16 %v3507
    %v3674 = vunpack.c.h.b16 %v3507
    %v3675 = vunpack.c.l.b16 %v3508
    %v3676 = vunpack.c.h.b16 %v3508
    %v3677 = vunpack.c.l.b16 %v3509
    %v3678 = vunpack.c.h.b16 %v3509
    %v3679 = vunpack.c.l.b16 %v3510
    %v3680 = vunpack.c.h.b16 %v3510
    %v3681 = vunpack.c.l.b16 %v3511
    %v3682 = vunpack.c.h.b16 %v3511
    %v3683 = vunpack.c.l.b16 %v3512
    %v3684 = vunpack.c.h.b16 %v3512
    %v3685 = vunpack.c.l.b16 %v3513
    %v3686 = vunpack.c.h.b16 %v3513
    %v3687 = vunpack.c.l.b16 %v3514
    %v3688 = vunpack.c.h.b16 %v3514
    %v3689 = vunpack.c.l.b16 %v3515
    %v3690 = vunpack.c.h.b16 %v3515
    %v3691 = vunpack.c.l.b16 %v3516
    %v3692 = vunpack.c.h.b16 %v3516
    %v3693 = vunpack.c.l.b16 %v3517
    %v3694 = vunpack.c.h.b16 %v3517
    %v3695 = vunpack.c.l.b16 %v3518
    %v3696 = vunpack.c.h.b16 %v3518
    %v3697 = vunpack.c.l.b16 %v3519
    %v3698 = vunpack.c.h.b16 %v3519
    %v3699 = vunpack.c.l.b16 %v3520
    %v3700 = vunpack.c.h.b16 %v3520
    %v3701 = vunpack.c.l.b16 %v3521
    %v3702 = vunpack.c.h.b16 %v3521
    %v3703 = vunpack.c.l.b16 %v3522
    %v3704 = vunpack.c.h.b16 %v3522
    %v3705 = vunpack.c.l.b16 %v3523
    %v3706 = vunpack.c.h.b16 %v3523
    %v3707 = vunpack.c.l.b16 %v3524
    %v3708 = vunpack.c.h.b16 %v3524
    %v3709 = vunpack.c.l.b16 %v3525
    %v3710 = vunpack.c.h.b16 %v3525
    %v3711 = vunpack.c.l.b16 %v3526
    %v3712 = vunpack.c.h.b16 %v3526
    %v3713 = vunpack.c.l.b16 %v3527
    %v3714 = vunpack.c.h.b16 %v3527
    %v3715 = vunpack.c.l.b16 %v3528
    %v3716 = vunpack.c.h.b16 %v3528
    %v3717 = vunpack.c.l.b16 %v3529
    %v3718 = vunpack.c.h.b16 %v3529
    %v3719 = vunpack.c.l.b16 %v3530
    %v3720 = vunpack.c.h.b16 %v3530
    %v3721 = vunpack.c.l.b16 %v3531
    %v3722 = vunpack.c.h.b16 %v3531
    %v3723 = vunpack.c.l.b16 %v3532
    %v3724 = vunpack.c.h.b16 %v3532
    %v3725 = vunpack.c.l.b16 %v3533
    %v3726 = vunpack.c.h.b16 %v3533
    %v3727 = vunpack.c.l.b16 %v3534
    %v3728 = vunpack.c.h.b16 %v3534
    %v3729 = vunpack.c.l.b16 %v3535
    %v3730 = vunpack.c.h.b16 %v3535
    %v3731 = vunpack.c.l.b16 %v3536
    %v3732 = vunpack.c.h.b16 %v3536
    %v3733 = vunpack.c.l.b16 %v3537
    %v3734 = vunpack.c.h.b16 %v3537
    %v3735 = vunpack.c.l.b16 %v3538
    %v3736 = vunpack.c.h.b16 %v3538
    %v3737 = vunpack.c.l.b16 %v3539
    %v3738 = vunpack.c.h.b16 %v3539
    %v3739 = vunpack.c.l.b16 %v3540
    %v3740 = vunpack.c.h.b16 %v3540
    %v3741 = vunpack.c.l.b16 %v3541
    %v3742 = vunpack.c.h.b16 %v3541
    %v3743 = vunpack.c.l.b16 %v3542
    %v3744 = vunpack.c.h.b16 %v3542
    %v3745 = vunpack.c.l.b16 %v3543
    %v3746 = vunpack.c.h.b16 %v3543
    %v3747 = vunpack.c.l.b16 %v3544
    %v3748 = vunpack.c.h.b16 %v3544
    %v3749 = vpack.c.b16 %v3623, %v3621
    %v3750 = vpack.c.b16 %v3624, %v3622
    %v3751 = vpack.c.b16 %v3627, %v3625
    %v3752 = vpack.c.b16 %v3628, %v3626
    %v3753 = vpack.c.b16 %v3631, %v3629
    %v3754 = vpack.c.b16 %v3632, %v3630
    %v3755 = vpack.c.b16 %v3635, %v3633
    %v3756 = vpack.c.b16 %v3636, %v3634
    %v3757 = vpack.c.b16 %v3639, %v3637
    %v3758 = vpack.c.b16 %v3640, %v3638
    %v3759 = vpack.c.b16 %v3643, %v3641
    %v3760 = vpack.c.b16 %v3644, %v3642
    %v3761 = vpack.c.b16 %v3647, %v3645
    %v3762 = vpack.c.b16 %v3648, %v3646
    %v3763 = vpack.c.b16 %v3651, %v3649
    %v3764 = vpack.c.b16 %v3652, %v3650
    %v3765 = vpack.c.b16 %v3655, %v3653
    %v3766 = vpack.c.b16 %v3656, %v3654
    %v3767 = vpack.c.b16 %v3659, %v3657
    %v3768 = vpack.c.b16 %v3660, %v3658
    %v3769 = vpack.c.b16 %v3663, %v3661
    %v3770 = vpack.c.b16 %v3664, %v3662
    %v3771 = vpack.c.b16 %v3667, %v3665
    %v3772 = vpack.c.b16 %v3668, %v3666
    %v3773 = vpack.c.b16 %v3671, %v3669
    %v3774 = vpack.c.b16 %v3672, %v3670
    %v3775 = vpack.c.b16 %v3675, %v3673
    %v3776 = vpack.c.b16 %v3676, %v3674
    %v3777 = vpack.c.b16 %v3679, %v3677
    %v3778 = vpack.c.b16 %v3680, %v3678
    %v3779 = vpack.c.b16 %v3683, %v3681
    %v3780 = vpack.c.b16 %v3684, %v3682
    %v3781 = vpack.c.b16 %v3687, %v3685
    %v3782 = vpack.c.b16 %v3688, %v3686
    %v3783 = vpack.c.b16 %v3691, %v3689
    %v3784 = vpack.c.b16 %v3692, %v3690
    %v3785 = vpack.c.b16 %v3695, %v3693
    %v3786 = vpack.c.b16 %v3696, %v3694
    %v3787 = vpack.c.b16 %v3699, %v3697
    %v3788 = vpack.c.b16 %v3700, %v3698
    %v3789 = vpack.c.b16 %v3703, %v3701
    %v3790 = vpack.c.b16 %v3704, %v3702
    %v3791 = vpack.c.b16 %v3707, %v3705
    %v3792 = vpack.c.b16 %v3708, %v3706
    %v3793 = vpack.c.b16 %v3711, %v3709
    %v3794 = vpack.c.b16 %v3712, %v3710
    %v3795 = vpack.c.b16 %v3715, %v3713
    %v3796 = vpack.c.b16 %v3716, %v3714
    %v3797 = vpack.c.b16 %v3719, %v3717
    %v3798 = vpack.c.b16 %v3720, %v3718
    %v3799 = vpack.c.b16 %v3723, %v3721
    %v3800 = vpack.c.b16 %v3724, %v3722
    %v3801 = vpack.c.b16 %v3727, %v3725
    %v3802 = vpack.c.b16 %v3728, %v3726
    %v3803 = vpack.c.b16 %v3731, %v3729
    %v3804 = vpack.c.b16 %v3732, %v3730
    %v3805 = vpack.c.b16 %v3735, %v3733
    %v3806 = vpack.c.b16 %v3736, %v3734
    %v3807 = vpack.c.b16 %v3739, %v3737
    %v3808 = vpack.c.b16 %v3740, %v3738
    %v3809 = vpack.c.b16 %v3743, %v3741
    %v3810 = vpack.c.b16 %v3744, %v3742
    %v3811 = vpack.c.b16 %v3747, %v3745
    %v3812 = vpack.c.b16 %v3748, %v3746
    %3877 = vmatprep.subr.bf16.mxu0 %v3764
    %3878 = vmatpush1.bf16.msra.mxu0 %v3763
    %3879 = vmatprep.subr.bf16.mxu0 %v3762
    %3880 = vmatpush1.bf16.msra.mxu0 %v3761
    %3881 = vmatprep.subr.bf16.mxu0 %v3760
    %3882 = vmatpush1.bf16.msra.mxu0 %v3759
    %3883 = vmatprep.subr.bf16.mxu0 %v3758
    %3884 = vmatpush1.bf16.msra.mxu0 %v3757
    %3885 = vmatprep.subr.bf16.mxu0 %v3756
    %3886 = vmatpush1.bf16.msra.mxu0 %v3755
    %3887 = vmatprep.subr.bf16.mxu0 %v3754
    %3888 = vmatpush1.bf16.msra.mxu0 %v3753
    %3889 = vmatprep.subr.bf16.mxu0 %v3752
    %3890 = vmatpush1.bf16.msra.mxu0 %v3751
    %3891 = vmatprep.subr.bf16.mxu0 %v3750
    %3892 = vmatpush1.bf16.msra.mxu0 %v3749
    %3893 = vmatprep.subr.bf16.mxu0 %v3780
    %3894 = vmatpush2.bf16.msra.mxu0 %v3779
    %3895 = vmatprep.subr.bf16.mxu0 %v3778
    %3896 = vmatpush2.bf16.msra.mxu0 %v3777
    %3897 = vmatprep.subr.bf16.mxu0 %v3776
    %3898 = vmatpush2.bf16.msra.mxu0 %v3775
    %3899 = vmatprep.subr.bf16.mxu0 %v3774
    %3900 = vmatpush2.bf16.msra.mxu0 %v3773
    %3901 = vmatprep.subr.bf16.mxu0 %v3772
    %3902 = vmatpush2.bf16.msra.mxu0 %v3771
    %3903 = vmatprep.subr.bf16.mxu0 %v3770
    %3904 = vmatpush2.bf16.msra.mxu0 %v3769
    %3905 = vmatprep.subr.bf16.mxu0 %v3768
    %3906 = vmatpush2.bf16.msra.mxu0 %v3767
    %3907 = vmatprep.subr.bf16.mxu0 %v3766
    %3908 = vmatpush2.bf16.msra.mxu0 %v3765
    %3909 = vmatprep.mubr.bf16.mxu0 %v3478
    %3910 = vmatmul.mubr.bf16.gmra.mxu0 %v3477
    %v3911 = vpop.f32.mrf.mxu0
    %v3912 = vadd.f32 %v3550, %v3911
    %v3913 = vpop.f32.mrf.mxu0
    %v3914 = vadd.f32 %v3554, %v3913
    %v3915 = vpop.f32.mrf.mxu0
    %v3916 = vpop.f32.mrf.mxu0
    %3917 = vdwg.mxu0
    %3918 = vmatprep.subr.bf16.mxu0 %v3796
    %3919 = vmatpush1.bf16.msra.mxu0 %v3795
    %3920 = vmatprep.subr.bf16.mxu0 %v3794
    %3921 = vmatpush1.bf16.msra.mxu0 %v3793
    %3922 = vmatprep.subr.bf16.mxu0 %v3792
    %3923 = vmatpush1.bf16.msra.mxu0 %v3791
    %3924 = vmatprep.subr.bf16.mxu0 %v3790
    %3925 = vmatpush1.bf16.msra.mxu0 %v3789
    %3926 = vmatprep.subr.bf16.mxu0 %v3788
    %3927 = vmatpush1.bf16.msra.mxu0 %v3787
    %3928 = vmatprep.subr.bf16.mxu0 %v3786
    %3929 = vmatpush1.bf16.msra.mxu0 %v3785
    %3930 = vmatprep.subr.bf16.mxu0 %v3784
    %3931 = vmatpush1.bf16.msra.mxu0 %v3783
    %3932 = vmatprep.subr.bf16.mxu0 %v3782
    %3933 = vmatpush1.bf16.msra.mxu0 %v3781
    %3934 = vmatprep.subr.bf16.mxu0 %v3812
    %3935 = vmatpush2.bf16.msra.mxu0 %v3811
    %3936 = vmatprep.subr.bf16.mxu0 %v3810
    %3937 = vmatpush2.bf16.msra.mxu0 %v3809
    %3938 = vmatprep.subr.bf16.mxu0 %v3808
    %3939 = vmatpush2.bf16.msra.mxu0 %v3807
    %3940 = vmatprep.subr.bf16.mxu0 %v3806
    %3941 = vmatpush2.bf16.msra.mxu0 %v3805
    %3942 = vmatprep.subr.bf16.mxu0 %v3804
    %3943 = vmatpush2.bf16.msra.mxu0 %v3803
    %3944 = vmatprep.subr.bf16.mxu0 %v3802
    %3945 = vmatpush2.bf16.msra.mxu0 %v3801
    %3946 = vmatprep.subr.bf16.mxu0 %v3800
    %3947 = vmatpush2.bf16.msra.mxu0 %v3799
    %3948 = vmatprep.subr.bf16.mxu0 %v3798
    %3949 = vmatpush2.bf16.msra.mxu0 %v3797
    %3950 = vmatprep.mubr.bf16.mxu0 %v3480
    %3951 = vmatmul.mubr.bf16.gmra.mxu0 %v3479
    %v3952 = vpop.f32.mrf.mxu0
    %v3953 = vadd.f32 %v3912, %v3952
    %v3954 = vpop.f32.mrf.mxu0
    %v3955 = vadd.f32 %v3914, %v3954
    %v3956 = vpop.f32.mrf.mxu0
    %v3957 = vpop.f32.mrf.mxu0
    %3958 = vdwg.mxu0
    %v3959 = vxor.u32 %v3953, 2147483648
    %v3960 = vxor.u32 %v3955, 2147483648
    %v3961 = vmul.f32 %v3959, 1.442695
    %v3962 = vpow.pop %v3961
    %v3963 = vmul.f32 %v3960, 1.442695
    %v3964 = vpow.pop %v3963
    %v3965 = vadd.f32 %v3962, 1.0
    %v3966 = vadd.f32 %v3964, 1.0
    %v3967 = vrcp.pop %v3965
    %v3968 = vmul.f32 1.0, %v3967
    %v3969 = vrcp.pop %v3966
    %v3970 = vmul.f32 1.0, %v3969
    %3971 = vst [vmem:[%s18] sm:$0xff] %v3968
    %3972 = vst [vmem:[%s18 + $0x8] sm:$0xff] %v3970
    // Predicated region
    $region106: #{vae_forward.1} parent=1 // pred_check
      _
    $region107: #{vae_forward.1} parent=1 // pred_check_branch
      %3974 = sbr.rel (0) target = $region109
    $region108: #{vae_forward.1} parent=1 // pred_region
      _
    $region109: #{vae_forward.1} parent=1 // pred_fallthru
      _
    // Predicated region
    $region110: #{vae_forward.1} parent=1 // pred_check
      _
    $region111: #{vae_forward.1} parent=1 // pred_check_branch
      %3976 = sbr.rel (0) target = $region113
    $region112: #{vae_forward.1} parent=1 // pred_region
      _
    $region113: #{vae_forward.1} parent=1 // pred_fallthru
      _
    // Predicated region
    $region114: #{vae_forward.1} parent=1 // pred_check
      _
    $region115: #{vae_forward.1} parent=1 // pred_check_branch
      %3978 = sbr.rel (0) target = $region117
    $region116: #{vae_forward.1} parent=1 // pred_region
      _
    $region117: #{vae_forward.1} parent=1 // pred_fallthru
      _
    // Predicated region
    $region118: #{vae_forward.1} parent=1 // pred_check
      _
    $region119: #{vae_forward.1} parent=1 // pred_check_branch
      %3980 = sbr.rel (0) target = $region121
    $region120: #{vae_forward.1} parent=1 // pred_region
      _
    $region121: #{vae_forward.1} parent=1 // pred_fallthru
      _
    // Predicated region
    $region122: #{vae_forward.1} parent=1 // pred_check
      _
    $region123: #{vae_forward.1} parent=1 // pred_check_branch
      %3982 = sbr.rel (0) target = $region125
    $region124: #{vae_forward.1} parent=1 // pred_region
      _
    $region125: #{vae_forward.1} parent=1 // pred_fallthru
      _
    // Predicated region
    $region126: #{vae_forward.1} parent=1 // pred_check
      _
    $region127: #{vae_forward.1} parent=1 // pred_check_branch
      %3984 = sbr.rel (0) target = $region129
    $region128: #{vae_forward.1} parent=1 // pred_region
      _
    $region129: #{vae_forward.1} parent=1 // pred_fallthru
      _
    %3985 = vsyncpa [#allocation3], 1
    %3986 = vsyncpa [#allocation5], 1
    %3987 = vsyncpa [#allocation8], 1
    %3988 = vsyncpa [#allocation11], 1
    %3989 = vsyncpa [#allocation14], 1

</llo_original>
